<compile_context>
chip_gen: v7x
topology: tpu7x:2x2x1
jax: 0.10.0
libtpu: 0.0.40
codegen_flags: <defaults>
</compile_context>

<pallas_src>
import functools

import jax
import jax.numpy as jnp
from jax import lax
from jax.experimental import pallas as pl
from jax.experimental.pallas import tpu as pltpu

HIDDEN_SIZE = 128
NUM_LAYERS = 2   # kernel below is written explicitly for 2 stacked LSTM layers

_SUBLANE = 8     # f32 sublane tile
_LANE = 128      # lane tile


def lstm_fc_kernel(x_ref,       # (T*Bp, D)   time-major, batch padded, flattened
                   wih0_ref,    # (D, 4H)
                   whh0_ref,    # (H, 4H)
                   b0_ref,      # (1, 4H)  (= b_ih_l0 + b_hh_l0)
                   w1_ref,      # (2H, 4H) (= [W_ih_l1.T ; W_hh_l1.T] stacked)
                   b1_ref,      # (1, 4H)  (= b_ih_l1 + b_hh_l1)
                   wfc_ref,     # (H, Cp)  lane-padded
                   bfc_ref,     # (1, Cp)  lane-padded
                   out_ref,     # (Bp, Cp)
                   gx0_ref,     # VMEM scratch (T*Bp, 4H): hoisted layer-0 input proj
                   *, T, Bp):
    H = whh0_ref.shape[0]

    # --- Hoisted layer-0 input projection for ALL timesteps: one big MXU matmul ---
    gx0_ref[...] = (jnp.dot(x_ref[...], wih0_ref[...],
                            preferred_element_type=jnp.float32)
                    + b0_ref[...])

    # Hoisted bias read for layer 1 (avoid re-load/re-broadcast every iteration).
    b1 = b1_ref[...]

    def gates_to_hc(g, c):
        # gate order follows PyTorch: i, f, g, o (128-lane-aligned slices)
        i = jax.nn.sigmoid(g[:, 0 * H:1 * H])
        f = jax.nn.sigmoid(g[:, 1 * H:2 * H])
        gg = jnp.tanh(g[:, 2 * H:3 * H])
        o = jax.nn.sigmoid(g[:, 3 * H:4 * H])
        c_new = f * c + i * gg
        h_new = o * jnp.tanh(c_new)
        return h_new, c_new

    def step(t, carry):
        h0, c0, h1, c1 = carry
        # Layer 0: recurrent matmul only (input projection precomputed above).
        row = pl.multiple_of(t * Bp, Bp)
        g0 = (gx0_ref[pl.ds(row, Bp), :]
              + jnp.dot(h0, whh0_ref[...], preferred_element_type=jnp.float32))
        h0, c0 = gates_to_hc(g0, c0)
        # Layer 1: single fused matmul on concat([h0, h1]) (halves MXU push/pop).
        hcat = jnp.concatenate([h0, h1], axis=1)                 # (Bp, 2H)
        g1 = (jnp.dot(hcat, w1_ref[...], preferred_element_type=jnp.float32)
              + b1)
        h1, c1 = gates_to_hc(g1, c1)
        return (h0, c0, h1, c1)

    zeros = jnp.zeros((Bp, H), jnp.float32)
    # Short fixed T: fully unroll so EUP/MXU work of adjacent steps can overlap.
    _, _, h1, _ = lax.fori_loop(0, T, step, (zeros, zeros, zeros, zeros),
                                unroll=True)

    # Final fully-connected layer on the last timestep's top-layer hidden state.
    # Lane-dense (Bp, Cp) store; wrapper slices back to (B, C).
    out_ref[...] = (jnp.dot(h1, wfc_ref[...], preferred_element_type=jnp.float32)
                    + bfc_ref[...])


@jax.jit
def rnn_forward(x, params):
    """x: (B, T, D) float32 -> (B, num_classes) float32."""
    B, T, D = x.shape
    H = HIDDEN_SIZE
    C = params["w_fc"].shape[0]

    Bp = ((B + _SUBLANE - 1) // _SUBLANE) * _SUBLANE     # pad batch to sublane tile
    Cp = ((C + _LANE - 1) // _LANE) * _LANE              # pad classes to lane tile

    # Time-major, batch-padded, flattened input: (T*Bp, D).
    x_tbd = jnp.transpose(x, (1, 0, 2))                  # (T, B, D)
    if Bp != B:
        x_tbd = jnp.pad(x_tbd, ((0, 0), (0, Bp - B), (0, 0)))
    x_flat = x_tbd.reshape(T * Bp, D)

    # Pre-transpose all weights to (in_features, out_features) row-major layouts.
    wih0 = params["w_ih_l0"].T                           # (D, 4H)
    whh0 = params["w_hh_l0"].T                           # (H, 4H)
    b0 = (params["b_ih_l0"] + params["b_hh_l0"]).reshape(1, 4 * H)
    w1 = jnp.concatenate([params["w_ih_l1"].T,
                          params["w_hh_l1"].T], axis=0)  # (2H, 4H)
    b1 = (params["b_ih_l1"] + params["b_hh_l1"]).reshape(1, 4 * H)
    wfc = params["w_fc"].T                               # (H, C)
    bfc = params["b_fc"].reshape(1, C)
    if Cp != C:                                          # lane-dense output weights
        wfc = jnp.pad(wfc, ((0, 0), (0, Cp - C)))
        bfc = jnp.pad(bfc, ((0, 0), (0, Cp - C)))

    # VMEM budget sized from the actual buffers, with generous headroom for the
    # fully-unrolled loop's temporaries (still tiny vs the 32 MiB default limit).
    fp32 = 4
    operand_bytes = fp32 * (x_flat.size + wih0.size + whh0.size + b0.size
                            + w1.size + b1.size + wfc.size + bfc.size)
    scratch_bytes = fp32 * T * Bp * 4 * H
    out_bytes = fp32 * Bp * Cp
    vmem_limit = int(min(32 * 1024 * 1024,
                         2 * (operand_bytes + out_bytes) + scratch_bytes
                         + (16 << 20)))

    flops = (2 * T * Bp * D * 4 * H          # hoisted layer-0 input projection
             + 2 * T * Bp * H * 4 * H        # layer-0 recurrent matmuls
             + 2 * T * Bp * 2 * H * 4 * H    # fused layer-1 matmuls
             + 2 * Bp * H * Cp)              # FC head
    transcendentals = 2 * 6 * T * Bp * H     # ~6 EUP ops per element per cell
    bytes_accessed = operand_bytes + out_bytes

    vmem = pl.BlockSpec(memory_space=pltpu.MemorySpace.VMEM)
    out = pl.pallas_call(
        functools.partial(lstm_fc_kernel, T=T, Bp=Bp),
        out_shape=jax.ShapeDtypeStruct((Bp, Cp), jnp.float32),
        in_specs=[vmem] * 8,
        out_specs=vmem,
        scratch_shapes=[pltpu.VMEM((T * Bp, 4 * H), jnp.float32)],
        compiler_params=pltpu.CompilerParams(vmem_limit_bytes=vmem_limit),
        cost_estimate=pl.CostEstimate(flops=flops,
                                      transcendentals=transcendentals,
                                      bytes_accessed=bytes_accessed),
    )(x_flat, wih0, whh0, b0, w1, b1, wfc, bfc)

    return out[:B, :C]


def rnn_reference(x, params):
    """Pure-JAX reference matching torch.nn.LSTM (2 layers) + Linear."""
    B, T, D = x.shape
    H = HIDDEN_SIZE

    def cell(x_t, h, c, wih, whh, bih, bhh):
        g = x_t @ wih.T + bih + h @ whh.T + bhh
        i = jax.nn.sigmoid(g[:, :H])
        f = jax.nn.sigmoid(g[:, H:2 * H])
        gg = jnp.tanh(g[:, 2 * H:3 * H])
        o = jax.nn.sigmoid(g[:, 3 * H:])
        c = f * c + i * gg
        h = o * jnp.tanh(c)
        return h, c

    h0 = c0 = h1 = c1 = jnp.zeros((B, H), jnp.float32)
    for t in range(T):
        h0, c0 = cell(x[:, t], h0, c0, params["w_ih_l0"], params["w_hh_l0"],
                      params["b_ih_l0"], params["b_hh_l0"])
        h1, c1 = cell(h0, h1, c1, params["w_ih_l1"], params["w_hh_l1"],
                      params["b_ih_l1"], params["b_hh_l1"])
    return h1 @ params["w_fc"].T + params["b_fc"]


def init_params(key, input_size, hidden_size, num_classes):
    """Deterministic init mimicking PyTorch's U(-1/sqrt(H), 1/sqrt(H))."""
    k = 1.0 / jnp.sqrt(jnp.float32(hidden_size))
    names_shapes = [
        ("w_ih_l0", (4 * hidden_size, input_size)),
        ("w_hh_l0", (4 * hidden_size, hidden_size)),
        ("b_ih_l0", (4 * hidden_size,)),
        ("b_hh_l0", (4 * hidden_size,)),
        ("w_ih_l1", (4 * hidden_size, hidden_size)),
        ("w_hh_l1", (4 * hidden_size, hidden_size)),
        ("b_ih_l1", (4 * hidden_size,)),
        ("b_hh_l1", (4 * hidden_size,)),
        ("w_fc", (num_classes, hidden_size)),
        ("b_fc", (num_classes,)),
    ]
    keys = jax.random.split(key, len(names_shapes))
    return {
        name: jax.random.uniform(kk, shape, jnp.float32, -k, k)
        for kk, (name, shape) in zip(keys, names_shapes)
    }


if __name__ == "__main__":
    # Small, forward-consistent shapes: batch=4, seq=8, input_size=32,
    # hidden=HIDDEN_SIZE=128 (forced by the module's h0/c0), num_classes=10.
    B, T, D, C = 4, 8, 32, 10

    key = jax.random.PRNGKey(0)
    key_x, key_p = jax.random.split(key)
    x = jax.random.normal(key_x, (B, T, D), jnp.float32)
    params = init_params(key_p, D, HIDDEN_SIZE, C)

    out = jax.block_until_ready(rnn_forward(x, params))
    ref = jax.block_until_ready(rnn_reference(x, params))

    assert out.shape == (B, C)
    assert jnp.allclose(out, ref, atol=1e-4, rtol=1e-4), "mismatch vs reference"
    print("KERNEL_OK")
</pallas_src>

<mosaic_0001>
module attributes {stable_mosaic.version = 11 : i64} {
  func.func @lstm_fc_kernel(%arg0: memref<64x32xf32, #tpu.memory_space<vmem>>, %arg1: memref<32x512xf32, #tpu.memory_space<vmem>>, %arg2: memref<128x512xf32, #tpu.memory_space<vmem>>, %arg3: memref<1x512xf32, #tpu.memory_space<vmem>>, %arg4: memref<256x512xf32, #tpu.memory_space<vmem>>, %arg5: memref<1x512xf32, #tpu.memory_space<vmem>>, %arg6: memref<128x128xf32, #tpu.memory_space<vmem>>, %arg7: memref<1x128xf32, #tpu.memory_space<vmem>>, %arg8: memref<8x128xf32, #tpu.memory_space<vmem>>, %arg9: memref<64x512xf32, #tpu.memory_space<vmem>>) attributes {dimension_semantics = [], scalar_prefetch = 0 : i64, scratch_operands = 1 : i64, tpu.core_type = #tpu.core_type<tc>} {
    %c0 = arith.constant 0 : index
    %c0_0 = arith.constant 0 : index
    %0 = vector.load %arg0[%c0, %c0_0] : memref<64x32xf32, #tpu.memory_space<vmem>>, vector<64x32xf32>
    %c0_1 = arith.constant 0 : index
    %c0_2 = arith.constant 0 : index
    %1 = vector.load %arg1[%c0_1, %c0_2] : memref<32x512xf32, #tpu.memory_space<vmem>>, vector<32x512xf32>
    %cst = arith.constant dense<0.000000e+00> : vector<64x512xf32>
    %2 = tpu.matmul %0, %1, %cst {dimension_numbers = #tpu.dot_dimension_numbers<[1], [0], [0], [1], [0, 0, 1, 1], [], []>} : vector<64x32xf32>, vector<32x512xf32>, vector<64x512xf32> -> vector<64x512xf32>
    %c0_3 = arith.constant 0 : index
    %c0_4 = arith.constant 0 : index
    %3 = vector.load %arg3[%c0_3, %c0_4] : memref<1x512xf32, #tpu.memory_space<vmem>>, vector<1x512xf32>
    %4 = vector.broadcast %3 : vector<1x512xf32> to vector<64x512xf32>
    %5 = arith.addf %2, %4 : vector<64x512xf32>
    %c0_5 = arith.constant 0 : index
    %c0_6 = arith.constant 0 : index
    %6 = vector.load %arg9[%c0_5, %c0_6] : memref<64x512xf32, #tpu.memory_space<vmem>>, vector<64x512xf32>
    tpu.vector_store %arg9[%c0_5, %c0_6], %5 {strides = array<i32>} : memref<64x512xf32, #tpu.memory_space<vmem>>, vector<64x512xf32>,
    %c0_7 = arith.constant 0 : index
    %c0_8 = arith.constant 0 : index
    %7 = vector.load %arg5[%c0_7, %c0_8] : memref<1x512xf32, #tpu.memory_space<vmem>>, vector<1x512xf32>
    %cst_9 = arith.constant 0.000000e+00 : f32
    %8 = vector.broadcast %cst_9 : f32 to vector<8x128xf32>
    %c0_i32 = arith.constant 0 : i32
    %c8_i32 = arith.constant 8 : i32
    %9 = arith.muli %c0_i32, %c8_i32 : i32
    %10 = tpu.assume_multiple %9, 8 : i32
    %11 = arith.index_cast %10 : i32 to index
    %c0_10 = arith.constant 0 : index
    %12 = vector.load %arg9[%11, %c0_10] : memref<64x512xf32, #tpu.memory_space<vmem>>, vector<8x512xf32>
    %c0_11 = arith.constant 0 : index
    %c0_12 = arith.constant 0 : index
    %13 = vector.load %arg2[%c0_11, %c0_12] : memref<128x512xf32, #tpu.memory_space<vmem>>, vector<128x512xf32>
    %cst_13 = arith.constant dense<0.000000e+00> : vector<8x512xf32>
    %14 = tpu.matmul %8, %13, %cst_13 {dimension_numbers = #tpu.dot_dimension_numbers<[1], [0], [0], [1], [0, 0, 1, 1], [], []>} : vector<8x128xf32>, vector<128x512xf32>, vector<8x512xf32> -> vector<8x512xf32>
    %15 = arith.addf %12, %14 : vector<8x512xf32>
    %16 = vector.extract_strided_slice %15 {offsets = [0, 0], sizes = [8, 128], strides = [1, 1]} : vector<8x512xf32> to vector<8x128xf32>
    %17 = arith.negf %16 : vector<8x128xf32>
    %18 = math.exp %17 : vector<8x128xf32>
    %cst_14 = arith.constant 1.000000e+00 : f32
    %19 = vector.broadcast %cst_14 : f32 to vector<8x128xf32>
    %20 = arith.addf %19, %18 : vector<8x128xf32>
    %21 = arith.divf %19, %20 : vector<8x128xf32>
    %22 = vector.extract_strided_slice %15 {offsets = [0, 128], sizes = [8, 128], strides = [1, 1]} : vector<8x512xf32> to vector<8x128xf32>
    %23 = arith.negf %22 : vector<8x128xf32>
    %24 = math.exp %23 : vector<8x128xf32>
    %cst_15 = arith.constant 1.000000e+00 : f32
    %25 = vector.broadcast %cst_15 : f32 to vector<8x128xf32>
    %26 = arith.addf %25, %24 : vector<8x128xf32>
    %27 = arith.divf %25, %26 : vector<8x128xf32>
    %28 = vector.extract_strided_slice %15 {offsets = [0, 256], sizes = [8, 128], strides = [1, 1]} : vector<8x512xf32> to vector<8x128xf32>
    %29 = math.tanh %28 : vector<8x128xf32>
    %30 = vector.extract_strided_slice %15 {offsets = [0, 384], sizes = [8, 128], strides = [1, 1]} : vector<8x512xf32> to vector<8x128xf32>
    %31 = arith.negf %30 : vector<8x128xf32>
    %32 = math.exp %31 : vector<8x128xf32>
    %cst_16 = arith.constant 1.000000e+00 : f32
    %33 = vector.broadcast %cst_16 : f32 to vector<8x128xf32>
    %34 = arith.addf %33, %32 : vector<8x128xf32>
    %35 = arith.divf %33, %34 : vector<8x128xf32>
    %36 = arith.mulf %27, %8 : vector<8x128xf32>
    %37 = arith.mulf %21, %29 : vector<8x128xf32>
    %38 = arith.addf %36, %37 : vector<8x128xf32>
    %39 = math.tanh %38 : vector<8x128xf32>
    %40 = arith.mulf %35, %39 : vector<8x128xf32>
    %41 = tpu.concatenate %40, %8 in 1 : vector<8x128xf32>, vector<8x128xf32> -> vector<8x256xf32>
    %c0_17 = arith.constant 0 : index
    %c0_18 = arith.constant 0 : index
    %42 = vector.load %arg4[%c0_17, %c0_18] : memref<256x512xf32, #tpu.memory_space<vmem>>, vector<256x512xf32>
    %cst_19 = arith.constant dense<0.000000e+00> : vector<8x512xf32>
    %43 = tpu.matmul %41, %42, %cst_19 {dimension_numbers = #tpu.dot_dimension_numbers<[1], [0], [0], [1], [0, 0, 1, 1], [], []>} : vector<8x256xf32>, vector<256x512xf32>, vector<8x512xf32> -> vector<8x512xf32>
    %44 = vector.broadcast %7 : vector<1x512xf32> to vector<8x512xf32>
    %45 = arith.addf %43, %44 : vector<8x512xf32>
    %46 = vector.extract_strided_slice %45 {offsets = [0, 0], sizes = [8, 128], strides = [1, 1]} : vector<8x512xf32> to vector<8x128xf32>
    %47 = arith.negf %46 : vector<8x128xf32>
    %48 = math.exp %47 : vector<8x128xf32>
    %cst_20 = arith.constant 1.000000e+00 : f32
    %49 = vector.broadcast %cst_20 : f32 to vector<8x128xf32>
    %50 = arith.addf %49, %48 : vector<8x128xf32>
    %51 = arith.divf %49, %50 : vector<8x128xf32>
    %52 = vector.extract_strided_slice %45 {offsets = [0, 128], sizes = [8, 128], strides = [1, 1]} : vector<8x512xf32> to vector<8x128xf32>
    %53 = arith.negf %52 : vector<8x128xf32>
    %54 = math.exp %53 : vector<8x128xf32>
    %cst_21 = arith.constant 1.000000e+00 : f32
    %55 = vector.broadcast %cst_21 : f32 to vector<8x128xf32>
    %56 = arith.addf %55, %54 : vector<8x128xf32>
    %57 = arith.divf %55, %56 : vector<8x128xf32>
    %58 = vector.extract_strided_slice %45 {offsets = [0, 256], sizes = [8, 128], strides = [1, 1]} : vector<8x512xf32> to vector<8x128xf32>
    %59 = math.tanh %58 : vector<8x128xf32>
    %60 = vector.extract_strided_slice %45 {offsets = [0, 384], sizes = [8, 128], strides = [1, 1]} : vector<8x512xf32> to vector<8x128xf32>
    %61 = arith.negf %60 : vector<8x128xf32>
    %62 = math.exp %61 : vector<8x128xf32>
    %cst_22 = arith.constant 1.000000e+00 : f32
    %63 = vector.broadcast %cst_22 : f32 to vector<8x128xf32>
    %64 = arith.addf %63, %62 : vector<8x128xf32>
    %65 = arith.divf %63, %64 : vector<8x128xf32>
    %66 = arith.mulf %57, %8 : vector<8x128xf32>
    %67 = arith.mulf %51, %59 : vector<8x128xf32>
    %68 = arith.addf %66, %67 : vector<8x128xf32>
    %69 = math.tanh %68 : vector<8x128xf32>
    %70 = arith.mulf %65, %69 : vector<8x128xf32>
    %c1_i32 = arith.constant 1 : i32
    %c8_i32_23 = arith.constant 8 : i32
    %71 = arith.muli %c1_i32, %c8_i32_23 : i32
    %72 = tpu.assume_multiple %71, 8 : i32
    %73 = arith.index_cast %72 : i32 to index
    %c0_24 = arith.constant 0 : index
    %74 = vector.load %arg9[%73, %c0_24] : memref<64x512xf32, #tpu.memory_space<vmem>>, vector<8x512xf32>
    %c0_25 = arith.constant 0 : index
    %c0_26 = arith.constant 0 : index
    %75 = vector.load %arg2[%c0_25, %c0_26] : memref<128x512xf32, #tpu.memory_space<vmem>>, vector<128x512xf32>
    %cst_27 = arith.constant dense<0.000000e+00> : vector<8x512xf32>
    %76 = tpu.matmul %40, %75, %cst_27 {dimension_numbers = #tpu.dot_dimension_numbers<[1], [0], [0], [1], [0, 0, 1, 1], [], []>} : vector<8x128xf32>, vector<128x512xf32>, vector<8x512xf32> -> vector<8x512xf32>
    %77 = arith.addf %74, %76 : vector<8x512xf32>
    %78 = vector.extract_strided_slice %77 {offsets = [0, 0], sizes = [8, 128], strides = [1, 1]} : vector<8x512xf32> to vector<8x128xf32>
    %79 = arith.negf %78 : vector<8x128xf32>
    %80 = math.exp %79 : vector<8x128xf32>
    %cst_28 = arith.constant 1.000000e+00 : f32
    %81 = vector.broadcast %cst_28 : f32 to vector<8x128xf32>
    %82 = arith.addf %81, %80 : vector<8x128xf32>
    %83 = arith.divf %81, %82 : vector<8x128xf32>
    %84 = vector.extract_strided_slice %77 {offsets = [0, 128], sizes = [8, 128], strides = [1, 1]} : vector<8x512xf32> to vector<8x128xf32>
    %85 = arith.negf %84 : vector<8x128xf32>
    %86 = math.exp %85 : vector<8x128xf32>
    %cst_29 = arith.constant 1.000000e+00 : f32
    %87 = vector.broadcast %cst_29 : f32 to vector<8x128xf32>
    %88 = arith.addf %87, %86 : vector<8x128xf32>
    %89 = arith.divf %87, %88 : vector<8x128xf32>
    %90 = vector.extract_strided_slice %77 {offsets = [0, 256], sizes = [8, 128], strides = [1, 1]} : vector<8x512xf32> to vector<8x128xf32>
    %91 = math.tanh %90 : vector<8x128xf32>
    %92 = vector.extract_strided_slice %77 {offsets = [0, 384], sizes = [8, 128], strides = [1, 1]} : vector<8x512xf32> to vector<8x128xf32>
    %93 = arith.negf %92 : vector<8x128xf32>
    %94 = math.exp %93 : vector<8x128xf32>
    %cst_30 = arith.constant 1.000000e+00 : f32
    %95 = vector.broadcast %cst_30 : f32 to vector<8x128xf32>
    %96 = arith.addf %95, %94 : vector<8x128xf32>
    %97 = arith.divf %95, %96 : vector<8x128xf32>
    %98 = arith.mulf %89, %38 : vector<8x128xf32>
    %99 = arith.mulf %83, %91 : vector<8x128xf32>
    %100 = arith.addf %98, %99 : vector<8x128xf32>
    %101 = math.tanh %100 : vector<8x128xf32>
    %102 = arith.mulf %97, %101 : vector<8x128xf32>
    %103 = tpu.concatenate %102, %70 in 1 : vector<8x128xf32>, vector<8x128xf32> -> vector<8x256xf32>
    %c0_31 = arith.constant 0 : index
    %c0_32 = arith.constant 0 : index
    %104 = vector.load %arg4[%c0_31, %c0_32] : memref<256x512xf32, #tpu.memory_space<vmem>>, vector<256x512xf32>
    %cst_33 = arith.constant dense<0.000000e+00> : vector<8x512xf32>
    %105 = tpu.matmul %103, %104, %cst_33 {dimension_numbers = #tpu.dot_dimension_numbers<[1], [0], [0], [1], [0, 0, 1, 1], [], []>} : vector<8x256xf32>, vector<256x512xf32>, vector<8x512xf32> -> vector<8x512xf32>
    %106 = vector.broadcast %7 : vector<1x512xf32> to vector<8x512xf32>
    %107 = arith.addf %105, %106 : vector<8x512xf32>
    %108 = vector.extract_strided_slice %107 {offsets = [0, 0], sizes = [8, 128], strides = [1, 1]} : vector<8x512xf32> to vector<8x128xf32>
    %109 = arith.negf %108 : vector<8x128xf32>
    %110 = math.exp %109 : vector<8x128xf32>
    %cst_34 = arith.constant 1.000000e+00 : f32
    %111 = vector.broadcast %cst_34 : f32 to vector<8x128xf32>
    %112 = arith.addf %111, %110 : vector<8x128xf32>
    %113 = arith.divf %111, %112 : vector<8x128xf32>
    %114 = vector.extract_strided_slice %107 {offsets = [0, 128], sizes = [8, 128], strides = [1, 1]} : vector<8x512xf32> to vector<8x128xf32>
    %115 = arith.negf %114 : vector<8x128xf32>
    %116 = math.exp %115 : vector<8x128xf32>
    %cst_35 = arith.constant 1.000000e+00 : f32
    %117 = vector.broadcast %cst_35 : f32 to vector<8x128xf32>
    %118 = arith.addf %117, %116 : vector<8x128xf32>
    %119 = arith.divf %117, %118 : vector<8x128xf32>
    %120 = vector.extract_strided_slice %107 {offsets = [0, 256], sizes = [8, 128], strides = [1, 1]} : vector<8x512xf32> to vector<8x128xf32>
    %121 = math.tanh %120 : vector<8x128xf32>
    %122 = vector.extract_strided_slice %107 {offsets = [0, 384], sizes = [8, 128], strides = [1, 1]} : vector<8x512xf32> to vector<8x128xf32>
    %123 = arith.negf %122 : vector<8x128xf32>
    %124 = math.exp %123 : vector<8x128xf32>
    %cst_36 = arith.constant 1.000000e+00 : f32
    %125 = vector.broadcast %cst_36 : f32 to vector<8x128xf32>
    %126 = arith.addf %125, %124 : vector<8x128xf32>
    %127 = arith.divf %125, %126 : vector<8x128xf32>
    %128 = arith.mulf %119, %68 : vector<8x128xf32>
    %129 = arith.mulf %113, %121 : vector<8x128xf32>
    %130 = arith.addf %128, %129 : vector<8x128xf32>
    %131 = math.tanh %130 : vector<8x128xf32>
    %132 = arith.mulf %127, %131 : vector<8x128xf32>
    %c2_i32 = arith.constant 2 : i32
    %c8_i32_37 = arith.constant 8 : i32
    %133 = arith.muli %c2_i32, %c8_i32_37 : i32
    %134 = tpu.assume_multiple %133, 8 : i32
    %135 = arith.index_cast %134 : i32 to index
    %c0_38 = arith.constant 0 : index
    %136 = vector.load %arg9[%135, %c0_38] : memref<64x512xf32, #tpu.memory_space<vmem>>, vector<8x512xf32>
    %c0_39 = arith.constant 0 : index
    %c0_40 = arith.constant 0 : index
    %137 = vector.load %arg2[%c0_39, %c0_40] : memref<128x512xf32, #tpu.memory_space<vmem>>, vector<128x512xf32>
    %cst_41 = arith.constant dense<0.000000e+00> : vector<8x512xf32>
    %138 = tpu.matmul %102, %137, %cst_41 {dimension_numbers = #tpu.dot_dimension_numbers<[1], [0], [0], [1], [0, 0, 1, 1], [], []>} : vector<8x128xf32>, vector<128x512xf32>, vector<8x512xf32> -> vector<8x512xf32>
    %139 = arith.addf %136, %138 : vector<8x512xf32>
    %140 = vector.extract_strided_slice %139 {offsets = [0, 0], sizes = [8, 128], strides = [1, 1]} : vector<8x512xf32> to vector<8x128xf32>
    %141 = arith.negf %140 : vector<8x128xf32>
    %142 = math.exp %141 : vector<8x128xf32>
    %cst_42 = arith.constant 1.000000e+00 : f32
    %143 = vector.broadcast %cst_42 : f32 to vector<8x128xf32>
    %144 = arith.addf %143, %142 : vector<8x128xf32>
    %145 = arith.divf %143, %144 : vector<8x128xf32>
    %146 = vector.extract_strided_slice %139 {offsets = [0, 128], sizes = [8, 128], strides = [1, 1]} : vector<8x512xf32> to vector<8x128xf32>
    %147 = arith.negf %146 : vector<8x128xf32>
    %148 = math.exp %147 : vector<8x128xf32>
    %cst_43 = arith.constant 1.000000e+00 : f32
    %149 = vector.broadcast %cst_43 : f32 to vector<8x128xf32>
    %150 = arith.addf %149, %148 : vector<8x128xf32>
    %151 = arith.divf %149, %150 : vector<8x128xf32>
    %152 = vector.extract_strided_slice %139 {offsets = [0, 256], sizes = [8, 128], strides = [1, 1]} : vector<8x512xf32> to vector<8x128xf32>
    %153 = math.tanh %152 : vector<8x128xf32>
    %154 = vector.extract_strided_slice %139 {offsets = [0, 384], sizes = [8, 128], strides = [1, 1]} : vector<8x512xf32> to vector<8x128xf32>
    %155 = arith.negf %154 : vector<8x128xf32>
    %156 = math.exp %155 : vector<8x128xf32>
    %cst_44 = arith.constant 1.000000e+00 : f32
    %157 = vector.broadcast %cst_44 : f32 to vector<8x128xf32>
    %158 = arith.addf %157, %156 : vector<8x128xf32>
    %159 = arith.divf %157, %158 : vector<8x128xf32>
    %160 = arith.mulf %151, %100 : vector<8x128xf32>
    %161 = arith.mulf %145, %153 : vector<8x128xf32>
    %162 = arith.addf %160, %161 : vector<8x128xf32>
    %163 = math.tanh %162 : vector<8x128xf32>
    %164 = arith.mulf %159, %163 : vector<8x128xf32>
    %165 = tpu.concatenate %164, %132 in 1 : vector<8x128xf32>, vector<8x128xf32> -> vector<8x256xf32>
    %c0_45 = arith.constant 0 : index
    %c0_46 = arith.constant 0 : index
    %166 = vector.load %arg4[%c0_45, %c0_46] : memref<256x512xf32, #tpu.memory_space<vmem>>, vector<256x512xf32>
    %cst_47 = arith.constant dense<0.000000e+00> : vector<8x512xf32>
    %167 = tpu.matmul %165, %166, %cst_47 {dimension_numbers = #tpu.dot_dimension_numbers<[1], [0], [0], [1], [0, 0, 1, 1], [], []>} : vector<8x256xf32>, vector<256x512xf32>, vector<8x512xf32> -> vector<8x512xf32>
    %168 = vector.broadcast %7 : vector<1x512xf32> to vector<8x512xf32>
    %169 = arith.addf %167, %168 : vector<8x512xf32>
    %170 = vector.extract_strided_slice %169 {offsets = [0, 0], sizes = [8, 128], strides = [1, 1]} : vector<8x512xf32> to vector<8x128xf32>
    %171 = arith.negf %170 : vector<8x128xf32>
    %172 = math.exp %171 : vector<8x128xf32>
    %cst_48 = arith.constant 1.000000e+00 : f32
    %173 = vector.broadcast %cst_48 : f32 to vector<8x128xf32>
    %174 = arith.addf %173, %172 : vector<8x128xf32>
    %175 = arith.divf %173, %174 : vector<8x128xf32>
    %176 = vector.extract_strided_slice %169 {offsets = [0, 128], sizes = [8, 128], strides = [1, 1]} : vector<8x512xf32> to vector<8x128xf32>
    %177 = arith.negf %176 : vector<8x128xf32>
    %178 = math.exp %177 : vector<8x128xf32>
    %cst_49 = arith.constant 1.000000e+00 : f32
    %179 = vector.broadcast %cst_49 : f32 to vector<8x128xf32>
    %180 = arith.addf %179, %178 : vector<8x128xf32>
    %181 = arith.divf %179, %180 : vector<8x128xf32>
    %182 = vector.extract_strided_slice %169 {offsets = [0, 256], sizes = [8, 128], strides = [1, 1]} : vector<8x512xf32> to vector<8x128xf32>
    %183 = math.tanh %182 : vector<8x128xf32>
    %184 = vector.extract_strided_slice %169 {offsets = [0, 384], sizes = [8, 128], strides = [1, 1]} : vector<8x512xf32> to vector<8x128xf32>
    %185 = arith.negf %184 : vector<8x128xf32>
    %186 = math.exp %185 : vector<8x128xf32>
    %cst_50 = arith.constant 1.000000e+00 : f32
    %187 = vector.broadcast %cst_50 : f32 to vector<8x128xf32>
    %188 = arith.addf %187, %186 : vector<8x128xf32>
    %189 = arith.divf %187, %188 : vector<8x128xf32>
    %190 = arith.mulf %181, %130 : vector<8x128xf32>
    %191 = arith.mulf %175, %183 : vector<8x128xf32>
    %192 = arith.addf %190, %191 : vector<8x128xf32>
    %193 = math.tanh %192 : vector<8x128xf32>
    %194 = arith.mulf %189, %193 : vector<8x128xf32>
    %c3_i32 = arith.constant 3 : i32
    %c8_i32_51 = arith.constant 8 : i32
    %195 = arith.muli %c3_i32, %c8_i32_51 : i32
    %196 = tpu.assume_multiple %195, 8 : i32
    %197 = arith.index_cast %196 : i32 to index
    %c0_52 = arith.constant 0 : index
    %198 = vector.load %arg9[%197, %c0_52] : memref<64x512xf32, #tpu.memory_space<vmem>>, vector<8x512xf32>
    %c0_53 = arith.constant 0 : index
    %c0_54 = arith.constant 0 : index
    %199 = vector.load %arg2[%c0_53, %c0_54] : memref<128x512xf32, #tpu.memory_space<vmem>>, vector<128x512xf32>
    %cst_55 = arith.constant dense<0.000000e+00> : vector<8x512xf32>
    %200 = tpu.matmul %164, %199, %cst_55 {dimension_numbers = #tpu.dot_dimension_numbers<[1], [0], [0], [1], [0, 0, 1, 1], [], []>} : vector<8x128xf32>, vector<128x512xf32>, vector<8x512xf32> -> vector<8x512xf32>
    %201 = arith.addf %198, %200 : vector<8x512xf32>
    %202 = vector.extract_strided_slice %201 {offsets = [0, 0], sizes = [8, 128], strides = [1, 1]} : vector<8x512xf32> to vector<8x128xf32>
    %203 = arith.negf %202 : vector<8x128xf32>
    %204 = math.exp %203 : vector<8x128xf32>
    %cst_56 = arith.constant 1.000000e+00 : f32
    %205 = vector.broadcast %cst_56 : f32 to vector<8x128xf32>
    %206 = arith.addf %205, %204 : vector<8x128xf32>
    %207 = arith.divf %205, %206 : vector<8x128xf32>
    %208 = vector.extract_strided_slice %201 {offsets = [0, 128], sizes = [8, 128], strides = [1, 1]} : vector<8x512xf32> to vector<8x128xf32>
    %209 = arith.negf %208 : vector<8x128xf32>
    %210 = math.exp %209 : vector<8x128xf32>
    %cst_57 = arith.constant 1.000000e+00 : f32
    %211 = vector.broadcast %cst_57 : f32 to vector<8x128xf32>
    %212 = arith.addf %211, %210 : vector<8x128xf32>
    %213 = arith.divf %211, %212 : vector<8x128xf32>
    %214 = vector.extract_strided_slice %201 {offsets = [0, 256], sizes = [8, 128], strides = [1, 1]} : vector<8x512xf32> to vector<8x128xf32>
    %215 = math.tanh %214 : vector<8x128xf32>
    %216 = vector.extract_strided_slice %201 {offsets = [0, 384], sizes = [8, 128], strides = [1, 1]} : vector<8x512xf32> to vector<8x128xf32>
    %217 = arith.negf %216 : vector<8x128xf32>
    %218 = math.exp %217 : vector<8x128xf32>
    %cst_58 = arith.constant 1.000000e+00 : f32
    %219 = vector.broadcast %cst_58 : f32 to vector<8x128xf32>
    %220 = arith.addf %219, %218 : vector<8x128xf32>
    %221 = arith.divf %219, %220 : vector<8x128xf32>
    %222 = arith.mulf %213, %162 : vector<8x128xf32>
    %223 = arith.mulf %207, %215 : vector<8x128xf32>
    %224 = arith.addf %222, %223 : vector<8x128xf32>
    %225 = math.tanh %224 : vector<8x128xf32>
    %226 = arith.mulf %221, %225 : vector<8x128xf32>
    %227 = tpu.concatenate %226, %194 in 1 : vector<8x128xf32>, vector<8x128xf32> -> vector<8x256xf32>
    %c0_59 = arith.constant 0 : index
    %c0_60 = arith.constant 0 : index
    %228 = vector.load %arg4[%c0_59, %c0_60] : memref<256x512xf32, #tpu.memory_space<vmem>>, vector<256x512xf32>
    %cst_61 = arith.constant dense<0.000000e+00> : vector<8x512xf32>
    %229 = tpu.matmul %227, %228, %cst_61 {dimension_numbers = #tpu.dot_dimension_numbers<[1], [0], [0], [1], [0, 0, 1, 1], [], []>} : vector<8x256xf32>, vector<256x512xf32>, vector<8x512xf32> -> vector<8x512xf32>
    %230 = vector.broadcast %7 : vector<1x512xf32> to vector<8x512xf32>
    %231 = arith.addf %229, %230 : vector<8x512xf32>
    %232 = vector.extract_strided_slice %231 {offsets = [0, 0], sizes = [8, 128], strides = [1, 1]} : vector<8x512xf32> to vector<8x128xf32>
    %233 = arith.negf %232 : vector<8x128xf32>
    %234 = math.exp %233 : vector<8x128xf32>
    %cst_62 = arith.constant 1.000000e+00 : f32
    %235 = vector.broadcast %cst_62 : f32 to vector<8x128xf32>
    %236 = arith.addf %235, %234 : vector<8x128xf32>
    %237 = arith.divf %235, %236 : vector<8x128xf32>
    %238 = vector.extract_strided_slice %231 {offsets = [0, 128], sizes = [8, 128], strides = [1, 1]} : vector<8x512xf32> to vector<8x128xf32>
    %239 = arith.negf %238 : vector<8x128xf32>
    %240 = math.exp %239 : vector<8x128xf32>
    %cst_63 = arith.constant 1.000000e+00 : f32
    %241 = vector.broadcast %cst_63 : f32 to vector<8x128xf32>
    %242 = arith.addf %241, %240 : vector<8x128xf32>
    %243 = arith.divf %241, %242 : vector<8x128xf32>
    %244 = vector.extract_strided_slice %231 {offsets = [0, 256], sizes = [8, 128], strides = [1, 1]} : vector<8x512xf32> to vector<8x128xf32>
    %245 = math.tanh %244 : vector<8x128xf32>
    %246 = vector.extract_strided_slice %231 {offsets = [0, 384], sizes = [8, 128], strides = [1, 1]} : vector<8x512xf32> to vector<8x128xf32>
    %247 = arith.negf %246 : vector<8x128xf32>
    %248 = math.exp %247 : vector<8x128xf32>
    %cst_64 = arith.constant 1.000000e+00 : f32
    %249 = vector.broadcast %cst_64 : f32 to vector<8x128xf32>
    %250 = arith.addf %249, %248 : vector<8x128xf32>
    %251 = arith.divf %249, %250 : vector<8x128xf32>
    %252 = arith.mulf %243, %192 : vector<8x128xf32>
    %253 = arith.mulf %237, %245 : vector<8x128xf32>
    %254 = arith.addf %252, %253 : vector<8x128xf32>
    %255 = math.tanh %254 : vector<8x128xf32>
    %256 = arith.mulf %251, %255 : vector<8x128xf32>
    %c4_i32 = arith.constant 4 : i32
    %c8_i32_65 = arith.constant 8 : i32
    %257 = arith.muli %c4_i32, %c8_i32_65 : i32
    %258 = tpu.assume_multiple %257, 8 : i32
    %259 = arith.index_cast %258 : i32 to index
    %c0_66 = arith.constant 0 : index
    %260 = vector.load %arg9[%259, %c0_66] : memref<64x512xf32, #tpu.memory_space<vmem>>, vector<8x512xf32>
    %c0_67 = arith.constant 0 : index
    %c0_68 = arith.constant 0 : index
    %261 = vector.load %arg2[%c0_67, %c0_68] : memref<128x512xf32, #tpu.memory_space<vmem>>, vector<128x512xf32>
    %cst_69 = arith.constant dense<0.000000e+00> : vector<8x512xf32>
    %262 = tpu.matmul %226, %261, %cst_69 {dimension_numbers = #tpu.dot_dimension_numbers<[1], [0], [0], [1], [0, 0, 1, 1], [], []>} : vector<8x128xf32>, vector<128x512xf32>, vector<8x512xf32> -> vector<8x512xf32>
    %263 = arith.addf %260, %262 : vector<8x512xf32>
    %264 = vector.extract_strided_slice %263 {offsets = [0, 0], sizes = [8, 128], strides = [1, 1]} : vector<8x512xf32> to vector<8x128xf32>
    %265 = arith.negf %264 : vector<8x128xf32>
    %266 = math.exp %265 : vector<8x128xf32>
    %cst_70 = arith.constant 1.000000e+00 : f32
    %267 = vector.broadcast %cst_70 : f32 to vector<8x128xf32>
    %268 = arith.addf %267, %266 : vector<8x128xf32>
    %269 = arith.divf %267, %268 : vector<8x128xf32>
    %270 = vector.extract_strided_slice %263 {offsets = [0, 128], sizes = [8, 128], strides = [1, 1]} : vector<8x512xf32> to vector<8x128xf32>
    %271 = arith.negf %270 : vector<8x128xf32>
    %272 = math.exp %271 : vector<8x128xf32>
    %cst_71 = arith.constant 1.000000e+00 : f32
    %273 = vector.broadcast %cst_71 : f32 to vector<8x128xf32>
    %274 = arith.addf %273, %272 : vector<8x128xf32>
    %275 = arith.divf %273, %274 : vector<8x128xf32>
    %276 = vector.extract_strided_slice %263 {offsets = [0, 256], sizes = [8, 128], strides = [1, 1]} : vector<8x512xf32> to vector<8x128xf32>
    %277 = math.tanh %276 : vector<8x128xf32>
    %278 = vector.extract_strided_slice %263 {offsets = [0, 384], sizes = [8, 128], strides = [1, 1]} : vector<8x512xf32> to vector<8x128xf32>
    %279 = arith.negf %278 : vector<8x128xf32>
    %280 = math.exp %279 : vector<8x128xf32>
    %cst_72 = arith.constant 1.000000e+00 : f32
    %281 = vector.broadcast %cst_72 : f32 to vector<8x128xf32>
    %282 = arith.addf %281, %280 : vector<8x128xf32>
    %283 = arith.divf %281, %282 : vector<8x128xf32>
    %284 = arith.mulf %275, %224 : vector<8x128xf32>
    %285 = arith.mulf %269, %277 : vector<8x128xf32>
    %286 = arith.addf %284, %285 : vector<8x128xf32>
    %287 = math.tanh %286 : vector<8x128xf32>
    %288 = arith.mulf %283, %287 : vector<8x128xf32>
    %289 = tpu.concatenate %288, %256 in 1 : vector<8x128xf32>, vector<8x128xf32> -> vector<8x256xf32>
    %c0_73 = arith.constant 0 : index
    %c0_74 = arith.constant 0 : index
    %290 = vector.load %arg4[%c0_73, %c0_74] : memref<256x512xf32, #tpu.memory_space<vmem>>, vector<256x512xf32>
    %cst_75 = arith.constant dense<0.000000e+00> : vector<8x512xf32>
    %291 = tpu.matmul %289, %290, %cst_75 {dimension_numbers = #tpu.dot_dimension_numbers<[1], [0], [0], [1], [0, 0, 1, 1], [], []>} : vector<8x256xf32>, vector<256x512xf32>, vector<8x512xf32> -> vector<8x512xf32>
    %292 = vector.broadcast %7 : vector<1x512xf32> to vector<8x512xf32>
    %293 = arith.addf %291, %292 : vector<8x512xf32>
    %294 = vector.extract_strided_slice %293 {offsets = [0, 0], sizes = [8, 128], strides = [1, 1]} : vector<8x512xf32> to vector<8x128xf32>
    %295 = arith.negf %294 : vector<8x128xf32>
    %296 = math.exp %295 : vector<8x128xf32>
    %cst_76 = arith.constant 1.000000e+00 : f32
    %297 = vector.broadcast %cst_76 : f32 to vector<8x128xf32>
    %298 = arith.addf %297, %296 : vector<8x128xf32>
    %299 = arith.divf %297, %298 : vector<8x128xf32>
    %300 = vector.extract_strided_slice %293 {offsets = [0, 128], sizes = [8, 128], strides = [1, 1]} : vector<8x512xf32> to vector<8x128xf32>
    %301 = arith.negf %300 : vector<8x128xf32>
    %302 = math.exp %301 : vector<8x128xf32>
    %cst_77 = arith.constant 1.000000e+00 : f32
    %303 = vector.broadcast %cst_77 : f32 to vector<8x128xf32>
    %304 = arith.addf %303, %302 : vector<8x128xf32>
    %305 = arith.divf %303, %304 : vector<8x128xf32>
    %306 = vector.extract_strided_slice %293 {offsets = [0, 256], sizes = [8, 128], strides = [1, 1]} : vector<8x512xf32> to vector<8x128xf32>
    %307 = math.tanh %306 : vector<8x128xf32>
    %308 = vector.extract_strided_slice %293 {offsets = [0, 384], sizes = [8, 128], strides = [1, 1]} : vector<8x512xf32> to vector<8x128xf32>
    %309 = arith.negf %308 : vector<8x128xf32>
    %310 = math.exp %309 : vector<8x128xf32>
    %cst_78 = arith.constant 1.000000e+00 : f32
    %311 = vector.broadcast %cst_78 : f32 to vector<8x128xf32>
    %312 = arith.addf %311, %310 : vector<8x128xf32>
    %313 = arith.divf %311, %312 : vector<8x128xf32>
    %314 = arith.mulf %305, %254 : vector<8x128xf32>
    %315 = arith.mulf %299, %307 : vector<8x128xf32>
    %316 = arith.addf %314, %315 : vector<8x128xf32>
    %317 = math.tanh %316 : vector<8x128xf32>
    %318 = arith.mulf %313, %317 : vector<8x128xf32>
    %c5_i32 = arith.constant 5 : i32
    %c8_i32_79 = arith.constant 8 : i32
    %319 = arith.muli %c5_i32, %c8_i32_79 : i32
    %320 = tpu.assume_multiple %319, 8 : i32
    %321 = arith.index_cast %320 : i32 to index
    %c0_80 = arith.constant 0 : index
    %322 = vector.load %arg9[%321, %c0_80] : memref<64x512xf32, #tpu.memory_space<vmem>>, vector<8x512xf32>
    %c0_81 = arith.constant 0 : index
    %c0_82 = arith.constant 0 : index
    %323 = vector.load %arg2[%c0_81, %c0_82] : memref<128x512xf32, #tpu.memory_space<vmem>>, vector<128x512xf32>
    %cst_83 = arith.constant dense<0.000000e+00> : vector<8x512xf32>
    %324 = tpu.matmul %288, %323, %cst_83 {dimension_numbers = #tpu.dot_dimension_numbers<[1], [0], [0], [1], [0, 0, 1, 1], [], []>} : vector<8x128xf32>, vector<128x512xf32>, vector<8x512xf32> -> vector<8x512xf32>
    %325 = arith.addf %322, %324 : vector<8x512xf32>
    %326 = vector.extract_strided_slice %325 {offsets = [0, 0], sizes = [8, 128], strides = [1, 1]} : vector<8x512xf32> to vector<8x128xf32>
    %327 = arith.negf %326 : vector<8x128xf32>
    %328 = math.exp %327 : vector<8x128xf32>
    %cst_84 = arith.constant 1.000000e+00 : f32
    %329 = vector.broadcast %cst_84 : f32 to vector<8x128xf32>
    %330 = arith.addf %329, %328 : vector<8x128xf32>
    %331 = arith.divf %329, %330 : vector<8x128xf32>
    %332 = vector.extract_strided_slice %325 {offsets = [0, 128], sizes = [8, 128], strides = [1, 1]} : vector<8x512xf32> to vector<8x128xf32>
    %333 = arith.negf %332 : vector<8x128xf32>
    %334 = math.exp %333 : vector<8x128xf32>
    %cst_85 = arith.constant 1.000000e+00 : f32
    %335 = vector.broadcast %cst_85 : f32 to vector<8x128xf32>
    %336 = arith.addf %335, %334 : vector<8x128xf32>
    %337 = arith.divf %335, %336 : vector<8x128xf32>
    %338 = vector.extract_strided_slice %325 {offsets = [0, 256], sizes = [8, 128], strides = [1, 1]} : vector<8x512xf32> to vector<8x128xf32>
    %339 = math.tanh %338 : vector<8x128xf32>
    %340 = vector.extract_strided_slice %325 {offsets = [0, 384], sizes = [8, 128], strides = [1, 1]} : vector<8x512xf32> to vector<8x128xf32>
    %341 = arith.negf %340 : vector<8x128xf32>
    %342 = math.exp %341 : vector<8x128xf32>
    %cst_86 = arith.constant 1.000000e+00 : f32
    %343 = vector.broadcast %cst_86 : f32 to vector<8x128xf32>
    %344 = arith.addf %343, %342 : vector<8x128xf32>
    %345 = arith.divf %343, %344 : vector<8x128xf32>
    %346 = arith.mulf %337, %286 : vector<8x128xf32>
    %347 = arith.mulf %331, %339 : vector<8x128xf32>
    %348 = arith.addf %346, %347 : vector<8x128xf32>
    %349 = math.tanh %348 : vector<8x128xf32>
    %350 = arith.mulf %345, %349 : vector<8x128xf32>
    %351 = tpu.concatenate %350, %318 in 1 : vector<8x128xf32>, vector<8x128xf32> -> vector<8x256xf32>
    %c0_87 = arith.constant 0 : index
    %c0_88 = arith.constant 0 : index
    %352 = vector.load %arg4[%c0_87, %c0_88] : memref<256x512xf32, #tpu.memory_space<vmem>>, vector<256x512xf32>
    %cst_89 = arith.constant dense<0.000000e+00> : vector<8x512xf32>
    %353 = tpu.matmul %351, %352, %cst_89 {dimension_numbers = #tpu.dot_dimension_numbers<[1], [0], [0], [1], [0, 0, 1, 1], [], []>} : vector<8x256xf32>, vector<256x512xf32>, vector<8x512xf32> -> vector<8x512xf32>
    %354 = vector.broadcast %7 : vector<1x512xf32> to vector<8x512xf32>
    %355 = arith.addf %353, %354 : vector<8x512xf32>
    %356 = vector.extract_strided_slice %355 {offsets = [0, 0], sizes = [8, 128], strides = [1, 1]} : vector<8x512xf32> to vector<8x128xf32>
    %357 = arith.negf %356 : vector<8x128xf32>
    %358 = math.exp %357 : vector<8x128xf32>
    %cst_90 = arith.constant 1.000000e+00 : f32
    %359 = vector.broadcast %cst_90 : f32 to vector<8x128xf32>
    %360 = arith.addf %359, %358 : vector<8x128xf32>
    %361 = arith.divf %359, %360 : vector<8x128xf32>
    %362 = vector.extract_strided_slice %355 {offsets = [0, 128], sizes = [8, 128], strides = [1, 1]} : vector<8x512xf32> to vector<8x128xf32>
    %363 = arith.negf %362 : vector<8x128xf32>
    %364 = math.exp %363 : vector<8x128xf32>
    %cst_91 = arith.constant 1.000000e+00 : f32
    %365 = vector.broadcast %cst_91 : f32 to vector<8x128xf32>
    %366 = arith.addf %365, %364 : vector<8x128xf32>
    %367 = arith.divf %365, %366 : vector<8x128xf32>
    %368 = vector.extract_strided_slice %355 {offsets = [0, 256], sizes = [8, 128], strides = [1, 1]} : vector<8x512xf32> to vector<8x128xf32>
    %369 = math.tanh %368 : vector<8x128xf32>
    %370 = vector.extract_strided_slice %355 {offsets = [0, 384], sizes = [8, 128], strides = [1, 1]} : vector<8x512xf32> to vector<8x128xf32>
    %371 = arith.negf %370 : vector<8x128xf32>
    %372 = math.exp %371 : vector<8x128xf32>
    %cst_92 = arith.constant 1.000000e+00 : f32
    %373 = vector.broadcast %cst_92 : f32 to vector<8x128xf32>
    %374 = arith.addf %373, %372 : vector<8x128xf32>
    %375 = arith.divf %373, %374 : vector<8x128xf32>
    %376 = arith.mulf %367, %316 : vector<8x128xf32>
    %377 = arith.mulf %361, %369 : vector<8x128xf32>
    %378 = arith.addf %376, %377 : vector<8x128xf32>
    %379 = math.tanh %378 : vector<8x128xf32>
    %380 = arith.mulf %375, %379 : vector<8x128xf32>
    %c6_i32 = arith.constant 6 : i32
    %c8_i32_93 = arith.constant 8 : i32
    %381 = arith.muli %c6_i32, %c8_i32_93 : i32
    %382 = tpu.assume_multiple %381, 8 : i32
    %383 = arith.index_cast %382 : i32 to index
    %c0_94 = arith.constant 0 : index
    %384 = vector.load %arg9[%383, %c0_94] : memref<64x512xf32, #tpu.memory_space<vmem>>, vector<8x512xf32>
    %c0_95 = arith.constant 0 : index
    %c0_96 = arith.constant 0 : index
    %385 = vector.load %arg2[%c0_95, %c0_96] : memref<128x512xf32, #tpu.memory_space<vmem>>, vector<128x512xf32>
    %cst_97 = arith.constant dense<0.000000e+00> : vector<8x512xf32>
    %386 = tpu.matmul %350, %385, %cst_97 {dimension_numbers = #tpu.dot_dimension_numbers<[1], [0], [0], [1], [0, 0, 1, 1], [], []>} : vector<8x128xf32>, vector<128x512xf32>, vector<8x512xf32> -> vector<8x512xf32>
    %387 = arith.addf %384, %386 : vector<8x512xf32>
    %388 = vector.extract_strided_slice %387 {offsets = [0, 0], sizes = [8, 128], strides = [1, 1]} : vector<8x512xf32> to vector<8x128xf32>
    %389 = arith.negf %388 : vector<8x128xf32>
    %390 = math.exp %389 : vector<8x128xf32>
    %cst_98 = arith.constant 1.000000e+00 : f32
    %391 = vector.broadcast %cst_98 : f32 to vector<8x128xf32>
    %392 = arith.addf %391, %390 : vector<8x128xf32>
    %393 = arith.divf %391, %392 : vector<8x128xf32>
    %394 = vector.extract_strided_slice %387 {offsets = [0, 128], sizes = [8, 128], strides = [1, 1]} : vector<8x512xf32> to vector<8x128xf32>
    %395 = arith.negf %394 : vector<8x128xf32>
    %396 = math.exp %395 : vector<8x128xf32>
    %cst_99 = arith.constant 1.000000e+00 : f32
    %397 = vector.broadcast %cst_99 : f32 to vector<8x128xf32>
    %398 = arith.addf %397, %396 : vector<8x128xf32>
    %399 = arith.divf %397, %398 : vector<8x128xf32>
    %400 = vector.extract_strided_slice %387 {offsets = [0, 256], sizes = [8, 128], strides = [1, 1]} : vector<8x512xf32> to vector<8x128xf32>
    %401 = math.tanh %400 : vector<8x128xf32>
    %402 = vector.extract_strided_slice %387 {offsets = [0, 384], sizes = [8, 128], strides = [1, 1]} : vector<8x512xf32> to vector<8x128xf32>
    %403 = arith.negf %402 : vector<8x128xf32>
    %404 = math.exp %403 : vector<8x128xf32>
    %cst_100 = arith.constant 1.000000e+00 : f32
    %405 = vector.broadcast %cst_100 : f32 to vector<8x128xf32>
    %406 = arith.addf %405, %404 : vector<8x128xf32>
    %407 = arith.divf %405, %406 : vector<8x128xf32>
    %408 = arith.mulf %399, %348 : vector<8x128xf32>
    %409 = arith.mulf %393, %401 : vector<8x128xf32>
    %410 = arith.addf %408, %409 : vector<8x128xf32>
    %411 = math.tanh %410 : vector<8x128xf32>
    %412 = arith.mulf %407, %411 : vector<8x128xf32>
    %413 = tpu.concatenate %412, %380 in 1 : vector<8x128xf32>, vector<8x128xf32> -> vector<8x256xf32>
    %c0_101 = arith.constant 0 : index
    %c0_102 = arith.constant 0 : index
    %414 = vector.load %arg4[%c0_101, %c0_102] : memref<256x512xf32, #tpu.memory_space<vmem>>, vector<256x512xf32>
    %cst_103 = arith.constant dense<0.000000e+00> : vector<8x512xf32>
    %415 = tpu.matmul %413, %414, %cst_103 {dimension_numbers = #tpu.dot_dimension_numbers<[1], [0], [0], [1], [0, 0, 1, 1], [], []>} : vector<8x256xf32>, vector<256x512xf32>, vector<8x512xf32> -> vector<8x512xf32>
    %416 = vector.broadcast %7 : vector<1x512xf32> to vector<8x512xf32>
    %417 = arith.addf %415, %416 : vector<8x512xf32>
    %418 = vector.extract_strided_slice %417 {offsets = [0, 0], sizes = [8, 128], strides = [1, 1]} : vector<8x512xf32> to vector<8x128xf32>
    %419 = arith.negf %418 : vector<8x128xf32>
    %420 = math.exp %419 : vector<8x128xf32>
    %cst_104 = arith.constant 1.000000e+00 : f32
    %421 = vector.broadcast %cst_104 : f32 to vector<8x128xf32>
    %422 = arith.addf %421, %420 : vector<8x128xf32>
    %423 = arith.divf %421, %422 : vector<8x128xf32>
    %424 = vector.extract_strided_slice %417 {offsets = [0, 128], sizes = [8, 128], strides = [1, 1]} : vector<8x512xf32> to vector<8x128xf32>
    %425 = arith.negf %424 : vector<8x128xf32>
    %426 = math.exp %425 : vector<8x128xf32>
    %cst_105 = arith.constant 1.000000e+00 : f32
    %427 = vector.broadcast %cst_105 : f32 to vector<8x128xf32>
    %428 = arith.addf %427, %426 : vector<8x128xf32>
    %429 = arith.divf %427, %428 : vector<8x128xf32>
    %430 = vector.extract_strided_slice %417 {offsets = [0, 256], sizes = [8, 128], strides = [1, 1]} : vector<8x512xf32> to vector<8x128xf32>
    %431 = math.tanh %430 : vector<8x128xf32>
    %432 = vector.extract_strided_slice %417 {offsets = [0, 384], sizes = [8, 128], strides = [1, 1]} : vector<8x512xf32> to vector<8x128xf32>
    %433 = arith.negf %432 : vector<8x128xf32>
    %434 = math.exp %433 : vector<8x128xf32>
    %cst_106 = arith.constant 1.000000e+00 : f32
    %435 = vector.broadcast %cst_106 : f32 to vector<8x128xf32>
    %436 = arith.addf %435, %434 : vector<8x128xf32>
    %437 = arith.divf %435, %436 : vector<8x128xf32>
    %438 = arith.mulf %429, %378 : vector<8x128xf32>
    %439 = arith.mulf %423, %431 : vector<8x128xf32>
    %440 = arith.addf %438, %439 : vector<8x128xf32>
    %441 = math.tanh %440 : vector<8x128xf32>
    %442 = arith.mulf %437, %441 : vector<8x128xf32>
    %c7_i32 = arith.constant 7 : i32
    %c8_i32_107 = arith.constant 8 : i32
    %443 = arith.muli %c7_i32, %c8_i32_107 : i32
    %444 = tpu.assume_multiple %443, 8 : i32
    %445 = arith.index_cast %444 : i32 to index
    %c0_108 = arith.constant 0 : index
    %446 = vector.load %arg9[%445, %c0_108] : memref<64x512xf32, #tpu.memory_space<vmem>>, vector<8x512xf32>
    %c0_109 = arith.constant 0 : index
    %c0_110 = arith.constant 0 : index
    %447 = vector.load %arg2[%c0_109, %c0_110] : memref<128x512xf32, #tpu.memory_space<vmem>>, vector<128x512xf32>
    %cst_111 = arith.constant dense<0.000000e+00> : vector<8x512xf32>
    %448 = tpu.matmul %412, %447, %cst_111 {dimension_numbers = #tpu.dot_dimension_numbers<[1], [0], [0], [1], [0, 0, 1, 1], [], []>} : vector<8x128xf32>, vector<128x512xf32>, vector<8x512xf32> -> vector<8x512xf32>
    %449 = arith.addf %446, %448 : vector<8x512xf32>
    %450 = vector.extract_strided_slice %449 {offsets = [0, 0], sizes = [8, 128], strides = [1, 1]} : vector<8x512xf32> to vector<8x128xf32>
    %451 = arith.negf %450 : vector<8x128xf32>
    %452 = math.exp %451 : vector<8x128xf32>
    %cst_112 = arith.constant 1.000000e+00 : f32
    %453 = vector.broadcast %cst_112 : f32 to vector<8x128xf32>
    %454 = arith.addf %453, %452 : vector<8x128xf32>
    %455 = arith.divf %453, %454 : vector<8x128xf32>
    %456 = vector.extract_strided_slice %449 {offsets = [0, 128], sizes = [8, 128], strides = [1, 1]} : vector<8x512xf32> to vector<8x128xf32>
    %457 = arith.negf %456 : vector<8x128xf32>
    %458 = math.exp %457 : vector<8x128xf32>
    %cst_113 = arith.constant 1.000000e+00 : f32
    %459 = vector.broadcast %cst_113 : f32 to vector<8x128xf32>
    %460 = arith.addf %459, %458 : vector<8x128xf32>
    %461 = arith.divf %459, %460 : vector<8x128xf32>
    %462 = vector.extract_strided_slice %449 {offsets = [0, 256], sizes = [8, 128], strides = [1, 1]} : vector<8x512xf32> to vector<8x128xf32>
    %463 = math.tanh %462 : vector<8x128xf32>
    %464 = vector.extract_strided_slice %449 {offsets = [0, 384], sizes = [8, 128], strides = [1, 1]} : vector<8x512xf32> to vector<8x128xf32>
    %465 = arith.negf %464 : vector<8x128xf32>
    %466 = math.exp %465 : vector<8x128xf32>
    %cst_114 = arith.constant 1.000000e+00 : f32
    %467 = vector.broadcast %cst_114 : f32 to vector<8x128xf32>
    %468 = arith.addf %467, %466 : vector<8x128xf32>
    %469 = arith.divf %467, %468 : vector<8x128xf32>
    %470 = arith.mulf %461, %410 : vector<8x128xf32>
    %471 = arith.mulf %455, %463 : vector<8x128xf32>
    %472 = arith.addf %470, %471 : vector<8x128xf32>
    %473 = math.tanh %472 : vector<8x128xf32>
    %474 = arith.mulf %469, %473 : vector<8x128xf32>
    %475 = tpu.concatenate %474, %442 in 1 : vector<8x128xf32>, vector<8x128xf32> -> vector<8x256xf32>
    %c0_115 = arith.constant 0 : index
    %c0_116 = arith.constant 0 : index
    %476 = vector.load %arg4[%c0_115, %c0_116] : memref<256x512xf32, #tpu.memory_space<vmem>>, vector<256x512xf32>
    %cst_117 = arith.constant dense<0.000000e+00> : vector<8x512xf32>
    %477 = tpu.matmul %475, %476, %cst_117 {dimension_numbers = #tpu.dot_dimension_numbers<[1], [0], [0], [1], [0, 0, 1, 1], [], []>} : vector<8x256xf32>, vector<256x512xf32>, vector<8x512xf32> -> vector<8x512xf32>
    %478 = vector.broadcast %7 : vector<1x512xf32> to vector<8x512xf32>
    %479 = arith.addf %477, %478 : vector<8x512xf32>
    %480 = vector.extract_strided_slice %479 {offsets = [0, 0], sizes = [8, 128], strides = [1, 1]} : vector<8x512xf32> to vector<8x128xf32>
    %481 = arith.negf %480 : vector<8x128xf32>
    %482 = math.exp %481 : vector<8x128xf32>
    %cst_118 = arith.constant 1.000000e+00 : f32
    %483 = vector.broadcast %cst_118 : f32 to vector<8x128xf32>
    %484 = arith.addf %483, %482 : vector<8x128xf32>
    %485 = arith.divf %483, %484 : vector<8x128xf32>
    %486 = vector.extract_strided_slice %479 {offsets = [0, 128], sizes = [8, 128], strides = [1, 1]} : vector<8x512xf32> to vector<8x128xf32>
    %487 = arith.negf %486 : vector<8x128xf32>
    %488 = math.exp %487 : vector<8x128xf32>
    %cst_119 = arith.constant 1.000000e+00 : f32
    %489 = vector.broadcast %cst_119 : f32 to vector<8x128xf32>
    %490 = arith.addf %489, %488 : vector<8x128xf32>
    %491 = arith.divf %489, %490 : vector<8x128xf32>
    %492 = vector.extract_strided_slice %479 {offsets = [0, 256], sizes = [8, 128], strides = [1, 1]} : vector<8x512xf32> to vector<8x128xf32>
    %493 = math.tanh %492 : vector<8x128xf32>
    %494 = vector.extract_strided_slice %479 {offsets = [0, 384], sizes = [8, 128], strides = [1, 1]} : vector<8x512xf32> to vector<8x128xf32>
    %495 = arith.negf %494 : vector<8x128xf32>
    %496 = math.exp %495 : vector<8x128xf32>
    %cst_120 = arith.constant 1.000000e+00 : f32
    %497 = vector.broadcast %cst_120 : f32 to vector<8x128xf32>
    %498 = arith.addf %497, %496 : vector<8x128xf32>
    %499 = arith.divf %497, %498 : vector<8x128xf32>
    %500 = arith.mulf %491, %440 : vector<8x128xf32>
    %501 = arith.mulf %485, %493 : vector<8x128xf32>
    %502 = arith.addf %500, %501 : vector<8x128xf32>
    %503 = math.tanh %502 : vector<8x128xf32>
    %504 = arith.mulf %499, %503 : vector<8x128xf32>
    %c8_i32_121 = arith.constant 8 : i32
    %c0_122 = arith.constant 0 : index
    %c0_123 = arith.constant 0 : index
    %505 = vector.load %arg6[%c0_122, %c0_123] : memref<128x128xf32, #tpu.memory_space<vmem>>, vector<128x128xf32>
    %cst_124 = arith.constant dense<0.000000e+00> : vector<8x128xf32>
    %506 = tpu.matmul %504, %505, %cst_124 {dimension_numbers = #tpu.dot_dimension_numbers<[1], [0], [0], [1], [0, 0, 1, 1], [], []>} : vector<8x128xf32>, vector<128x128xf32>, vector<8x128xf32> -> vector<8x128xf32>
    %c0_125 = arith.constant 0 : index
    %c0_126 = arith.constant 0 : index
    %507 = vector.load %arg7[%c0_125, %c0_126] : memref<1x128xf32, #tpu.memory_space<vmem>>, vector<1x128xf32>
    %508 = vector.broadcast %507 : vector<1x128xf32> to vector<8x128xf32>
    %509 = arith.addf %506, %508 : vector<8x128xf32>
    %c0_127 = arith.constant 0 : index
    %c0_128 = arith.constant 0 : index
    %510 = vector.load %arg8[%c0_127, %c0_128] : memref<8x128xf32, #tpu.memory_space<vmem>>, vector<8x128xf32>
    tpu.vector_store %arg8[%c0_127, %c0_128], %509 {strides = array<i32>} : memref<8x128xf32, #tpu.memory_space<vmem>>, vector<8x128xf32>,
    return
  }
}

</mosaic_0001>

<llo_original>
// kernel: rnn_forward.1
$region0: #{rnn_forward.1}
  #allocation0 [shape = 'u32[]', space=smem, size = 0x4, offset = 0x4, fixed_abs, tag = 'smem constant byte address 0x4 - core index']
  #allocation1 [shape = 'u32[144,128]{1,0:T(1,128)}', space=vmem, size = 0x12000, scoped, tag = 'internal scratch']
  #allocation2 [shape = 'f32[64,512]{1,0:T(8,128)}', space=vmem, size = 0x20000, scoped, tag = 'scratch operand']
  %s0 = inlined_call_operand.vmem [shape: f32[64,32], index: 0, kind: input, shape index: {}]
  %s1 = inlined_call_operand.vmem [shape: f32[32,512], index: 1, kind: input, shape index: {}]
  %s2 = inlined_call_operand.vmem [shape: f32[128,512], index: 2, kind: input, shape index: {}]
  %s3 = inlined_call_operand.vmem [shape: f32[1,512], index: 3, kind: input, shape index: {}]
  %s4 = inlined_call_operand.vmem [shape: f32[256,512], index: 4, kind: input, shape index: {}]
  %s5 = inlined_call_operand.vmem [shape: f32[1,512], index: 5, kind: input, shape index: {}]
  %s6 = inlined_call_operand.vmem [shape: f32[128,128], index: 6, kind: input, shape index: {}]
  %s7 = inlined_call_operand.vmem [shape: f32[1,128], index: 7, kind: input, shape index: {}]
  %s8 = inlined_call_operand.vmem [shape: f32[8,128], index: 8, kind: output, shape index: {}]
  %s9 = sld [smem:[#allocation0]]
  $region42: #{rnn_forward.1} parent=0
    _
  %s11 = ssub.s32 1, %s9
  %s12 = scalar_select 0, %s11, %s9
  // Predicated region
  $region2: #{rnn_forward.1} parent=0 // pred_check
    _
  $region3: #{rnn_forward.1} parent=0 // pred_check_branch
    %14 = sbr.rel (0) target = $region5
  $region4: #{rnn_forward.1} parent=0 // pred_region
    _
  $region5: #{rnn_forward.1} parent=0 // pred_fallthru
    _
  // Predicated region
  $region6: #{rnn_forward.1} parent=0 // pred_check
    _
  $region7: #{rnn_forward.1} parent=0 // pred_check_branch
    %16 = sbr.rel (0) target = $region9
  $region8: #{rnn_forward.1} parent=0 // pred_region
    _
  $region9: #{rnn_forward.1} parent=0 // pred_fallthru
    _
  // Predicated region
  $region10: #{rnn_forward.1} parent=0 // pred_check
    _
  $region11: #{rnn_forward.1} parent=0 // pred_check_branch
    %18 = sbr.rel (0) target = $region13
  $region12: #{rnn_forward.1} parent=0 // pred_region
    _
  $region13: #{rnn_forward.1} parent=0 // pred_fallthru
    _
  // Predicated region
  $region14: #{rnn_forward.1} parent=0 // pred_check
    _
  $region15: #{rnn_forward.1} parent=0 // pred_check_branch
    %20 = sbr.rel (0) target = $region17
  $region16: #{rnn_forward.1} parent=0 // pred_region
    _
  $region17: #{rnn_forward.1} parent=0 // pred_fallthru
    _
  // Predicated region
  $region18: #{rnn_forward.1} parent=0 // pred_check
    _
  $region19: #{rnn_forward.1} parent=0 // pred_check_branch
    %22 = sbr.rel (0) target = $region21
  $region20: #{rnn_forward.1} parent=0 // pred_region
    _
  $region21: #{rnn_forward.1} parent=0 // pred_fallthru
    _
  // Predicated region
  $region22: #{rnn_forward.1} parent=0 // pred_check
    _
  $region23: #{rnn_forward.1} parent=0 // pred_check_branch
    %24 = sbr.rel (0) target = $region25
  $region24: #{rnn_forward.1} parent=0 // pred_region
    _
  $region25: #{rnn_forward.1} parent=0 // pred_fallthru
    _
  // Predicated region
  $region26: #{rnn_forward.1} parent=0 // pred_check
    _
  $region27: #{rnn_forward.1} parent=0 // pred_check_branch
    %26 = sbr.rel (0) target = $region29
  $region28: #{rnn_forward.1} parent=0 // pred_region
    _
  $region29: #{rnn_forward.1} parent=0 // pred_fallthru
    _
  // Predicated region
  $region30: #{rnn_forward.1} parent=0 // pred_check
    _
  $region31: #{rnn_forward.1} parent=0 // pred_check_branch
    %28 = sbr.rel (0) target = $region33
  $region32: #{rnn_forward.1} parent=0 // pred_region
    _
  $region33: #{rnn_forward.1} parent=0 // pred_fallthru
    _
  %v29 = vld [vmem:[%s0] sm:$0xff]
  %v30 = vld [vmem:[%s0 + $0x8] sm:$0xff]
  %v31 = vld [vmem:[%s0 + $0x10] sm:$0xff]
  %v32 = vld [vmem:[%s0 + $0x18] sm:$0xff]
  %v33 = vld [vmem:[%s0 + $0x20] sm:$0xff]
  %v34 = vld [vmem:[%s0 + $0x28] sm:$0xff]
  %v35 = vld [vmem:[%s0 + $0x30] sm:$0xff]
  %v36 = vld [vmem:[%s0 + $0x38] sm:$0xff]
  %v37 = vld [vmem:[%s1] sm:$0xff]
  %v38 = vld [vmem:[%s1 + $0x8] sm:$0xff]
  %v39 = vld [vmem:[%s1 + $0x10] sm:$0xff]
  %v40 = vld [vmem:[%s1 + $0x18] sm:$0xff]
  %v41 = vld [vmem:[%s1 + $0x20] sm:$0xff]
  %v42 = vld [vmem:[%s1 + $0x28] sm:$0xff]
  %v43 = vld [vmem:[%s1 + $0x30] sm:$0xff]
  %v44 = vld [vmem:[%s1 + $0x38] sm:$0xff]
  %v45 = vld [vmem:[%s1 + $0x40] sm:$0xff]
  %v46 = vld [vmem:[%s1 + $0x48] sm:$0xff]
  %v47 = vld [vmem:[%s1 + $0x50] sm:$0xff]
  %v48 = vld [vmem:[%s1 + $0x58] sm:$0xff]
  %v49 = vld [vmem:[%s1 + $0x60] sm:$0xff]
  %v50 = vld [vmem:[%s1 + $0x68] sm:$0xff]
  %v51 = vld [vmem:[%s1 + $0x70] sm:$0xff]
  %v52 = vld [vmem:[%s1 + $0x78] sm:$0xff]
  %v53 = vld [vmem:[%s3] sm:$0xf]
  %v55 = vlaneseq
  %v56 = vshrl.u32 %v55, 7
  %v57 = vsub.s32 0, %v56
  %v58 = vrot.slane %v53, %v57
  %v59 = vlaneseq
  %v60 = vshrl.u32 %v59, 7
  %v61 = vsub.s32 1, %v60
  %v62 = vrot.slane %v53, %v61
  %v63 = vlaneseq
  %v64 = vshrl.u32 %v63, 7
  %v65 = vsub.s32 2, %v64
  %v66 = vrot.slane %v53, %v65
  %v67 = vlaneseq
  %v68 = vshrl.u32 %v67, 7
  %v69 = vsub.s32 3, %v68
  %v70 = vrot.slane %v53, %v69
  %vm75 = vcmask 261120
  %v77 = vsel %vm75, %v29, 0
  %v80 = vsel %vm75, %v30, 0
  %v83 = vsel %vm75, %v31, 0
  %v86 = vsel %vm75, %v32, 0
  %v89 = vsel %vm75, %v33, 0
  %v92 = vsel %vm75, %v34, 0
  %v95 = vsel %vm75, %v35, 0
  %v98 = vsel %vm75, %v36, 0
  %100 = vmatprep.subr.mxu0 %v38
  %101 = vmatpush1.msra.mxu0 %v37
  %102 = vmatprep.subr.mxu0 %v42
  %103 = vmatpush1.msra.mxu0 %v41
  %104 = vmatprep.subr.mxu0 %v46
  %105 = vmatpush1.msra.mxu0 %v45
  %106 = vmatprep.subr.mxu0 %v50
  %107 = vmatpush1.msra.mxu0 %v49
  %108 = vmatprep.subr.mxu0 0.0
  %109 = vmatpush1.msra.mxu0 0.0
  %110 = vmatprep.subr.mxu0 0.0
  %111 = vmatpush1.msra.mxu0 0.0
  %112 = vmatprep.subr.mxu0 0.0
  %113 = vmatpush1.msra.mxu0 0.0
  %114 = vmatprep.subr.mxu0 0.0
  %115 = vmatpush1.msra.mxu0 0.0
  %116 = vmatprep.subr.mxu0 0.0
  %117 = vmatpush1.msra.mxu0 0.0
  %118 = vmatprep.subr.mxu0 0.0
  %119 = vmatpush1.msra.mxu0 0.0
  %120 = vmatprep.subr.mxu0 0.0
  %121 = vmatpush1.msra.mxu0 0.0
  %122 = vmatprep.subr.mxu0 0.0
  %123 = vmatpush1.msra.mxu0 0.0
  %124 = vmatprep.subr.mxu0 0.0
  %125 = vmatpush1.msra.mxu0 0.0
  %126 = vmatprep.subr.mxu0 0.0
  %127 = vmatpush1.msra.mxu0 0.0
  %128 = vmatprep.subr.mxu0 0.0
  %129 = vmatpush1.msra.mxu0 0.0
  %130 = vmatprep.subr.mxu0 0.0
  %131 = vmatpush1.msra.mxu0 0.0
  %132 = vmatprep.subr.mxu0 0.0
  %133 = vmatpush1.msra.mxu0 0.0
  %134 = vmatprep.subr.mxu0 0.0
  %135 = vmatpush1.msra.mxu0 0.0
  %136 = vmatprep.subr.mxu0 0.0
  %137 = vmatpush1.msra.mxu0 0.0
  %138 = vmatprep.subr.mxu0 0.0
  %139 = vmatpush1.msra.mxu0 0.0
  %140 = vmatprep.subr.mxu0 0.0
  %141 = vmatpush1.msra.mxu0 0.0
  %142 = vmatprep.subr.mxu0 0.0
  %143 = vmatpush1.msra.mxu0 0.0
  %144 = vmatprep.subr.mxu0 0.0
  %145 = vmatpush1.msra.mxu0 0.0
  %146 = vmatprep.subr.mxu0 0.0
  %147 = vmatpush1.msra.mxu0 0.0
  %148 = vmatprep.subr.mxu0 0.0
  %149 = vmatpush1.msra.mxu0 0.0
  %150 = vmatprep.subr.mxu0 0.0
  %151 = vmatpush1.msra.mxu0 0.0
  %152 = vmatprep.subr.mxu0 0.0
  %153 = vmatpush1.msra.mxu0 0.0
  %154 = vmatprep.subr.mxu0 0.0
  %155 = vmatpush1.msra.mxu0 0.0
  %156 = vmatprep.subr.mxu0 0.0
  %157 = vmatpush1.msra.mxu0 0.0
  %158 = vmatprep.subr.mxu0 0.0
  %159 = vmatpush1.msra.mxu0 0.0
  %160 = vmatprep.subr.mxu0 0.0
  %161 = vmatpush1.msra.mxu0 0.0
  %162 = vmatprep.subr.mxu0 0.0
  %163 = vmatpush1.msra.mxu0 0.0
  %164 = vmatprep.mubr.f32.mxu0 0.0
  %165 = vmatmul.mubr.f32.gmra.mrb[0].mxu0 %v77
  %v166 = vpop.f32.mrb[0].mxu0
  %v167 = vadd.f32 %v58, %v166
  %v168 = vpop.f32.mrb[0].mxu0
  %v169 = vadd.f32 %v62, %v168
  %170 = vmatprep.mubr.f32.mxu0 0.0
  %171 = vmatmul.mubr.f32.gmra.mrb[0].mxu0 %v80
  %v172 = vpop.f32.mrb[0].mxu0
  %v173 = vadd.f32 %v58, %v172
  %v174 = vpop.f32.mrb[0].mxu0
  %v175 = vadd.f32 %v62, %v174
  %176 = vmatprep.mubr.f32.mxu0 0.0
  %177 = vmatmul.mubr.f32.gmra.mrb[0].mxu0 %v83
  %v178 = vpop.f32.mrb[0].mxu0
  %v179 = vadd.f32 %v58, %v178
  %v180 = vpop.f32.mrb[0].mxu0
  %v181 = vadd.f32 %v62, %v180
  %182 = vmatprep.mubr.f32.mxu0 0.0
  %183 = vmatmul.mubr.f32.gmra.mrb[0].mxu0 %v86
  %v184 = vpop.f32.mrb[0].mxu0
  %v185 = vadd.f32 %v58, %v184
  %v186 = vpop.f32.mrb[0].mxu0
  %v187 = vadd.f32 %v62, %v186
  %188 = vmatprep.mubr.f32.mxu0 0.0
  %189 = vmatmul.mubr.f32.gmra.mrb[0].mxu0 %v89
  %v190 = vpop.f32.mrb[0].mxu0
  %v191 = vadd.f32 %v58, %v190
  %v192 = vpop.f32.mrb[0].mxu0
  %v193 = vadd.f32 %v62, %v192
  %194 = vmatprep.mubr.f32.mxu0 0.0
  %195 = vmatmul.mubr.f32.gmra.mrb[0].mxu0 %v92
  %v196 = vpop.f32.mrb[0].mxu0
  %v197 = vadd.f32 %v58, %v196
  %v198 = vpop.f32.mrb[0].mxu0
  %v199 = vadd.f32 %v62, %v198
  %200 = vmatprep.mubr.f32.mxu0 0.0
  %201 = vmatmul.mubr.f32.gmra.mrb[0].mxu0 %v95
  %v202 = vpop.f32.mrb[0].mxu0
  %v203 = vadd.f32 %v58, %v202
  %v204 = vpop.f32.mrb[0].mxu0
  %v205 = vadd.f32 %v62, %v204
  %206 = vmatprep.mubr.f32.mxu0 0.0
  %207 = vmatmul.mubr.f32.gmra.mrb[0].mxu0 %v98
  %v208 = vpop.f32.mrb[0].mxu0
  %v209 = vadd.f32 %v58, %v208
  %v210 = vpop.f32.mrb[0].mxu0
  %v211 = vadd.f32 %v62, %v210
  %212 = vdwg.mxu0
  %213 = vmatprep.subr.mxu0 %v40
  %214 = vmatpush1.msra.mxu0 %v39
  %215 = vmatprep.subr.mxu0 %v44
  %216 = vmatpush1.msra.mxu0 %v43
  %217 = vmatprep.subr.mxu0 %v48
  %218 = vmatpush1.msra.mxu0 %v47
  %219 = vmatprep.subr.mxu0 %v52
  %220 = vmatpush1.msra.mxu0 %v51
  %221 = vmatprep.subr.mxu0 0.0
  %222 = vmatpush1.msra.mxu0 0.0
  %223 = vmatprep.subr.mxu0 0.0
  %224 = vmatpush1.msra.mxu0 0.0
  %225 = vmatprep.subr.mxu0 0.0
  %226 = vmatpush1.msra.mxu0 0.0
  %227 = vmatprep.subr.mxu0 0.0
  %228 = vmatpush1.msra.mxu0 0.0
  %229 = vmatprep.subr.mxu0 0.0
  %230 = vmatpush1.msra.mxu0 0.0
  %231 = vmatprep.subr.mxu0 0.0
  %232 = vmatpush1.msra.mxu0 0.0
  %233 = vmatprep.subr.mxu0 0.0
  %234 = vmatpush1.msra.mxu0 0.0
  %235 = vmatprep.subr.mxu0 0.0
  %236 = vmatpush1.msra.mxu0 0.0
  %237 = vmatprep.subr.mxu0 0.0
  %238 = vmatpush1.msra.mxu0 0.0
  %239 = vmatprep.subr.mxu0 0.0
  %240 = vmatpush1.msra.mxu0 0.0
  %241 = vmatprep.subr.mxu0 0.0
  %242 = vmatpush1.msra.mxu0 0.0
  %243 = vmatprep.subr.mxu0 0.0
  %244 = vmatpush1.msra.mxu0 0.0
  %245 = vmatprep.subr.mxu0 0.0
  %246 = vmatpush1.msra.mxu0 0.0
  %247 = vmatprep.subr.mxu0 0.0
  %248 = vmatpush1.msra.mxu0 0.0
  %249 = vmatprep.subr.mxu0 0.0
  %250 = vmatpush1.msra.mxu0 0.0
  %251 = vmatprep.subr.mxu0 0.0
  %252 = vmatpush1.msra.mxu0 0.0
  %253 = vmatprep.subr.mxu0 0.0
  %254 = vmatpush1.msra.mxu0 0.0
  %255 = vmatprep.subr.mxu0 0.0
  %256 = vmatpush1.msra.mxu0 0.0
  %257 = vmatprep.subr.mxu0 0.0
  %258 = vmatpush1.msra.mxu0 0.0
  %259 = vmatprep.subr.mxu0 0.0
  %260 = vmatpush1.msra.mxu0 0.0
  %261 = vmatprep.subr.mxu0 0.0
  %262 = vmatpush1.msra.mxu0 0.0
  %263 = vmatprep.subr.mxu0 0.0
  %264 = vmatpush1.msra.mxu0 0.0
  %265 = vmatprep.subr.mxu0 0.0
  %266 = vmatpush1.msra.mxu0 0.0
  %267 = vmatprep.subr.mxu0 0.0
  %268 = vmatpush1.msra.mxu0 0.0
  %269 = vmatprep.subr.mxu0 0.0
  %270 = vmatpush1.msra.mxu0 0.0
  %271 = vmatprep.subr.mxu0 0.0
  %272 = vmatpush1.msra.mxu0 0.0
  %273 = vmatprep.subr.mxu0 0.0
  %274 = vmatpush1.msra.mxu0 0.0
  %275 = vmatprep.subr.mxu0 0.0
  %276 = vmatpush1.msra.mxu0 0.0
  %277 = vmatprep.mubr.f32.mxu0 0.0
  %278 = vmatmul.mubr.f32.gmra.mrb[0].mxu0 %v77
  %v279 = vpop.f32.mrb[0].mxu0
  %v280 = vadd.f32 %v66, %v279
  %v281 = vpop.f32.mrb[0].mxu0
  %v282 = vadd.f32 %v70, %v281
  %283 = vmatprep.mubr.f32.mxu0 0.0
  %284 = vmatmul.mubr.f32.gmra.mrb[0].mxu0 %v80
  %v285 = vpop.f32.mrb[0].mxu0
  %v286 = vadd.f32 %v66, %v285
  %v287 = vpop.f32.mrb[0].mxu0
  %v288 = vadd.f32 %v70, %v287
  %289 = vmatprep.mubr.f32.mxu0 0.0
  %290 = vmatmul.mubr.f32.gmra.mrb[0].mxu0 %v83
  %v291 = vpop.f32.mrb[0].mxu0
  %v292 = vadd.f32 %v66, %v291
  %v293 = vpop.f32.mrb[0].mxu0
  %v294 = vadd.f32 %v70, %v293
  %295 = vmatprep.mubr.f32.mxu0 0.0
  %296 = vmatmul.mubr.f32.gmra.mrb[0].mxu0 %v86
  %v297 = vpop.f32.mrb[0].mxu0
  %v298 = vadd.f32 %v66, %v297
  %v299 = vpop.f32.mrb[0].mxu0
  %v300 = vadd.f32 %v70, %v299
  %301 = vmatprep.mubr.f32.mxu0 0.0
  %302 = vmatmul.mubr.f32.gmra.mrb[0].mxu0 %v89
  %v303 = vpop.f32.mrb[0].mxu0
  %v304 = vadd.f32 %v66, %v303
  %v305 = vpop.f32.mrb[0].mxu0
  %v306 = vadd.f32 %v70, %v305
  %307 = vmatprep.mubr.f32.mxu0 0.0
  %308 = vmatmul.mubr.f32.gmra.mrb[0].mxu0 %v92
  %v309 = vpop.f32.mrb[0].mxu0
  %v310 = vadd.f32 %v66, %v309
  %v311 = vpop.f32.mrb[0].mxu0
  %v312 = vadd.f32 %v70, %v311
  %313 = vmatprep.mubr.f32.mxu0 0.0
  %314 = vmatmul.mubr.f32.gmra.mrb[0].mxu0 %v95
  %v315 = vpop.f32.mrb[0].mxu0
  %v316 = vadd.f32 %v66, %v315
  %v317 = vpop.f32.mrb[0].mxu0
  %v318 = vadd.f32 %v70, %v317
  %319 = vmatprep.mubr.f32.mxu0 0.0
  %320 = vmatmul.mubr.f32.gmra.mrb[0].mxu0 %v98
  %v321 = vpop.f32.mrb[0].mxu0
  %v322 = vadd.f32 %v66, %v321
  %v323 = vpop.f32.mrb[0].mxu0
  %v324 = vadd.f32 %v70, %v323
  %325 = vdwg.mxu0
  %326 = vst [vmem:[#allocation2] sm:$0xff] %v167
  %327 = vst [vmem:[#allocation2 + $0x8] sm:$0xff] %v169
  %328 = vst [vmem:[#allocation2 + $0x10] sm:$0xff] %v280
  %329 = vst [vmem:[#allocation2 + $0x18] sm:$0xff] %v282
  %330 = vst [vmem:[#allocation2 + $0x20] sm:$0xff] %v173
  %331 = vst [vmem:[#allocation2 + $0x28] sm:$0xff] %v175
  %332 = vst [vmem:[#allocation2 + $0x30] sm:$0xff] %v286
  %333 = vst [vmem:[#allocation2 + $0x38] sm:$0xff] %v288
  %334 = vst [vmem:[#allocation2 + $0x40] sm:$0xff] %v179
  %335 = vst [vmem:[#allocation2 + $0x48] sm:$0xff] %v181
  %336 = vst [vmem:[#allocation2 + $0x50] sm:$0xff] %v292
  %337 = vst [vmem:[#allocation2 + $0x58] sm:$0xff] %v294
  %338 = vst [vmem:[#allocation2 + $0x60] sm:$0xff] %v185
  %339 = vst [vmem:[#allocation2 + $0x68] sm:$0xff] %v187
  %340 = vst [vmem:[#allocation2 + $0x70] sm:$0xff] %v298
  %341 = vst [vmem:[#allocation2 + $0x78] sm:$0xff] %v300
  %342 = vst [vmem:[#allocation2 + $0x80] sm:$0xff] %v191
  %343 = vst [vmem:[#allocation2 + $0x88] sm:$0xff] %v193
  %344 = vst [vmem:[#allocation2 + $0x90] sm:$0xff] %v304
  %345 = vst [vmem:[#allocation2 + $0x98] sm:$0xff] %v306
  %346 = vst [vmem:[#allocation2 + $0xa0] sm:$0xff] %v197
  %347 = vst [vmem:[#allocation2 + $0xa8] sm:$0xff] %v199
  %348 = vst [vmem:[#allocation2 + $0xb0] sm:$0xff] %v310
  %349 = vst [vmem:[#allocation2 + $0xb8] sm:$0xff] %v312
  %350 = vst [vmem:[#allocation2 + $0xc0] sm:$0xff] %v203
  %351 = vst [vmem:[#allocation2 + $0xc8] sm:$0xff] %v205
  %352 = vst [vmem:[#allocation2 + $0xd0] sm:$0xff] %v316
  %353 = vst [vmem:[#allocation2 + $0xd8] sm:$0xff] %v318
  %354 = vst [vmem:[#allocation2 + $0xe0] sm:$0xff] %v209
  %355 = vst [vmem:[#allocation2 + $0xe8] sm:$0xff] %v211
  %356 = vst [vmem:[#allocation2 + $0xf0] sm:$0xff] %v322
  %357 = vst [vmem:[#allocation2 + $0xf8] sm:$0xff] %v324
  %v358 = vld [vmem:[%s5] sm:$0xf]
  %s359 = smul.u32 0, 4
  %s360 = smul.addr %s359, 8
  %s361 = scalar_lea.vmem [#allocation2], %s360
  %v362 = vld [vmem:[%s361] sm:$0xff]
  %v363 = vld [vmem:[%s361 + $0x8] sm:$0xff]
  %v364 = vld [vmem:[%s361 + $0x10] sm:$0xff]
  %v365 = vld [vmem:[%s361 + $0x18] sm:$0xff]
  %v366 = vld [vmem:[%s2] sm:$0xff]
  %v367 = vld [vmem:[%s2 + $0x8] sm:$0xff]
  %v368 = vld [vmem:[%s2 + $0x10] sm:$0xff]
  %v369 = vld [vmem:[%s2 + $0x18] sm:$0xff]
  %v370 = vld [vmem:[%s2 + $0x20] sm:$0xff]
  %v371 = vld [vmem:[%s2 + $0x28] sm:$0xff]
  %v372 = vld [vmem:[%s2 + $0x30] sm:$0xff]
  %v373 = vld [vmem:[%s2 + $0x38] sm:$0xff]
  %v374 = vld [vmem:[%s2 + $0x40] sm:$0xff]
  %v375 = vld [vmem:[%s2 + $0x48] sm:$0xff]
  %v376 = vld [vmem:[%s2 + $0x50] sm:$0xff]
  %v377 = vld [vmem:[%s2 + $0x58] sm:$0xff]
  %v378 = vld [vmem:[%s2 + $0x60] sm:$0xff]
  %v379 = vld [vmem:[%s2 + $0x68] sm:$0xff]
  %v380 = vld [vmem:[%s2 + $0x70] sm:$0xff]
  %v381 = vld [vmem:[%s2 + $0x78] sm:$0xff]
  %v382 = vld [vmem:[%s2 + $0x80] sm:$0xff]
  %v383 = vld [vmem:[%s2 + $0x88] sm:$0xff]
  %v384 = vld [vmem:[%s2 + $0x90] sm:$0xff]
  %v385 = vld [vmem:[%s2 + $0x98] sm:$0xff]
  %v386 = vld [vmem:[%s2 + $0xa0] sm:$0xff]
  %v387 = vld [vmem:[%s2 + $0xa8] sm:$0xff]
  %v388 = vld [vmem:[%s2 + $0xb0] sm:$0xff]
  %v389 = vld [vmem:[%s2 + $0xb8] sm:$0xff]
  %v390 = vld [vmem:[%s2 + $0xc0] sm:$0xff]
  %v391 = vld [vmem:[%s2 + $0xc8] sm:$0xff]
  %v392 = vld [vmem:[%s2 + $0xd0] sm:$0xff]
  %v393 = vld [vmem:[%s2 + $0xd8] sm:$0xff]
  %v394 = vld [vmem:[%s2 + $0xe0] sm:$0xff]
  %v395 = vld [vmem:[%s2 + $0xe8] sm:$0xff]
  %v396 = vld [vmem:[%s2 + $0xf0] sm:$0xff]
  %v397 = vld [vmem:[%s2 + $0xf8] sm:$0xff]
  %v398 = vld [vmem:[%s2 + $0x100] sm:$0xff]
  %v399 = vld [vmem:[%s2 + $0x108] sm:$0xff]
  %v400 = vld [vmem:[%s2 + $0x110] sm:$0xff]
  %v401 = vld [vmem:[%s2 + $0x118] sm:$0xff]
  %v402 = vld [vmem:[%s2 + $0x120] sm:$0xff]
  %v403 = vld [vmem:[%s2 + $0x128] sm:$0xff]
  %v404 = vld [vmem:[%s2 + $0x130] sm:$0xff]
  %v405 = vld [vmem:[%s2 + $0x138] sm:$0xff]
  %v406 = vld [vmem:[%s2 + $0x140] sm:$0xff]
  %v407 = vld [vmem:[%s2 + $0x148] sm:$0xff]
  %v408 = vld [vmem:[%s2 + $0x150] sm:$0xff]
  %v409 = vld [vmem:[%s2 + $0x158] sm:$0xff]
  %v410 = vld [vmem:[%s2 + $0x160] sm:$0xff]
  %v411 = vld [vmem:[%s2 + $0x168] sm:$0xff]
  %v412 = vld [vmem:[%s2 + $0x170] sm:$0xff]
  %v413 = vld [vmem:[%s2 + $0x178] sm:$0xff]
  %v414 = vld [vmem:[%s2 + $0x180] sm:$0xff]
  %v415 = vld [vmem:[%s2 + $0x188] sm:$0xff]
  %v416 = vld [vmem:[%s2 + $0x190] sm:$0xff]
  %v417 = vld [vmem:[%s2 + $0x198] sm:$0xff]
  %v418 = vld [vmem:[%s2 + $0x1a0] sm:$0xff]
  %v419 = vld [vmem:[%s2 + $0x1a8] sm:$0xff]
  %v420 = vld [vmem:[%s2 + $0x1b0] sm:$0xff]
  %v421 = vld [vmem:[%s2 + $0x1b8] sm:$0xff]
  %v422 = vld [vmem:[%s2 + $0x1c0] sm:$0xff]
  %v423 = vld [vmem:[%s2 + $0x1c8] sm:$0xff]
  %v424 = vld [vmem:[%s2 + $0x1d0] sm:$0xff]
  %v425 = vld [vmem:[%s2 + $0x1d8] sm:$0xff]
  %v426 = vld [vmem:[%s2 + $0x1e0] sm:$0xff]
  %v427 = vld [vmem:[%s2 + $0x1e8] sm:$0xff]
  %v428 = vld [vmem:[%s2 + $0x1f0] sm:$0xff]
  %v429 = vld [vmem:[%s2 + $0x1f8] sm:$0xff]
  %430 = vmatprep.subr.mxu0 %v367
  %431 = vmatpush1.msra.mxu0 %v366
  %432 = vmatprep.subr.mxu0 %v371
  %433 = vmatpush1.msra.mxu0 %v370
  %434 = vmatprep.subr.mxu0 %v375
  %435 = vmatpush1.msra.mxu0 %v374
  %436 = vmatprep.subr.mxu0 %v379
  %437 = vmatpush1.msra.mxu0 %v378
  %438 = vmatprep.subr.mxu0 %v383
  %439 = vmatpush1.msra.mxu0 %v382
  %440 = vmatprep.subr.mxu0 %v387
  %441 = vmatpush1.msra.mxu0 %v386
  %442 = vmatprep.subr.mxu0 %v391
  %443 = vmatpush1.msra.mxu0 %v390
  %444 = vmatprep.subr.mxu0 %v395
  %445 = vmatpush1.msra.mxu0 %v394
  %446 = vmatprep.subr.mxu0 %v399
  %447 = vmatpush1.msra.mxu0 %v398
  %448 = vmatprep.subr.mxu0 %v403
  %449 = vmatpush1.msra.mxu0 %v402
  %450 = vmatprep.subr.mxu0 %v407
  %451 = vmatpush1.msra.mxu0 %v406
  %452 = vmatprep.subr.mxu0 %v411
  %453 = vmatpush1.msra.mxu0 %v410
  %454 = vmatprep.subr.mxu0 %v415
  %455 = vmatpush1.msra.mxu0 %v414
  %456 = vmatprep.subr.mxu0 %v419
  %457 = vmatpush1.msra.mxu0 %v418
  %458 = vmatprep.subr.mxu0 %v423
  %459 = vmatpush1.msra.mxu0 %v422
  %460 = vmatprep.subr.mxu0 %v427
  %461 = vmatpush1.msra.mxu0 %v426
  %462 = vmatprep.subr.mxu0 0.0
  %463 = vmatpush1.msra.mxu0 0.0
  %464 = vmatprep.subr.mxu0 0.0
  %465 = vmatpush1.msra.mxu0 0.0
  %466 = vmatprep.subr.mxu0 0.0
  %467 = vmatpush1.msra.mxu0 0.0
  %468 = vmatprep.subr.mxu0 0.0
  %469 = vmatpush1.msra.mxu0 0.0
  %470 = vmatprep.subr.mxu0 0.0
  %471 = vmatpush1.msra.mxu0 0.0
  %472 = vmatprep.subr.mxu0 0.0
  %473 = vmatpush1.msra.mxu0 0.0
  %474 = vmatprep.subr.mxu0 0.0
  %475 = vmatpush1.msra.mxu0 0.0
  %476 = vmatprep.subr.mxu0 0.0
  %477 = vmatpush1.msra.mxu0 0.0
  %478 = vmatprep.subr.mxu0 0.0
  %479 = vmatpush1.msra.mxu0 0.0
  %480 = vmatprep.subr.mxu0 0.0
  %481 = vmatpush1.msra.mxu0 0.0
  %482 = vmatprep.subr.mxu0 0.0
  %483 = vmatpush1.msra.mxu0 0.0
  %484 = vmatprep.subr.mxu0 0.0
  %485 = vmatpush1.msra.mxu0 0.0
  %486 = vmatprep.subr.mxu0 0.0
  %487 = vmatpush1.msra.mxu0 0.0
  %488 = vmatprep.subr.mxu0 0.0
  %489 = vmatpush1.msra.mxu0 0.0
  %490 = vmatprep.subr.mxu0 0.0
  %491 = vmatpush1.msra.mxu0 0.0
  %492 = vmatprep.subr.mxu0 0.0
  %493 = vmatpush1.msra.mxu0 0.0
  %494 = vmatprep.mubr.f32.mxu0 0.0
  %495 = vmatmul.mubr.f32.gmra.mrb[0].mxu0 0.0
  %v496 = vpop.f32.mrb[0].mxu0
  %v497 = vadd.f32 0.0, %v496
  %v498 = vpop.f32.mrb[0].mxu0
  %v499 = vadd.f32 0.0, %v498
  %500 = vdwg.mxu0
  %501 = vmatprep.subr.mxu0 %v369
  %502 = vmatpush1.msra.mxu0 %v368
  %503 = vmatprep.subr.mxu0 %v373
  %504 = vmatpush1.msra.mxu0 %v372
  %505 = vmatprep.subr.mxu0 %v377
  %506 = vmatpush1.msra.mxu0 %v376
  %507 = vmatprep.subr.mxu0 %v381
  %508 = vmatpush1.msra.mxu0 %v380
  %509 = vmatprep.subr.mxu0 %v385
  %510 = vmatpush1.msra.mxu0 %v384
  %511 = vmatprep.subr.mxu0 %v389
  %512 = vmatpush1.msra.mxu0 %v388
  %513 = vmatprep.subr.mxu0 %v393
  %514 = vmatpush1.msra.mxu0 %v392
  %515 = vmatprep.subr.mxu0 %v397
  %516 = vmatpush1.msra.mxu0 %v396
  %517 = vmatprep.subr.mxu0 %v401
  %518 = vmatpush1.msra.mxu0 %v400
  %519 = vmatprep.subr.mxu0 %v405
  %520 = vmatpush1.msra.mxu0 %v404
  %521 = vmatprep.subr.mxu0 %v409
  %522 = vmatpush1.msra.mxu0 %v408
  %523 = vmatprep.subr.mxu0 %v413
  %524 = vmatpush1.msra.mxu0 %v412
  %525 = vmatprep.subr.mxu0 %v417
  %526 = vmatpush1.msra.mxu0 %v416
  %527 = vmatprep.subr.mxu0 %v421
  %528 = vmatpush1.msra.mxu0 %v420
  %529 = vmatprep.subr.mxu0 %v425
  %530 = vmatpush1.msra.mxu0 %v424
  %531 = vmatprep.subr.mxu0 %v429
  %532 = vmatpush1.msra.mxu0 %v428
  %533 = vmatprep.subr.mxu0 0.0
  %534 = vmatpush1.msra.mxu0 0.0
  %535 = vmatprep.subr.mxu0 0.0
  %536 = vmatpush1.msra.mxu0 0.0
  %537 = vmatprep.subr.mxu0 0.0
  %538 = vmatpush1.msra.mxu0 0.0
  %539 = vmatprep.subr.mxu0 0.0
  %540 = vmatpush1.msra.mxu0 0.0
  %541 = vmatprep.subr.mxu0 0.0
  %542 = vmatpush1.msra.mxu0 0.0
  %543 = vmatprep.subr.mxu0 0.0
  %544 = vmatpush1.msra.mxu0 0.0
  %545 = vmatprep.subr.mxu0 0.0
  %546 = vmatpush1.msra.mxu0 0.0
  %547 = vmatprep.subr.mxu0 0.0
  %548 = vmatpush1.msra.mxu0 0.0
  %549 = vmatprep.subr.mxu0 0.0
  %550 = vmatpush1.msra.mxu0 0.0
  %551 = vmatprep.subr.mxu0 0.0
  %552 = vmatpush1.msra.mxu0 0.0
  %553 = vmatprep.subr.mxu0 0.0
  %554 = vmatpush1.msra.mxu0 0.0
  %555 = vmatprep.subr.mxu0 0.0
  %556 = vmatpush1.msra.mxu0 0.0
  %557 = vmatprep.subr.mxu0 0.0
  %558 = vmatpush1.msra.mxu0 0.0
  %559 = vmatprep.subr.mxu0 0.0
  %560 = vmatpush1.msra.mxu0 0.0
  %561 = vmatprep.subr.mxu0 0.0
  %562 = vmatpush1.msra.mxu0 0.0
  %563 = vmatprep.subr.mxu0 0.0
  %564 = vmatpush1.msra.mxu0 0.0
  %565 = vmatprep.mubr.f32.mxu0 0.0
  %566 = vmatmul.mubr.f32.gmra.mrb[0].mxu0 0.0
  %v567 = vpop.f32.mrb[0].mxu0
  %v568 = vadd.f32 0.0, %v567
  %v569 = vpop.f32.mrb[0].mxu0
  %v570 = vadd.f32 0.0, %v569
  %571 = vdwg.mxu0
  %v572 = vadd.f32 %v362, %v497
  %v573 = vadd.f32 %v363, %v499
  %v574 = vadd.f32 %v364, %v568
  %v575 = vadd.f32 %v365, %v570
  %v576 = vxor.u32 %v572, 2147483648
  %v577 = vmul.f32 %v576, 1.442695
  %v578 = vpow.pop %v577
  %v579 = vadd.f32 %v578, 1.0
  %v580 = vrcp.pop %v579
  %v581 = vmul.f32 1.0, %v580
  %v582 = vxor.u32 %v573, 2147483648
  %v583 = vmul.f32 %v582, 1.442695
  %v584 = vpow.pop %v583
  %v585 = vadd.f32 %v584, 1.0
  %v586 = vrcp.pop %v585
  %v587 = vmul.f32 1.0, %v586
  %v588 = vtanh.pop %v574
  %v589 = vxor.u32 %v575, 2147483648
  %v590 = vmul.f32 %v589, 1.442695
  %v591 = vpow.pop %v590
  %v592 = vadd.f32 %v591, 1.0
  %v593 = vrcp.pop %v592
  %v594 = vmul.f32 1.0, %v593
  %v595 = vmul.f32 %v587, 0.0
  %v596 = vmul.f32 %v581, %v588
  %v597 = vadd.f32 %v595, %v596
  %v598 = vtanh.pop %v597
  %v599 = vmul.f32 %v594, %v598
  %v600 = vld [vmem:[%s4] sm:$0xff]
  %v601 = vld [vmem:[%s4 + $0x8] sm:$0xff]
  %v602 = vld [vmem:[%s4 + $0x10] sm:$0xff]
  %v603 = vld [vmem:[%s4 + $0x18] sm:$0xff]
  %v604 = vld [vmem:[%s4 + $0x20] sm:$0xff]
  %v605 = vld [vmem:[%s4 + $0x28] sm:$0xff]
  %v606 = vld [vmem:[%s4 + $0x30] sm:$0xff]
  %v607 = vld [vmem:[%s4 + $0x38] sm:$0xff]
  %v608 = vld [vmem:[%s4 + $0x40] sm:$0xff]
  %v609 = vld [vmem:[%s4 + $0x48] sm:$0xff]
  %v610 = vld [vmem:[%s4 + $0x50] sm:$0xff]
  %v611 = vld [vmem:[%s4 + $0x58] sm:$0xff]
  %v612 = vld [vmem:[%s4 + $0x60] sm:$0xff]
  %v613 = vld [vmem:[%s4 + $0x68] sm:$0xff]
  %v614 = vld [vmem:[%s4 + $0x70] sm:$0xff]
  %v615 = vld [vmem:[%s4 + $0x78] sm:$0xff]
  %v616 = vld [vmem:[%s4 + $0x80] sm:$0xff]
  %v617 = vld [vmem:[%s4 + $0x88] sm:$0xff]
  %v618 = vld [vmem:[%s4 + $0x90] sm:$0xff]
  %v619 = vld [vmem:[%s4 + $0x98] sm:$0xff]
  %v620 = vld [vmem:[%s4 + $0xa0] sm:$0xff]
  %v621 = vld [vmem:[%s4 + $0xa8] sm:$0xff]
  %v622 = vld [vmem:[%s4 + $0xb0] sm:$0xff]
  %v623 = vld [vmem:[%s4 + $0xb8] sm:$0xff]
  %v624 = vld [vmem:[%s4 + $0xc0] sm:$0xff]
  %v625 = vld [vmem:[%s4 + $0xc8] sm:$0xff]
  %v626 = vld [vmem:[%s4 + $0xd0] sm:$0xff]
  %v627 = vld [vmem:[%s4 + $0xd8] sm:$0xff]
  %v628 = vld [vmem:[%s4 + $0xe0] sm:$0xff]
  %v629 = vld [vmem:[%s4 + $0xe8] sm:$0xff]
  %v630 = vld [vmem:[%s4 + $0xf0] sm:$0xff]
  %v631 = vld [vmem:[%s4 + $0xf8] sm:$0xff]
  %v632 = vld [vmem:[%s4 + $0x100] sm:$0xff]
  %v633 = vld [vmem:[%s4 + $0x108] sm:$0xff]
  %v634 = vld [vmem:[%s4 + $0x110] sm:$0xff]
  %v635 = vld [vmem:[%s4 + $0x118] sm:$0xff]
  %v636 = vld [vmem:[%s4 + $0x120] sm:$0xff]
  %v637 = vld [vmem:[%s4 + $0x128] sm:$0xff]
  %v638 = vld [vmem:[%s4 + $0x130] sm:$0xff]
  %v639 = vld [vmem:[%s4 + $0x138] sm:$0xff]
  %v640 = vld [vmem:[%s4 + $0x140] sm:$0xff]
  %v641 = vld [vmem:[%s4 + $0x148] sm:$0xff]
  %v642 = vld [vmem:[%s4 + $0x150] sm:$0xff]
  %v643 = vld [vmem:[%s4 + $0x158] sm:$0xff]
  %v644 = vld [vmem:[%s4 + $0x160] sm:$0xff]
  %v645 = vld [vmem:[%s4 + $0x168] sm:$0xff]
  %v646 = vld [vmem:[%s4 + $0x170] sm:$0xff]
  %v647 = vld [vmem:[%s4 + $0x178] sm:$0xff]
  %v648 = vld [vmem:[%s4 + $0x180] sm:$0xff]
  %v649 = vld [vmem:[%s4 + $0x188] sm:$0xff]
  %v650 = vld [vmem:[%s4 + $0x190] sm:$0xff]
  %v651 = vld [vmem:[%s4 + $0x198] sm:$0xff]
  %v652 = vld [vmem:[%s4 + $0x1a0] sm:$0xff]
  %v653 = vld [vmem:[%s4 + $0x1a8] sm:$0xff]
  %v654 = vld [vmem:[%s4 + $0x1b0] sm:$0xff]
  %v655 = vld [vmem:[%s4 + $0x1b8] sm:$0xff]
  %v656 = vld [vmem:[%s4 + $0x1c0] sm:$0xff]
  %v657 = vld [vmem:[%s4 + $0x1c8] sm:$0xff]
  %v658 = vld [vmem:[%s4 + $0x1d0] sm:$0xff]
  %v659 = vld [vmem:[%s4 + $0x1d8] sm:$0xff]
  %v660 = vld [vmem:[%s4 + $0x1e0] sm:$0xff]
  %v661 = vld [vmem:[%s4 + $0x1e8] sm:$0xff]
  %v662 = vld [vmem:[%s4 + $0x1f0] sm:$0xff]
  %v663 = vld [vmem:[%s4 + $0x1f8] sm:$0xff]
  %v664 = vld [vmem:[%s4 + $0x200] sm:$0xff]
  %v665 = vld [vmem:[%s4 + $0x208] sm:$0xff]
  %v666 = vld [vmem:[%s4 + $0x210] sm:$0xff]
  %v667 = vld [vmem:[%s4 + $0x218] sm:$0xff]
  %v668 = vld [vmem:[%s4 + $0x220] sm:$0xff]
  %v669 = vld [vmem:[%s4 + $0x228] sm:$0xff]
  %v670 = vld [vmem:[%s4 + $0x230] sm:$0xff]
  %v671 = vld [vmem:[%s4 + $0x238] sm:$0xff]
  %v672 = vld [vmem:[%s4 + $0x240] sm:$0xff]
  %v673 = vld [vmem:[%s4 + $0x248] sm:$0xff]
  %v674 = vld [vmem:[%s4 + $0x250] sm:$0xff]
  %v675 = vld [vmem:[%s4 + $0x258] sm:$0xff]
  %v676 = vld [vmem:[%s4 + $0x260] sm:$0xff]
  %v677 = vld [vmem:[%s4 + $0x268] sm:$0xff]
  %v678 = vld [vmem:[%s4 + $0x270] sm:$0xff]
  %v679 = vld [vmem:[%s4 + $0x278] sm:$0xff]
  %v680 = vld [vmem:[%s4 + $0x280] sm:$0xff]
  %v681 = vld [vmem:[%s4 + $0x288] sm:$0xff]
  %v682 = vld [vmem:[%s4 + $0x290] sm:$0xff]
  %v683 = vld [vmem:[%s4 + $0x298] sm:$0xff]
  %v684 = vld [vmem:[%s4 + $0x2a0] sm:$0xff]
  %v685 = vld [vmem:[%s4 + $0x2a8] sm:$0xff]
  %v686 = vld [vmem:[%s4 + $0x2b0] sm:$0xff]
  %v687 = vld [vmem:[%s4 + $0x2b8] sm:$0xff]
  %v688 = vld [vmem:[%s4 + $0x2c0] sm:$0xff]
  %v689 = vld [vmem:[%s4 + $0x2c8] sm:$0xff]
  %v690 = vld [vmem:[%s4 + $0x2d0] sm:$0xff]
  %v691 = vld [vmem:[%s4 + $0x2d8] sm:$0xff]
  %v692 = vld [vmem:[%s4 + $0x2e0] sm:$0xff]
  %v693 = vld [vmem:[%s4 + $0x2e8] sm:$0xff]
  %v694 = vld [vmem:[%s4 + $0x2f0] sm:$0xff]
  %v695 = vld [vmem:[%s4 + $0x2f8] sm:$0xff]
  %v696 = vld [vmem:[%s4 + $0x300] sm:$0xff]
  %v697 = vld [vmem:[%s4 + $0x308] sm:$0xff]
  %v698 = vld [vmem:[%s4 + $0x310] sm:$0xff]
  %v699 = vld [vmem:[%s4 + $0x318] sm:$0xff]
  %v700 = vld [vmem:[%s4 + $0x320] sm:$0xff]
  %v701 = vld [vmem:[%s4 + $0x328] sm:$0xff]
  %v702 = vld [vmem:[%s4 + $0x330] sm:$0xff]
  %v703 = vld [vmem:[%s4 + $0x338] sm:$0xff]
  %v704 = vld [vmem:[%s4 + $0x340] sm:$0xff]
  %v705 = vld [vmem:[%s4 + $0x348] sm:$0xff]
  %v706 = vld [vmem:[%s4 + $0x350] sm:$0xff]
  %v707 = vld [vmem:[%s4 + $0x358] sm:$0xff]
  %v708 = vld [vmem:[%s4 + $0x360] sm:$0xff]
  %v709 = vld [vmem:[%s4 + $0x368] sm:$0xff]
  %v710 = vld [vmem:[%s4 + $0x370] sm:$0xff]
  %v711 = vld [vmem:[%s4 + $0x378] sm:$0xff]
  %v712 = vld [vmem:[%s4 + $0x380] sm:$0xff]
  %v713 = vld [vmem:[%s4 + $0x388] sm:$0xff]
  %v714 = vld [vmem:[%s4 + $0x390] sm:$0xff]
  %v715 = vld [vmem:[%s4 + $0x398] sm:$0xff]
  %v716 = vld [vmem:[%s4 + $0x3a0] sm:$0xff]
  %v717 = vld [vmem:[%s4 + $0x3a8] sm:$0xff]
  %v718 = vld [vmem:[%s4 + $0x3b0] sm:$0xff]
  %v719 = vld [vmem:[%s4 + $0x3b8] sm:$0xff]
  %v720 = vld [vmem:[%s4 + $0x3c0] sm:$0xff]
  %v721 = vld [vmem:[%s4 + $0x3c8] sm:$0xff]
  %v722 = vld [vmem:[%s4 + $0x3d0] sm:$0xff]
  %v723 = vld [vmem:[%s4 + $0x3d8] sm:$0xff]
  %v724 = vld [vmem:[%s4 + $0x3e0] sm:$0xff]
  %v725 = vld [vmem:[%s4 + $0x3e8] sm:$0xff]
  %v726 = vld [vmem:[%s4 + $0x3f0] sm:$0xff]
  %v727 = vld [vmem:[%s4 + $0x3f8] sm:$0xff]
  %v729 = vlaneseq
  %v730 = vshrl.u32 %v729, 7
  %v731 = vsub.s32 0, %v730
  %v732 = vrot.slane %v358, %v731
  %v733 = vlaneseq
  %v734 = vshrl.u32 %v733, 7
  %v735 = vsub.s32 1, %v734
  %v736 = vrot.slane %v358, %v735
  %v737 = vlaneseq
  %v738 = vshrl.u32 %v737, 7
  %v739 = vsub.s32 2, %v738
  %v740 = vrot.slane %v358, %v739
  %v741 = vlaneseq
  %v742 = vshrl.u32 %v741, 7
  %v743 = vsub.s32 3, %v742
  %v744 = vrot.slane %v358, %v743
  %749 = vmatprep.subr.mxu0 %v601
  %750 = vmatpush1.msra.mxu0 %v600
  %751 = vmatprep.subr.mxu0 %v605
  %752 = vmatpush1.msra.mxu0 %v604
  %753 = vmatprep.subr.mxu0 %v609
  %754 = vmatpush1.msra.mxu0 %v608
  %755 = vmatprep.subr.mxu0 %v613
  %756 = vmatpush1.msra.mxu0 %v612
  %757 = vmatprep.subr.mxu0 %v617
  %758 = vmatpush1.msra.mxu0 %v616
  %759 = vmatprep.subr.mxu0 %v621
  %760 = vmatpush1.msra.mxu0 %v620
  %761 = vmatprep.subr.mxu0 %v625
  %762 = vmatpush1.msra.mxu0 %v624
  %763 = vmatprep.subr.mxu0 %v629
  %764 = vmatpush1.msra.mxu0 %v628
  %765 = vmatprep.subr.mxu0 %v633
  %766 = vmatpush1.msra.mxu0 %v632
  %767 = vmatprep.subr.mxu0 %v637
  %768 = vmatpush1.msra.mxu0 %v636
  %769 = vmatprep.subr.mxu0 %v641
  %770 = vmatpush1.msra.mxu0 %v640
  %771 = vmatprep.subr.mxu0 %v645
  %772 = vmatpush1.msra.mxu0 %v644
  %773 = vmatprep.subr.mxu0 %v649
  %774 = vmatpush1.msra.mxu0 %v648
  %775 = vmatprep.subr.mxu0 %v653
  %776 = vmatpush1.msra.mxu0 %v652
  %777 = vmatprep.subr.mxu0 %v657
  %778 = vmatpush1.msra.mxu0 %v656
  %779 = vmatprep.subr.mxu0 %v661
  %780 = vmatpush1.msra.mxu0 %v660
  %781 = vmatprep.subr.mxu0 %v665
  %782 = vmatpush1.msra.mxu0 %v664
  %783 = vmatprep.subr.mxu0 %v669
  %784 = vmatpush1.msra.mxu0 %v668
  %785 = vmatprep.subr.mxu0 %v673
  %786 = vmatpush1.msra.mxu0 %v672
  %787 = vmatprep.subr.mxu0 %v677
  %788 = vmatpush1.msra.mxu0 %v676
  %789 = vmatprep.subr.mxu0 %v681
  %790 = vmatpush1.msra.mxu0 %v680
  %791 = vmatprep.subr.mxu0 %v685
  %792 = vmatpush1.msra.mxu0 %v684
  %793 = vmatprep.subr.mxu0 %v689
  %794 = vmatpush1.msra.mxu0 %v688
  %795 = vmatprep.subr.mxu0 %v693
  %796 = vmatpush1.msra.mxu0 %v692
  %797 = vmatprep.subr.mxu0 %v697
  %798 = vmatpush1.msra.mxu0 %v696
  %799 = vmatprep.subr.mxu0 %v701
  %800 = vmatpush1.msra.mxu0 %v700
  %801 = vmatprep.subr.mxu0 %v705
  %802 = vmatpush1.msra.mxu0 %v704
  %803 = vmatprep.subr.mxu0 %v709
  %804 = vmatpush1.msra.mxu0 %v708
  %805 = vmatprep.subr.mxu0 %v713
  %806 = vmatpush1.msra.mxu0 %v712
  %807 = vmatprep.subr.mxu0 %v717
  %808 = vmatpush1.msra.mxu0 %v716
  %809 = vmatprep.subr.mxu0 %v721
  %810 = vmatpush1.msra.mxu0 %v720
  %811 = vmatprep.subr.mxu0 %v725
  %812 = vmatpush1.msra.mxu0 %v724
  %813 = vmatprep.mubr.f32.mxu0 0.0
  %814 = vmatmul.mubr.f32.gmra.mrb[0].mxu0 %v599
  %v815 = vpop.f32.mrb[0].mxu0
  %v816 = vadd.f32 %v732, %v815
  %v817 = vpop.f32.mrb[0].mxu0
  %v818 = vadd.f32 %v736, %v817
  %819 = vdwg.mxu0
  %820 = vmatprep.subr.mxu0 %v603
  %821 = vmatpush1.msra.mxu0 %v602
  %822 = vmatprep.subr.mxu0 %v607
  %823 = vmatpush1.msra.mxu0 %v606
  %824 = vmatprep.subr.mxu0 %v611
  %825 = vmatpush1.msra.mxu0 %v610
  %826 = vmatprep.subr.mxu0 %v615
  %827 = vmatpush1.msra.mxu0 %v614
  %828 = vmatprep.subr.mxu0 %v619
  %829 = vmatpush1.msra.mxu0 %v618
  %830 = vmatprep.subr.mxu0 %v623
  %831 = vmatpush1.msra.mxu0 %v622
  %832 = vmatprep.subr.mxu0 %v627
  %833 = vmatpush1.msra.mxu0 %v626
  %834 = vmatprep.subr.mxu0 %v631
  %835 = vmatpush1.msra.mxu0 %v630
  %836 = vmatprep.subr.mxu0 %v635
  %837 = vmatpush1.msra.mxu0 %v634
  %838 = vmatprep.subr.mxu0 %v639
  %839 = vmatpush1.msra.mxu0 %v638
  %840 = vmatprep.subr.mxu0 %v643
  %841 = vmatpush1.msra.mxu0 %v642
  %842 = vmatprep.subr.mxu0 %v647
  %843 = vmatpush1.msra.mxu0 %v646
  %844 = vmatprep.subr.mxu0 %v651
  %845 = vmatpush1.msra.mxu0 %v650
  %846 = vmatprep.subr.mxu0 %v655
  %847 = vmatpush1.msra.mxu0 %v654
  %848 = vmatprep.subr.mxu0 %v659
  %849 = vmatpush1.msra.mxu0 %v658
  %850 = vmatprep.subr.mxu0 %v663
  %851 = vmatpush1.msra.mxu0 %v662
  %852 = vmatprep.subr.mxu0 %v667
  %853 = vmatpush1.msra.mxu0 %v666
  %854 = vmatprep.subr.mxu0 %v671
  %855 = vmatpush1.msra.mxu0 %v670
  %856 = vmatprep.subr.mxu0 %v675
  %857 = vmatpush1.msra.mxu0 %v674
  %858 = vmatprep.subr.mxu0 %v679
  %859 = vmatpush1.msra.mxu0 %v678
  %860 = vmatprep.subr.mxu0 %v683
  %861 = vmatpush1.msra.mxu0 %v682
  %862 = vmatprep.subr.mxu0 %v687
  %863 = vmatpush1.msra.mxu0 %v686
  %864 = vmatprep.subr.mxu0 %v691
  %865 = vmatpush1.msra.mxu0 %v690
  %866 = vmatprep.subr.mxu0 %v695
  %867 = vmatpush1.msra.mxu0 %v694
  %868 = vmatprep.subr.mxu0 %v699
  %869 = vmatpush1.msra.mxu0 %v698
  %870 = vmatprep.subr.mxu0 %v703
  %871 = vmatpush1.msra.mxu0 %v702
  %872 = vmatprep.subr.mxu0 %v707
  %873 = vmatpush1.msra.mxu0 %v706
  %874 = vmatprep.subr.mxu0 %v711
  %875 = vmatpush1.msra.mxu0 %v710
  %876 = vmatprep.subr.mxu0 %v715
  %877 = vmatpush1.msra.mxu0 %v714
  %878 = vmatprep.subr.mxu0 %v719
  %879 = vmatpush1.msra.mxu0 %v718
  %880 = vmatprep.subr.mxu0 %v723
  %881 = vmatpush1.msra.mxu0 %v722
  %882 = vmatprep.subr.mxu0 %v727
  %883 = vmatpush1.msra.mxu0 %v726
  %884 = vmatprep.mubr.f32.mxu0 0.0
  %885 = vmatmul.mubr.f32.gmra.mrb[0].mxu0 %v599
  %v886 = vpop.f32.mrb[0].mxu0
  %v887 = vadd.f32 %v740, %v886
  %v888 = vpop.f32.mrb[0].mxu0
  %v889 = vadd.f32 %v744, %v888
  %890 = vdwg.mxu0
  %v891 = vxor.u32 %v816, 2147483648
  %v892 = vmul.f32 %v891, 1.442695
  %v893 = vpow.pop %v892
  %v894 = vadd.f32 %v893, 1.0
  %v895 = vrcp.pop %v894
  %v896 = vmul.f32 1.0, %v895
  %v897 = vxor.u32 %v818, 2147483648
  %v898 = vmul.f32 %v897, 1.442695
  %v899 = vpow.pop %v898
  %v900 = vadd.f32 %v899, 1.0
  %v901 = vrcp.pop %v900
  %v902 = vmul.f32 1.0, %v901
  %v903 = vtanh.pop %v887
  %v904 = vxor.u32 %v889, 2147483648
  %v905 = vmul.f32 %v904, 1.442695
  %v906 = vpow.pop %v905
  %v907 = vadd.f32 %v906, 1.0
  %v908 = vrcp.pop %v907
  %v909 = vmul.f32 1.0, %v908
  %v910 = vmul.f32 %v902, 0.0
  %v911 = vmul.f32 %v896, %v903
  %v912 = vadd.f32 %v910, %v911
  %v913 = vtanh.pop %v912
  %v914 = vmul.f32 %v909, %v913
  %s915 = smul.u32 1, 4
  %s916 = smul.addr %s915, 8
  %s917 = scalar_lea.vmem [#allocation2], %s916
  %v918 = vld [vmem:[%s917] sm:$0xff]
  %v919 = vld [vmem:[%s917 + $0x8] sm:$0xff]
  %v920 = vld [vmem:[%s917 + $0x10] sm:$0xff]
  %v921 = vld [vmem:[%s917 + $0x18] sm:$0xff]
  %922 = vmatprep.subr.mxu0 %v367
  %923 = vmatpush1.msra.mxu0 %v366
  %924 = vmatprep.subr.mxu0 %v371
  %925 = vmatpush1.msra.mxu0 %v370
  %926 = vmatprep.subr.mxu0 %v375
  %927 = vmatpush1.msra.mxu0 %v374
  %928 = vmatprep.subr.mxu0 %v379
  %929 = vmatpush1.msra.mxu0 %v378
  %930 = vmatprep.subr.mxu0 %v383
  %931 = vmatpush1.msra.mxu0 %v382
  %932 = vmatprep.subr.mxu0 %v387
  %933 = vmatpush1.msra.mxu0 %v386
  %934 = vmatprep.subr.mxu0 %v391
  %935 = vmatpush1.msra.mxu0 %v390
  %936 = vmatprep.subr.mxu0 %v395
  %937 = vmatpush1.msra.mxu0 %v394
  %938 = vmatprep.subr.mxu0 %v399
  %939 = vmatpush1.msra.mxu0 %v398
  %940 = vmatprep.subr.mxu0 %v403
  %941 = vmatpush1.msra.mxu0 %v402
  %942 = vmatprep.subr.mxu0 %v407
  %943 = vmatpush1.msra.mxu0 %v406
  %944 = vmatprep.subr.mxu0 %v411
  %945 = vmatpush1.msra.mxu0 %v410
  %946 = vmatprep.subr.mxu0 %v415
  %947 = vmatpush1.msra.mxu0 %v414
  %948 = vmatprep.subr.mxu0 %v419
  %949 = vmatpush1.msra.mxu0 %v418
  %950 = vmatprep.subr.mxu0 %v423
  %951 = vmatpush1.msra.mxu0 %v422
  %952 = vmatprep.subr.mxu0 %v427
  %953 = vmatpush1.msra.mxu0 %v426
  %954 = vmatprep.subr.mxu0 0.0
  %955 = vmatpush1.msra.mxu0 0.0
  %956 = vmatprep.subr.mxu0 0.0
  %957 = vmatpush1.msra.mxu0 0.0
  %958 = vmatprep.subr.mxu0 0.0
  %959 = vmatpush1.msra.mxu0 0.0
  %960 = vmatprep.subr.mxu0 0.0
  %961 = vmatpush1.msra.mxu0 0.0
  %962 = vmatprep.subr.mxu0 0.0
  %963 = vmatpush1.msra.mxu0 0.0
  %964 = vmatprep.subr.mxu0 0.0
  %965 = vmatpush1.msra.mxu0 0.0
  %966 = vmatprep.subr.mxu0 0.0
  %967 = vmatpush1.msra.mxu0 0.0
  %968 = vmatprep.subr.mxu0 0.0
  %969 = vmatpush1.msra.mxu0 0.0
  %970 = vmatprep.subr.mxu0 0.0
  %971 = vmatpush1.msra.mxu0 0.0
  %972 = vmatprep.subr.mxu0 0.0
  %973 = vmatpush1.msra.mxu0 0.0
  %974 = vmatprep.subr.mxu0 0.0
  %975 = vmatpush1.msra.mxu0 0.0
  %976 = vmatprep.subr.mxu0 0.0
  %977 = vmatpush1.msra.mxu0 0.0
  %978 = vmatprep.subr.mxu0 0.0
  %979 = vmatpush1.msra.mxu0 0.0
  %980 = vmatprep.subr.mxu0 0.0
  %981 = vmatpush1.msra.mxu0 0.0
  %982 = vmatprep.subr.mxu0 0.0
  %983 = vmatpush1.msra.mxu0 0.0
  %984 = vmatprep.subr.mxu0 0.0
  %985 = vmatpush1.msra.mxu0 0.0
  %986 = vmatprep.mubr.f32.mxu0 0.0
  %987 = vmatmul.mubr.f32.gmra.mrb[0].mxu0 %v599
  %v988 = vpop.f32.mrb[0].mxu0
  %v989 = vadd.f32 0.0, %v988
  %v990 = vpop.f32.mrb[0].mxu0
  %v991 = vadd.f32 0.0, %v990
  %992 = vdwg.mxu0
  %993 = vmatprep.subr.mxu0 %v369
  %994 = vmatpush1.msra.mxu0 %v368
  %995 = vmatprep.subr.mxu0 %v373
  %996 = vmatpush1.msra.mxu0 %v372
  %997 = vmatprep.subr.mxu0 %v377
  %998 = vmatpush1.msra.mxu0 %v376
  %999 = vmatprep.subr.mxu0 %v381
  %1000 = vmatpush1.msra.mxu0 %v380
  %1001 = vmatprep.subr.mxu0 %v385
  %1002 = vmatpush1.msra.mxu0 %v384
  %1003 = vmatprep.subr.mxu0 %v389
  %1004 = vmatpush1.msra.mxu0 %v388
  %1005 = vmatprep.subr.mxu0 %v393
  %1006 = vmatpush1.msra.mxu0 %v392
  %1007 = vmatprep.subr.mxu0 %v397
  %1008 = vmatpush1.msra.mxu0 %v396
  %1009 = vmatprep.subr.mxu0 %v401
  %1010 = vmatpush1.msra.mxu0 %v400
  %1011 = vmatprep.subr.mxu0 %v405
  %1012 = vmatpush1.msra.mxu0 %v404
  %1013 = vmatprep.subr.mxu0 %v409
  %1014 = vmatpush1.msra.mxu0 %v408
  %1015 = vmatprep.subr.mxu0 %v413
  %1016 = vmatpush1.msra.mxu0 %v412
  %1017 = vmatprep.subr.mxu0 %v417
  %1018 = vmatpush1.msra.mxu0 %v416
  %1019 = vmatprep.subr.mxu0 %v421
  %1020 = vmatpush1.msra.mxu0 %v420
  %1021 = vmatprep.subr.mxu0 %v425
  %1022 = vmatpush1.msra.mxu0 %v424
  %1023 = vmatprep.subr.mxu0 %v429
  %1024 = vmatpush1.msra.mxu0 %v428
  %1025 = vmatprep.subr.mxu0 0.0
  %1026 = vmatpush1.msra.mxu0 0.0
  %1027 = vmatprep.subr.mxu0 0.0
  %1028 = vmatpush1.msra.mxu0 0.0
  %1029 = vmatprep.subr.mxu0 0.0
  %1030 = vmatpush1.msra.mxu0 0.0
  %1031 = vmatprep.subr.mxu0 0.0
  %1032 = vmatpush1.msra.mxu0 0.0
  %1033 = vmatprep.subr.mxu0 0.0
  %1034 = vmatpush1.msra.mxu0 0.0
  %1035 = vmatprep.subr.mxu0 0.0
  %1036 = vmatpush1.msra.mxu0 0.0
  %1037 = vmatprep.subr.mxu0 0.0
  %1038 = vmatpush1.msra.mxu0 0.0
  %1039 = vmatprep.subr.mxu0 0.0
  %1040 = vmatpush1.msra.mxu0 0.0
  %1041 = vmatprep.subr.mxu0 0.0
  %1042 = vmatpush1.msra.mxu0 0.0
  %1043 = vmatprep.subr.mxu0 0.0
  %1044 = vmatpush1.msra.mxu0 0.0
  %1045 = vmatprep.subr.mxu0 0.0
  %1046 = vmatpush1.msra.mxu0 0.0
  %1047 = vmatprep.subr.mxu0 0.0
  %1048 = vmatpush1.msra.mxu0 0.0
  %1049 = vmatprep.subr.mxu0 0.0
  %1050 = vmatpush1.msra.mxu0 0.0
  %1051 = vmatprep.subr.mxu0 0.0
  %1052 = vmatpush1.msra.mxu0 0.0
  %1053 = vmatprep.subr.mxu0 0.0
  %1054 = vmatpush1.msra.mxu0 0.0
  %1055 = vmatprep.subr.mxu0 0.0
  %1056 = vmatpush1.msra.mxu0 0.0
  %1057 = vmatprep.mubr.f32.mxu0 0.0
  %1058 = vmatmul.mubr.f32.gmra.mrb[0].mxu0 %v599
  %v1059 = vpop.f32.mrb[0].mxu0
  %v1060 = vadd.f32 0.0, %v1059
  %v1061 = vpop.f32.mrb[0].mxu0
  %v1062 = vadd.f32 0.0, %v1061
  %1063 = vdwg.mxu0
  %v1064 = vadd.f32 %v918, %v989
  %v1065 = vadd.f32 %v919, %v991
  %v1066 = vadd.f32 %v920, %v1060
  %v1067 = vadd.f32 %v921, %v1062
  %v1068 = vxor.u32 %v1064, 2147483648
  %v1069 = vmul.f32 %v1068, 1.442695
  %v1070 = vpow.pop %v1069
  %v1071 = vadd.f32 %v1070, 1.0
  %v1072 = vrcp.pop %v1071
  %v1073 = vmul.f32 1.0, %v1072
  %v1074 = vxor.u32 %v1065, 2147483648
  %v1075 = vmul.f32 %v1074, 1.442695
  %v1076 = vpow.pop %v1075
  %v1077 = vadd.f32 %v1076, 1.0
  %v1078 = vrcp.pop %v1077
  %v1079 = vmul.f32 1.0, %v1078
  %v1080 = vtanh.pop %v1066
  %v1081 = vxor.u32 %v1067, 2147483648
  %v1082 = vmul.f32 %v1081, 1.442695
  %v1083 = vpow.pop %v1082
  %v1084 = vadd.f32 %v1083, 1.0
  %v1085 = vrcp.pop %v1084
  %v1086 = vmul.f32 1.0, %v1085
  %v1087 = vmul.f32 %v1079, %v597
  %v1088 = vmul.f32 %v1073, %v1080
  %v1089 = vadd.f32 %v1087, %v1088
  %v1090 = vtanh.pop %v1089
  %v1091 = vmul.f32 %v1086, %v1090
  %1092 = vmatprep.subr.mxu0 %v601
  %1093 = vmatpush1.msra.mxu0 %v600
  %1094 = vmatprep.subr.mxu0 %v605
  %1095 = vmatpush1.msra.mxu0 %v604
  %1096 = vmatprep.subr.mxu0 %v609
  %1097 = vmatpush1.msra.mxu0 %v608
  %1098 = vmatprep.subr.mxu0 %v613
  %1099 = vmatpush1.msra.mxu0 %v612
  %1100 = vmatprep.subr.mxu0 %v617
  %1101 = vmatpush1.msra.mxu0 %v616
  %1102 = vmatprep.subr.mxu0 %v621
  %1103 = vmatpush1.msra.mxu0 %v620
  %1104 = vmatprep.subr.mxu0 %v625
  %1105 = vmatpush1.msra.mxu0 %v624
  %1106 = vmatprep.subr.mxu0 %v629
  %1107 = vmatpush1.msra.mxu0 %v628
  %1108 = vmatprep.subr.mxu0 %v633
  %1109 = vmatpush1.msra.mxu0 %v632
  %1110 = vmatprep.subr.mxu0 %v637
  %1111 = vmatpush1.msra.mxu0 %v636
  %1112 = vmatprep.subr.mxu0 %v641
  %1113 = vmatpush1.msra.mxu0 %v640
  %1114 = vmatprep.subr.mxu0 %v645
  %1115 = vmatpush1.msra.mxu0 %v644
  %1116 = vmatprep.subr.mxu0 %v649
  %1117 = vmatpush1.msra.mxu0 %v648
  %1118 = vmatprep.subr.mxu0 %v653
  %1119 = vmatpush1.msra.mxu0 %v652
  %1120 = vmatprep.subr.mxu0 %v657
  %1121 = vmatpush1.msra.mxu0 %v656
  %1122 = vmatprep.subr.mxu0 %v661
  %1123 = vmatpush1.msra.mxu0 %v660
  %1124 = vmatprep.subr.mxu0 %v665
  %1125 = vmatpush1.msra.mxu0 %v664
  %1126 = vmatprep.subr.mxu0 %v669
  %1127 = vmatpush1.msra.mxu0 %v668
  %1128 = vmatprep.subr.mxu0 %v673
  %1129 = vmatpush1.msra.mxu0 %v672
  %1130 = vmatprep.subr.mxu0 %v677
  %1131 = vmatpush1.msra.mxu0 %v676
  %1132 = vmatprep.subr.mxu0 %v681
  %1133 = vmatpush1.msra.mxu0 %v680
  %1134 = vmatprep.subr.mxu0 %v685
  %1135 = vmatpush1.msra.mxu0 %v684
  %1136 = vmatprep.subr.mxu0 %v689
  %1137 = vmatpush1.msra.mxu0 %v688
  %1138 = vmatprep.subr.mxu0 %v693
  %1139 = vmatpush1.msra.mxu0 %v692
  %1140 = vmatprep.subr.mxu0 %v697
  %1141 = vmatpush1.msra.mxu0 %v696
  %1142 = vmatprep.subr.mxu0 %v701
  %1143 = vmatpush1.msra.mxu0 %v700
  %1144 = vmatprep.subr.mxu0 %v705
  %1145 = vmatpush1.msra.mxu0 %v704
  %1146 = vmatprep.subr.mxu0 %v709
  %1147 = vmatpush1.msra.mxu0 %v708
  %1148 = vmatprep.subr.mxu0 %v713
  %1149 = vmatpush1.msra.mxu0 %v712
  %1150 = vmatprep.subr.mxu0 %v717
  %1151 = vmatpush1.msra.mxu0 %v716
  %1152 = vmatprep.subr.mxu0 %v721
  %1153 = vmatpush1.msra.mxu0 %v720
  %1154 = vmatprep.subr.mxu0 %v725
  %1155 = vmatpush1.msra.mxu0 %v724
  %1156 = vmatprep.mubr.f32.mxu0 %v914
  %1157 = vmatmul.mubr.f32.gmra.mrb[0].mxu0 %v1091
  %v1158 = vpop.f32.mrb[0].mxu0
  %v1159 = vadd.f32 %v732, %v1158
  %v1160 = vpop.f32.mrb[0].mxu0
  %v1161 = vadd.f32 %v736, %v1160
  %1162 = vdwg.mxu0
  %1163 = vmatprep.subr.mxu0 %v603
  %1164 = vmatpush1.msra.mxu0 %v602
  %1165 = vmatprep.subr.mxu0 %v607
  %1166 = vmatpush1.msra.mxu0 %v606
  %1167 = vmatprep.subr.mxu0 %v611
  %1168 = vmatpush1.msra.mxu0 %v610
  %1169 = vmatprep.subr.mxu0 %v615
  %1170 = vmatpush1.msra.mxu0 %v614
  %1171 = vmatprep.subr.mxu0 %v619
  %1172 = vmatpush1.msra.mxu0 %v618
  %1173 = vmatprep.subr.mxu0 %v623
  %1174 = vmatpush1.msra.mxu0 %v622
  %1175 = vmatprep.subr.mxu0 %v627
  %1176 = vmatpush1.msra.mxu0 %v626
  %1177 = vmatprep.subr.mxu0 %v631
  %1178 = vmatpush1.msra.mxu0 %v630
  %1179 = vmatprep.subr.mxu0 %v635
  %1180 = vmatpush1.msra.mxu0 %v634
  %1181 = vmatprep.subr.mxu0 %v639
  %1182 = vmatpush1.msra.mxu0 %v638
  %1183 = vmatprep.subr.mxu0 %v643
  %1184 = vmatpush1.msra.mxu0 %v642
  %1185 = vmatprep.subr.mxu0 %v647
  %1186 = vmatpush1.msra.mxu0 %v646
  %1187 = vmatprep.subr.mxu0 %v651
  %1188 = vmatpush1.msra.mxu0 %v650
  %1189 = vmatprep.subr.mxu0 %v655
  %1190 = vmatpush1.msra.mxu0 %v654
  %1191 = vmatprep.subr.mxu0 %v659
  %1192 = vmatpush1.msra.mxu0 %v658
  %1193 = vmatprep.subr.mxu0 %v663
  %1194 = vmatpush1.msra.mxu0 %v662
  %1195 = vmatprep.subr.mxu0 %v667
  %1196 = vmatpush1.msra.mxu0 %v666
  %1197 = vmatprep.subr.mxu0 %v671
  %1198 = vmatpush1.msra.mxu0 %v670
  %1199 = vmatprep.subr.mxu0 %v675
  %1200 = vmatpush1.msra.mxu0 %v674
  %1201 = vmatprep.subr.mxu0 %v679
  %1202 = vmatpush1.msra.mxu0 %v678
  %1203 = vmatprep.subr.mxu0 %v683
  %1204 = vmatpush1.msra.mxu0 %v682
  %1205 = vmatprep.subr.mxu0 %v687
  %1206 = vmatpush1.msra.mxu0 %v686
  %1207 = vmatprep.subr.mxu0 %v691
  %1208 = vmatpush1.msra.mxu0 %v690
  %1209 = vmatprep.subr.mxu0 %v695
  %1210 = vmatpush1.msra.mxu0 %v694
  %1211 = vmatprep.subr.mxu0 %v699
  %1212 = vmatpush1.msra.mxu0 %v698
  %1213 = vmatprep.subr.mxu0 %v703
  %1214 = vmatpush1.msra.mxu0 %v702
  %1215 = vmatprep.subr.mxu0 %v707
  %1216 = vmatpush1.msra.mxu0 %v706
  %1217 = vmatprep.subr.mxu0 %v711
  %1218 = vmatpush1.msra.mxu0 %v710
  %1219 = vmatprep.subr.mxu0 %v715
  %1220 = vmatpush1.msra.mxu0 %v714
  %1221 = vmatprep.subr.mxu0 %v719
  %1222 = vmatpush1.msra.mxu0 %v718
  %1223 = vmatprep.subr.mxu0 %v723
  %1224 = vmatpush1.msra.mxu0 %v722
  %1225 = vmatprep.subr.mxu0 %v727
  %1226 = vmatpush1.msra.mxu0 %v726
  %1227 = vmatprep.mubr.f32.mxu0 %v914
  %1228 = vmatmul.mubr.f32.gmra.mrb[0].mxu0 %v1091
  %v1229 = vpop.f32.mrb[0].mxu0
  %v1230 = vadd.f32 %v740, %v1229
  %v1231 = vpop.f32.mrb[0].mxu0
  %v1232 = vadd.f32 %v744, %v1231
  %1233 = vdwg.mxu0
  %v1234 = vxor.u32 %v1159, 2147483648
  %v1235 = vmul.f32 %v1234, 1.442695
  %v1236 = vpow.pop %v1235
  %v1237 = vadd.f32 %v1236, 1.0
  %v1238 = vrcp.pop %v1237
  %v1239 = vmul.f32 1.0, %v1238
  %v1240 = vxor.u32 %v1161, 2147483648
  %v1241 = vmul.f32 %v1240, 1.442695
  %v1242 = vpow.pop %v1241
  %v1243 = vadd.f32 %v1242, 1.0
  %v1244 = vrcp.pop %v1243
  %v1245 = vmul.f32 1.0, %v1244
  %v1246 = vtanh.pop %v1230
  %v1247 = vxor.u32 %v1232, 2147483648
  %v1248 = vmul.f32 %v1247, 1.442695
  %v1249 = vpow.pop %v1248
  %v1250 = vadd.f32 %v1249, 1.0
  %v1251 = vrcp.pop %v1250
  %v1252 = vmul.f32 1.0, %v1251
  %v1253 = vmul.f32 %v1245, %v912
  %v1254 = vmul.f32 %v1239, %v1246
  %v1255 = vadd.f32 %v1253, %v1254
  %v1256 = vtanh.pop %v1255
  %v1257 = vmul.f32 %v1252, %v1256
  %s1258 = smul.u32 2, 4
  %s1259 = smul.addr %s1258, 8
  %s1260 = scalar_lea.vmem [#allocation2], %s1259
  %v1261 = vld [vmem:[%s1260] sm:$0xff]
  %v1262 = vld [vmem:[%s1260 + $0x8] sm:$0xff]
  %v1263 = vld [vmem:[%s1260 + $0x10] sm:$0xff]
  %v1264 = vld [vmem:[%s1260 + $0x18] sm:$0xff]
  %1265 = vmatprep.subr.mxu0 %v367
  %1266 = vmatpush1.msra.mxu0 %v366
  %1267 = vmatprep.subr.mxu0 %v371
  %1268 = vmatpush1.msra.mxu0 %v370
  %1269 = vmatprep.subr.mxu0 %v375
  %1270 = vmatpush1.msra.mxu0 %v374
  %1271 = vmatprep.subr.mxu0 %v379
  %1272 = vmatpush1.msra.mxu0 %v378
  %1273 = vmatprep.subr.mxu0 %v383
  %1274 = vmatpush1.msra.mxu0 %v382
  %1275 = vmatprep.subr.mxu0 %v387
  %1276 = vmatpush1.msra.mxu0 %v386
  %1277 = vmatprep.subr.mxu0 %v391
  %1278 = vmatpush1.msra.mxu0 %v390
  %1279 = vmatprep.subr.mxu0 %v395
  %1280 = vmatpush1.msra.mxu0 %v394
  %1281 = vmatprep.subr.mxu0 %v399
  %1282 = vmatpush1.msra.mxu0 %v398
  %1283 = vmatprep.subr.mxu0 %v403
  %1284 = vmatpush1.msra.mxu0 %v402
  %1285 = vmatprep.subr.mxu0 %v407
  %1286 = vmatpush1.msra.mxu0 %v406
  %1287 = vmatprep.subr.mxu0 %v411
  %1288 = vmatpush1.msra.mxu0 %v410
  %1289 = vmatprep.subr.mxu0 %v415
  %1290 = vmatpush1.msra.mxu0 %v414
  %1291 = vmatprep.subr.mxu0 %v419
  %1292 = vmatpush1.msra.mxu0 %v418
  %1293 = vmatprep.subr.mxu0 %v423
  %1294 = vmatpush1.msra.mxu0 %v422
  %1295 = vmatprep.subr.mxu0 %v427
  %1296 = vmatpush1.msra.mxu0 %v426
  %1297 = vmatprep.subr.mxu0 0.0
  %1298 = vmatpush1.msra.mxu0 0.0
  %1299 = vmatprep.subr.mxu0 0.0
  %1300 = vmatpush1.msra.mxu0 0.0
  %1301 = vmatprep.subr.mxu0 0.0
  %1302 = vmatpush1.msra.mxu0 0.0
  %1303 = vmatprep.subr.mxu0 0.0
  %1304 = vmatpush1.msra.mxu0 0.0
  %1305 = vmatprep.subr.mxu0 0.0
  %1306 = vmatpush1.msra.mxu0 0.0
  %1307 = vmatprep.subr.mxu0 0.0
  %1308 = vmatpush1.msra.mxu0 0.0
  %1309 = vmatprep.subr.mxu0 0.0
  %1310 = vmatpush1.msra.mxu0 0.0
  %1311 = vmatprep.subr.mxu0 0.0
  %1312 = vmatpush1.msra.mxu0 0.0
  %1313 = vmatprep.subr.mxu0 0.0
  %1314 = vmatpush1.msra.mxu0 0.0
  %1315 = vmatprep.subr.mxu0 0.0
  %1316 = vmatpush1.msra.mxu0 0.0
  %1317 = vmatprep.subr.mxu0 0.0
  %1318 = vmatpush1.msra.mxu0 0.0
  %1319 = vmatprep.subr.mxu0 0.0
  %1320 = vmatpush1.msra.mxu0 0.0
  %1321 = vmatprep.subr.mxu0 0.0
  %1322 = vmatpush1.msra.mxu0 0.0
  %1323 = vmatprep.subr.mxu0 0.0
  %1324 = vmatpush1.msra.mxu0 0.0
  %1325 = vmatprep.subr.mxu0 0.0
  %1326 = vmatpush1.msra.mxu0 0.0
  %1327 = vmatprep.subr.mxu0 0.0
  %1328 = vmatpush1.msra.mxu0 0.0
  %1329 = vmatprep.mubr.f32.mxu0 0.0
  %1330 = vmatmul.mubr.f32.gmra.mrb[0].mxu0 %v1091
  %v1331 = vpop.f32.mrb[0].mxu0
  %v1332 = vadd.f32 0.0, %v1331
  %v1333 = vpop.f32.mrb[0].mxu0
  %v1334 = vadd.f32 0.0, %v1333
  %1335 = vdwg.mxu0
  %1336 = vmatprep.subr.mxu0 %v369
  %1337 = vmatpush1.msra.mxu0 %v368
  %1338 = vmatprep.subr.mxu0 %v373
  %1339 = vmatpush1.msra.mxu0 %v372
  %1340 = vmatprep.subr.mxu0 %v377
  %1341 = vmatpush1.msra.mxu0 %v376
  %1342 = vmatprep.subr.mxu0 %v381
  %1343 = vmatpush1.msra.mxu0 %v380
  %1344 = vmatprep.subr.mxu0 %v385
  %1345 = vmatpush1.msra.mxu0 %v384
  %1346 = vmatprep.subr.mxu0 %v389
  %1347 = vmatpush1.msra.mxu0 %v388
  %1348 = vmatprep.subr.mxu0 %v393
  %1349 = vmatpush1.msra.mxu0 %v392
  %1350 = vmatprep.subr.mxu0 %v397
  %1351 = vmatpush1.msra.mxu0 %v396
  %1352 = vmatprep.subr.mxu0 %v401
  %1353 = vmatpush1.msra.mxu0 %v400
  %1354 = vmatprep.subr.mxu0 %v405
  %1355 = vmatpush1.msra.mxu0 %v404
  %1356 = vmatprep.subr.mxu0 %v409
  %1357 = vmatpush1.msra.mxu0 %v408
  %1358 = vmatprep.subr.mxu0 %v413
  %1359 = vmatpush1.msra.mxu0 %v412
  %1360 = vmatprep.subr.mxu0 %v417
  %1361 = vmatpush1.msra.mxu0 %v416
  %1362 = vmatprep.subr.mxu0 %v421
  %1363 = vmatpush1.msra.mxu0 %v420
  %1364 = vmatprep.subr.mxu0 %v425
  %1365 = vmatpush1.msra.mxu0 %v424
  %1366 = vmatprep.subr.mxu0 %v429
  %1367 = vmatpush1.msra.mxu0 %v428
  %1368 = vmatprep.subr.mxu0 0.0
  %1369 = vmatpush1.msra.mxu0 0.0
  %1370 = vmatprep.subr.mxu0 0.0
  %1371 = vmatpush1.msra.mxu0 0.0
  %1372 = vmatprep.subr.mxu0 0.0
  %1373 = vmatpush1.msra.mxu0 0.0
  %1374 = vmatprep.subr.mxu0 0.0
  %1375 = vmatpush1.msra.mxu0 0.0
  %1376 = vmatprep.subr.mxu0 0.0
  %1377 = vmatpush1.msra.mxu0 0.0
  %1378 = vmatprep.subr.mxu0 0.0
  %1379 = vmatpush1.msra.mxu0 0.0
  %1380 = vmatprep.subr.mxu0 0.0
  %1381 = vmatpush1.msra.mxu0 0.0
  %1382 = vmatprep.subr.mxu0 0.0
  %1383 = vmatpush1.msra.mxu0 0.0
  %1384 = vmatprep.subr.mxu0 0.0
  %1385 = vmatpush1.msra.mxu0 0.0
  %1386 = vmatprep.subr.mxu0 0.0
  %1387 = vmatpush1.msra.mxu0 0.0
  %1388 = vmatprep.subr.mxu0 0.0
  %1389 = vmatpush1.msra.mxu0 0.0
  %1390 = vmatprep.subr.mxu0 0.0
  %1391 = vmatpush1.msra.mxu0 0.0
  %1392 = vmatprep.subr.mxu0 0.0
  %1393 = vmatpush1.msra.mxu0 0.0
  %1394 = vmatprep.subr.mxu0 0.0
  %1395 = vmatpush1.msra.mxu0 0.0
  %1396 = vmatprep.subr.mxu0 0.0
  %1397 = vmatpush1.msra.mxu0 0.0
  %1398 = vmatprep.subr.mxu0 0.0
  %1399 = vmatpush1.msra.mxu0 0.0
  %1400 = vmatprep.mubr.f32.mxu0 0.0
  %1401 = vmatmul.mubr.f32.gmra.mrb[0].mxu0 %v1091
  %v1402 = vpop.f32.mrb[0].mxu0
  %v1403 = vadd.f32 0.0, %v1402
  %v1404 = vpop.f32.mrb[0].mxu0
  %v1405 = vadd.f32 0.0, %v1404
  %1406 = vdwg.mxu0
  %v1407 = vadd.f32 %v1261, %v1332
  %v1408 = vadd.f32 %v1262, %v1334
  %v1409 = vadd.f32 %v1263, %v1403
  %v1410 = vadd.f32 %v1264, %v1405
  %v1411 = vxor.u32 %v1407, 2147483648
  %v1412 = vmul.f32 %v1411, 1.442695
  %v1413 = vpow.pop %v1412
  %v1414 = vadd.f32 %v1413, 1.0
  %v1415 = vrcp.pop %v1414
  %v1416 = vmul.f32 1.0, %v1415
  %v1417 = vxor.u32 %v1408, 2147483648
  %v1418 = vmul.f32 %v1417, 1.442695
  %v1419 = vpow.pop %v1418
  %v1420 = vadd.f32 %v1419, 1.0
  %v1421 = vrcp.pop %v1420
  %v1422 = vmul.f32 1.0, %v1421
  %v1423 = vtanh.pop %v1409
  %v1424 = vxor.u32 %v1410, 2147483648
  %v1425 = vmul.f32 %v1424, 1.442695
  %v1426 = vpow.pop %v1425
  %v1427 = vadd.f32 %v1426, 1.0
  %v1428 = vrcp.pop %v1427
  %v1429 = vmul.f32 1.0, %v1428
  %v1430 = vmul.f32 %v1422, %v1089
  %v1431 = vmul.f32 %v1416, %v1423
  %v1432 = vadd.f32 %v1430, %v1431
  %v1433 = vtanh.pop %v1432
  %v1434 = vmul.f32 %v1429, %v1433
  %1435 = vmatprep.subr.mxu0 %v601
  %1436 = vmatpush1.msra.mxu0 %v600
  %1437 = vmatprep.subr.mxu0 %v605
  %1438 = vmatpush1.msra.mxu0 %v604
  %1439 = vmatprep.subr.mxu0 %v609
  %1440 = vmatpush1.msra.mxu0 %v608
  %1441 = vmatprep.subr.mxu0 %v613
  %1442 = vmatpush1.msra.mxu0 %v612
  %1443 = vmatprep.subr.mxu0 %v617
  %1444 = vmatpush1.msra.mxu0 %v616
  %1445 = vmatprep.subr.mxu0 %v621
  %1446 = vmatpush1.msra.mxu0 %v620
  %1447 = vmatprep.subr.mxu0 %v625
  %1448 = vmatpush1.msra.mxu0 %v624
  %1449 = vmatprep.subr.mxu0 %v629
  %1450 = vmatpush1.msra.mxu0 %v628
  %1451 = vmatprep.subr.mxu0 %v633
  %1452 = vmatpush1.msra.mxu0 %v632
  %1453 = vmatprep.subr.mxu0 %v637
  %1454 = vmatpush1.msra.mxu0 %v636
  %1455 = vmatprep.subr.mxu0 %v641
  %1456 = vmatpush1.msra.mxu0 %v640
  %1457 = vmatprep.subr.mxu0 %v645
  %1458 = vmatpush1.msra.mxu0 %v644
  %1459 = vmatprep.subr.mxu0 %v649
  %1460 = vmatpush1.msra.mxu0 %v648
  %1461 = vmatprep.subr.mxu0 %v653
  %1462 = vmatpush1.msra.mxu0 %v652
  %1463 = vmatprep.subr.mxu0 %v657
  %1464 = vmatpush1.msra.mxu0 %v656
  %1465 = vmatprep.subr.mxu0 %v661
  %1466 = vmatpush1.msra.mxu0 %v660
  %1467 = vmatprep.subr.mxu0 %v665
  %1468 = vmatpush1.msra.mxu0 %v664
  %1469 = vmatprep.subr.mxu0 %v669
  %1470 = vmatpush1.msra.mxu0 %v668
  %1471 = vmatprep.subr.mxu0 %v673
  %1472 = vmatpush1.msra.mxu0 %v672
  %1473 = vmatprep.subr.mxu0 %v677
  %1474 = vmatpush1.msra.mxu0 %v676
  %1475 = vmatprep.subr.mxu0 %v681
  %1476 = vmatpush1.msra.mxu0 %v680
  %1477 = vmatprep.subr.mxu0 %v685
  %1478 = vmatpush1.msra.mxu0 %v684
  %1479 = vmatprep.subr.mxu0 %v689
  %1480 = vmatpush1.msra.mxu0 %v688
  %1481 = vmatprep.subr.mxu0 %v693
  %1482 = vmatpush1.msra.mxu0 %v692
  %1483 = vmatprep.subr.mxu0 %v697
  %1484 = vmatpush1.msra.mxu0 %v696
  %1485 = vmatprep.subr.mxu0 %v701
  %1486 = vmatpush1.msra.mxu0 %v700
  %1487 = vmatprep.subr.mxu0 %v705
  %1488 = vmatpush1.msra.mxu0 %v704
  %1489 = vmatprep.subr.mxu0 %v709
  %1490 = vmatpush1.msra.mxu0 %v708
  %1491 = vmatprep.subr.mxu0 %v713
  %1492 = vmatpush1.msra.mxu0 %v712
  %1493 = vmatprep.subr.mxu0 %v717
  %1494 = vmatpush1.msra.mxu0 %v716
  %1495 = vmatprep.subr.mxu0 %v721
  %1496 = vmatpush1.msra.mxu0 %v720
  %1497 = vmatprep.subr.mxu0 %v725
  %1498 = vmatpush1.msra.mxu0 %v724
  %1499 = vmatprep.mubr.f32.mxu0 %v1257
  %1500 = vmatmul.mubr.f32.gmra.mrb[0].mxu0 %v1434
  %v1501 = vpop.f32.mrb[0].mxu0
  %v1502 = vadd.f32 %v732, %v1501
  %v1503 = vpop.f32.mrb[0].mxu0
  %v1504 = vadd.f32 %v736, %v1503
  %1505 = vdwg.mxu0
  %1506 = vmatprep.subr.mxu0 %v603
  %1507 = vmatpush1.msra.mxu0 %v602
  %1508 = vmatprep.subr.mxu0 %v607
  %1509 = vmatpush1.msra.mxu0 %v606
  %1510 = vmatprep.subr.mxu0 %v611
  %1511 = vmatpush1.msra.mxu0 %v610
  %1512 = vmatprep.subr.mxu0 %v615
  %1513 = vmatpush1.msra.mxu0 %v614
  %1514 = vmatprep.subr.mxu0 %v619
  %1515 = vmatpush1.msra.mxu0 %v618
  %1516 = vmatprep.subr.mxu0 %v623
  %1517 = vmatpush1.msra.mxu0 %v622
  %1518 = vmatprep.subr.mxu0 %v627
  %1519 = vmatpush1.msra.mxu0 %v626
  %1520 = vmatprep.subr.mxu0 %v631
  %1521 = vmatpush1.msra.mxu0 %v630
  %1522 = vmatprep.subr.mxu0 %v635
  %1523 = vmatpush1.msra.mxu0 %v634
  %1524 = vmatprep.subr.mxu0 %v639
  %1525 = vmatpush1.msra.mxu0 %v638
  %1526 = vmatprep.subr.mxu0 %v643
  %1527 = vmatpush1.msra.mxu0 %v642
  %1528 = vmatprep.subr.mxu0 %v647
  %1529 = vmatpush1.msra.mxu0 %v646
  %1530 = vmatprep.subr.mxu0 %v651
  %1531 = vmatpush1.msra.mxu0 %v650
  %1532 = vmatprep.subr.mxu0 %v655
  %1533 = vmatpush1.msra.mxu0 %v654
  %1534 = vmatprep.subr.mxu0 %v659
  %1535 = vmatpush1.msra.mxu0 %v658
  %1536 = vmatprep.subr.mxu0 %v663
  %1537 = vmatpush1.msra.mxu0 %v662
  %1538 = vmatprep.subr.mxu0 %v667
  %1539 = vmatpush1.msra.mxu0 %v666
  %1540 = vmatprep.subr.mxu0 %v671
  %1541 = vmatpush1.msra.mxu0 %v670
  %1542 = vmatprep.subr.mxu0 %v675
  %1543 = vmatpush1.msra.mxu0 %v674
  %1544 = vmatprep.subr.mxu0 %v679
  %1545 = vmatpush1.msra.mxu0 %v678
  %1546 = vmatprep.subr.mxu0 %v683
  %1547 = vmatpush1.msra.mxu0 %v682
  %1548 = vmatprep.subr.mxu0 %v687
  %1549 = vmatpush1.msra.mxu0 %v686
  %1550 = vmatprep.subr.mxu0 %v691
  %1551 = vmatpush1.msra.mxu0 %v690
  %1552 = vmatprep.subr.mxu0 %v695
  %1553 = vmatpush1.msra.mxu0 %v694
  %1554 = vmatprep.subr.mxu0 %v699
  %1555 = vmatpush1.msra.mxu0 %v698
  %1556 = vmatprep.subr.mxu0 %v703
  %1557 = vmatpush1.msra.mxu0 %v702
  %1558 = vmatprep.subr.mxu0 %v707
  %1559 = vmatpush1.msra.mxu0 %v706
  %1560 = vmatprep.subr.mxu0 %v711
  %1561 = vmatpush1.msra.mxu0 %v710
  %1562 = vmatprep.subr.mxu0 %v715
  %1563 = vmatpush1.msra.mxu0 %v714
  %1564 = vmatprep.subr.mxu0 %v719
  %1565 = vmatpush1.msra.mxu0 %v718
  %1566 = vmatprep.subr.mxu0 %v723
  %1567 = vmatpush1.msra.mxu0 %v722
  %1568 = vmatprep.subr.mxu0 %v727
  %1569 = vmatpush1.msra.mxu0 %v726
  %1570 = vmatprep.mubr.f32.mxu0 %v1257
  %1571 = vmatmul.mubr.f32.gmra.mrb[0].mxu0 %v1434
  %v1572 = vpop.f32.mrb[0].mxu0
  %v1573 = vadd.f32 %v740, %v1572
  %v1574 = vpop.f32.mrb[0].mxu0
  %v1575 = vadd.f32 %v744, %v1574
  %1576 = vdwg.mxu0
  %v1577 = vxor.u32 %v1502, 2147483648
  %v1578 = vmul.f32 %v1577, 1.442695
  %v1579 = vpow.pop %v1578
  %v1580 = vadd.f32 %v1579, 1.0
  %v1581 = vrcp.pop %v1580
  %v1582 = vmul.f32 1.0, %v1581
  %v1583 = vxor.u32 %v1504, 2147483648
  %v1584 = vmul.f32 %v1583, 1.442695
  %v1585 = vpow.pop %v1584
  %v1586 = vadd.f32 %v1585, 1.0
  %v1587 = vrcp.pop %v1586
  %v1588 = vmul.f32 1.0, %v1587
  %v1589 = vtanh.pop %v1573
  %v1590 = vxor.u32 %v1575, 2147483648
  %v1591 = vmul.f32 %v1590, 1.442695
  %v1592 = vpow.pop %v1591
  %v1593 = vadd.f32 %v1592, 1.0
  %v1594 = vrcp.pop %v1593
  %v1595 = vmul.f32 1.0, %v1594
  %v1596 = vmul.f32 %v1588, %v1255
  %v1597 = vmul.f32 %v1582, %v1589
  %v1598 = vadd.f32 %v1596, %v1597
  %v1599 = vtanh.pop %v1598
  %v1600 = vmul.f32 %v1595, %v1599
  %s1601 = smul.u32 3, 4
  %s1602 = smul.addr %s1601, 8
  %s1603 = scalar_lea.vmem [#allocation2], %s1602
  %v1604 = vld [vmem:[%s1603] sm:$0xff]
  %v1605 = vld [vmem:[%s1603 + $0x8] sm:$0xff]
  %v1606 = vld [vmem:[%s1603 + $0x10] sm:$0xff]
  %v1607 = vld [vmem:[%s1603 + $0x18] sm:$0xff]
  %1608 = vmatprep.subr.mxu0 %v367
  %1609 = vmatpush1.msra.mxu0 %v366
  %1610 = vmatprep.subr.mxu0 %v371
  %1611 = vmatpush1.msra.mxu0 %v370
  %1612 = vmatprep.subr.mxu0 %v375
  %1613 = vmatpush1.msra.mxu0 %v374
  %1614 = vmatprep.subr.mxu0 %v379
  %1615 = vmatpush1.msra.mxu0 %v378
  %1616 = vmatprep.subr.mxu0 %v383
  %1617 = vmatpush1.msra.mxu0 %v382
  %1618 = vmatprep.subr.mxu0 %v387
  %1619 = vmatpush1.msra.mxu0 %v386
  %1620 = vmatprep.subr.mxu0 %v391
  %1621 = vmatpush1.msra.mxu0 %v390
  %1622 = vmatprep.subr.mxu0 %v395
  %1623 = vmatpush1.msra.mxu0 %v394
  %1624 = vmatprep.subr.mxu0 %v399
  %1625 = vmatpush1.msra.mxu0 %v398
  %1626 = vmatprep.subr.mxu0 %v403
  %1627 = vmatpush1.msra.mxu0 %v402
  %1628 = vmatprep.subr.mxu0 %v407
  %1629 = vmatpush1.msra.mxu0 %v406
  %1630 = vmatprep.subr.mxu0 %v411
  %1631 = vmatpush1.msra.mxu0 %v410
  %1632 = vmatprep.subr.mxu0 %v415
  %1633 = vmatpush1.msra.mxu0 %v414
  %1634 = vmatprep.subr.mxu0 %v419
  %1635 = vmatpush1.msra.mxu0 %v418
  %1636 = vmatprep.subr.mxu0 %v423
  %1637 = vmatpush1.msra.mxu0 %v422
  %1638 = vmatprep.subr.mxu0 %v427
  %1639 = vmatpush1.msra.mxu0 %v426
  %1640 = vmatprep.subr.mxu0 0.0
  %1641 = vmatpush1.msra.mxu0 0.0
  %1642 = vmatprep.subr.mxu0 0.0
  %1643 = vmatpush1.msra.mxu0 0.0
  %1644 = vmatprep.subr.mxu0 0.0
  %1645 = vmatpush1.msra.mxu0 0.0
  %1646 = vmatprep.subr.mxu0 0.0
  %1647 = vmatpush1.msra.mxu0 0.0
  %1648 = vmatprep.subr.mxu0 0.0
  %1649 = vmatpush1.msra.mxu0 0.0
  %1650 = vmatprep.subr.mxu0 0.0
  %1651 = vmatpush1.msra.mxu0 0.0
  %1652 = vmatprep.subr.mxu0 0.0
  %1653 = vmatpush1.msra.mxu0 0.0
  %1654 = vmatprep.subr.mxu0 0.0
  %1655 = vmatpush1.msra.mxu0 0.0
  %1656 = vmatprep.subr.mxu0 0.0
  %1657 = vmatpush1.msra.mxu0 0.0
  %1658 = vmatprep.subr.mxu0 0.0
  %1659 = vmatpush1.msra.mxu0 0.0
  %1660 = vmatprep.subr.mxu0 0.0
  %1661 = vmatpush1.msra.mxu0 0.0
  %1662 = vmatprep.subr.mxu0 0.0
  %1663 = vmatpush1.msra.mxu0 0.0
  %1664 = vmatprep.subr.mxu0 0.0
  %1665 = vmatpush1.msra.mxu0 0.0
  %1666 = vmatprep.subr.mxu0 0.0
  %1667 = vmatpush1.msra.mxu0 0.0
  %1668 = vmatprep.subr.mxu0 0.0
  %1669 = vmatpush1.msra.mxu0 0.0
  %1670 = vmatprep.subr.mxu0 0.0
  %1671 = vmatpush1.msra.mxu0 0.0
  %1672 = vmatprep.mubr.f32.mxu0 0.0
  %1673 = vmatmul.mubr.f32.gmra.mrb[0].mxu0 %v1434
  %v1674 = vpop.f32.mrb[0].mxu0
  %v1675 = vadd.f32 0.0, %v1674
  %v1676 = vpop.f32.mrb[0].mxu0
  %v1677 = vadd.f32 0.0, %v1676
  %1678 = vdwg.mxu0
  %1679 = vmatprep.subr.mxu0 %v369
  %1680 = vmatpush1.msra.mxu0 %v368
  %1681 = vmatprep.subr.mxu0 %v373
  %1682 = vmatpush1.msra.mxu0 %v372
  %1683 = vmatprep.subr.mxu0 %v377
  %1684 = vmatpush1.msra.mxu0 %v376
  %1685 = vmatprep.subr.mxu0 %v381
  %1686 = vmatpush1.msra.mxu0 %v380
  %1687 = vmatprep.subr.mxu0 %v385
  %1688 = vmatpush1.msra.mxu0 %v384
  %1689 = vmatprep.subr.mxu0 %v389
  %1690 = vmatpush1.msra.mxu0 %v388
  %1691 = vmatprep.subr.mxu0 %v393
  %1692 = vmatpush1.msra.mxu0 %v392
  %1693 = vmatprep.subr.mxu0 %v397
  %1694 = vmatpush1.msra.mxu0 %v396
  %1695 = vmatprep.subr.mxu0 %v401
  %1696 = vmatpush1.msra.mxu0 %v400
  %1697 = vmatprep.subr.mxu0 %v405
  %1698 = vmatpush1.msra.mxu0 %v404
  %1699 = vmatprep.subr.mxu0 %v409
  %1700 = vmatpush1.msra.mxu0 %v408
  %1701 = vmatprep.subr.mxu0 %v413
  %1702 = vmatpush1.msra.mxu0 %v412
  %1703 = vmatprep.subr.mxu0 %v417
  %1704 = vmatpush1.msra.mxu0 %v416
  %1705 = vmatprep.subr.mxu0 %v421
  %1706 = vmatpush1.msra.mxu0 %v420
  %1707 = vmatprep.subr.mxu0 %v425
  %1708 = vmatpush1.msra.mxu0 %v424
  %1709 = vmatprep.subr.mxu0 %v429
  %1710 = vmatpush1.msra.mxu0 %v428
  %1711 = vmatprep.subr.mxu0 0.0
  %1712 = vmatpush1.msra.mxu0 0.0
  %1713 = vmatprep.subr.mxu0 0.0
  %1714 = vmatpush1.msra.mxu0 0.0
  %1715 = vmatprep.subr.mxu0 0.0
  %1716 = vmatpush1.msra.mxu0 0.0
  %1717 = vmatprep.subr.mxu0 0.0
  %1718 = vmatpush1.msra.mxu0 0.0
  %1719 = vmatprep.subr.mxu0 0.0
  %1720 = vmatpush1.msra.mxu0 0.0
  %1721 = vmatprep.subr.mxu0 0.0
  %1722 = vmatpush1.msra.mxu0 0.0
  %1723 = vmatprep.subr.mxu0 0.0
  %1724 = vmatpush1.msra.mxu0 0.0
  %1725 = vmatprep.subr.mxu0 0.0
  %1726 = vmatpush1.msra.mxu0 0.0
  %1727 = vmatprep.subr.mxu0 0.0
  %1728 = vmatpush1.msra.mxu0 0.0
  %1729 = vmatprep.subr.mxu0 0.0
  %1730 = vmatpush1.msra.mxu0 0.0
  %1731 = vmatprep.subr.mxu0 0.0
  %1732 = vmatpush1.msra.mxu0 0.0
  %1733 = vmatprep.subr.mxu0 0.0
  %1734 = vmatpush1.msra.mxu0 0.0
  %1735 = vmatprep.subr.mxu0 0.0
  %1736 = vmatpush1.msra.mxu0 0.0
  %1737 = vmatprep.subr.mxu0 0.0
  %1738 = vmatpush1.msra.mxu0 0.0
  %1739 = vmatprep.subr.mxu0 0.0
  %1740 = vmatpush1.msra.mxu0 0.0
  %1741 = vmatprep.subr.mxu0 0.0
  %1742 = vmatpush1.msra.mxu0 0.0
  %1743 = vmatprep.mubr.f32.mxu0 0.0
  %1744 = vmatmul.mubr.f32.gmra.mrb[0].mxu0 %v1434
  %v1745 = vpop.f32.mrb[0].mxu0
  %v1746 = vadd.f32 0.0, %v1745
  %v1747 = vpop.f32.mrb[0].mxu0
  %v1748 = vadd.f32 0.0, %v1747
  %1749 = vdwg.mxu0
  %v1750 = vadd.f32 %v1604, %v1675
  %v1751 = vadd.f32 %v1605, %v1677
  %v1752 = vadd.f32 %v1606, %v1746
  %v1753 = vadd.f32 %v1607, %v1748
  %v1754 = vxor.u32 %v1750, 2147483648
  %v1755 = vmul.f32 %v1754, 1.442695
  %v1756 = vpow.pop %v1755
  %v1757 = vadd.f32 %v1756, 1.0
  %v1758 = vrcp.pop %v1757
  %v1759 = vmul.f32 1.0, %v1758
  %v1760 = vxor.u32 %v1751, 2147483648
  %v1761 = vmul.f32 %v1760, 1.442695
  %v1762 = vpow.pop %v1761
  %v1763 = vadd.f32 %v1762, 1.0
  %v1764 = vrcp.pop %v1763
  %v1765 = vmul.f32 1.0, %v1764
  %v1766 = vtanh.pop %v1752
  %v1767 = vxor.u32 %v1753, 2147483648
  %v1768 = vmul.f32 %v1767, 1.442695
  %v1769 = vpow.pop %v1768
  %v1770 = vadd.f32 %v1769, 1.0
  %v1771 = vrcp.pop %v1770
  %v1772 = vmul.f32 1.0, %v1771
  %v1773 = vmul.f32 %v1765, %v1432
  %v1774 = vmul.f32 %v1759, %v1766
  %v1775 = vadd.f32 %v1773, %v1774
  %v1776 = vtanh.pop %v1775
  %v1777 = vmul.f32 %v1772, %v1776
  %1778 = vmatprep.subr.mxu0 %v601
  %1779 = vmatpush1.msra.mxu0 %v600
  %1780 = vmatprep.subr.mxu0 %v605
  %1781 = vmatpush1.msra.mxu0 %v604
  %1782 = vmatprep.subr.mxu0 %v609
  %1783 = vmatpush1.msra.mxu0 %v608
  %1784 = vmatprep.subr.mxu0 %v613
  %1785 = vmatpush1.msra.mxu0 %v612
  %1786 = vmatprep.subr.mxu0 %v617
  %1787 = vmatpush1.msra.mxu0 %v616
  %1788 = vmatprep.subr.mxu0 %v621
  %1789 = vmatpush1.msra.mxu0 %v620
  %1790 = vmatprep.subr.mxu0 %v625
  %1791 = vmatpush1.msra.mxu0 %v624
  %1792 = vmatprep.subr.mxu0 %v629
  %1793 = vmatpush1.msra.mxu0 %v628
  %1794 = vmatprep.subr.mxu0 %v633
  %1795 = vmatpush1.msra.mxu0 %v632
  %1796 = vmatprep.subr.mxu0 %v637
  %1797 = vmatpush1.msra.mxu0 %v636
  %1798 = vmatprep.subr.mxu0 %v641
  %1799 = vmatpush1.msra.mxu0 %v640
  %1800 = vmatprep.subr.mxu0 %v645
  %1801 = vmatpush1.msra.mxu0 %v644
  %1802 = vmatprep.subr.mxu0 %v649
  %1803 = vmatpush1.msra.mxu0 %v648
  %1804 = vmatprep.subr.mxu0 %v653
  %1805 = vmatpush1.msra.mxu0 %v652
  %1806 = vmatprep.subr.mxu0 %v657
  %1807 = vmatpush1.msra.mxu0 %v656
  %1808 = vmatprep.subr.mxu0 %v661
  %1809 = vmatpush1.msra.mxu0 %v660
  %1810 = vmatprep.subr.mxu0 %v665
  %1811 = vmatpush1.msra.mxu0 %v664
  %1812 = vmatprep.subr.mxu0 %v669
  %1813 = vmatpush1.msra.mxu0 %v668
  %1814 = vmatprep.subr.mxu0 %v673
  %1815 = vmatpush1.msra.mxu0 %v672
  %1816 = vmatprep.subr.mxu0 %v677
  %1817 = vmatpush1.msra.mxu0 %v676
  %1818 = vmatprep.subr.mxu0 %v681
  %1819 = vmatpush1.msra.mxu0 %v680
  %1820 = vmatprep.subr.mxu0 %v685
  %1821 = vmatpush1.msra.mxu0 %v684
  %1822 = vmatprep.subr.mxu0 %v689
  %1823 = vmatpush1.msra.mxu0 %v688
  %1824 = vmatprep.subr.mxu0 %v693
  %1825 = vmatpush1.msra.mxu0 %v692
  %1826 = vmatprep.subr.mxu0 %v697
  %1827 = vmatpush1.msra.mxu0 %v696
  %1828 = vmatprep.subr.mxu0 %v701
  %1829 = vmatpush1.msra.mxu0 %v700
  %1830 = vmatprep.subr.mxu0 %v705
  %1831 = vmatpush1.msra.mxu0 %v704
  %1832 = vmatprep.subr.mxu0 %v709
  %1833 = vmatpush1.msra.mxu0 %v708
  %1834 = vmatprep.subr.mxu0 %v713
  %1835 = vmatpush1.msra.mxu0 %v712
  %1836 = vmatprep.subr.mxu0 %v717
  %1837 = vmatpush1.msra.mxu0 %v716
  %1838 = vmatprep.subr.mxu0 %v721
  %1839 = vmatpush1.msra.mxu0 %v720
  %1840 = vmatprep.subr.mxu0 %v725
  %1841 = vmatpush1.msra.mxu0 %v724
  %1842 = vmatprep.mubr.f32.mxu0 %v1600
  %1843 = vmatmul.mubr.f32.gmra.mrb[0].mxu0 %v1777
  %v1844 = vpop.f32.mrb[0].mxu0
  %v1845 = vadd.f32 %v732, %v1844
  %v1846 = vpop.f32.mrb[0].mxu0
  %v1847 = vadd.f32 %v736, %v1846
  %1848 = vdwg.mxu0
  %1849 = vmatprep.subr.mxu0 %v603
  %1850 = vmatpush1.msra.mxu0 %v602
  %1851 = vmatprep.subr.mxu0 %v607
  %1852 = vmatpush1.msra.mxu0 %v606
  %1853 = vmatprep.subr.mxu0 %v611
  %1854 = vmatpush1.msra.mxu0 %v610
  %1855 = vmatprep.subr.mxu0 %v615
  %1856 = vmatpush1.msra.mxu0 %v614
  %1857 = vmatprep.subr.mxu0 %v619
  %1858 = vmatpush1.msra.mxu0 %v618
  %1859 = vmatprep.subr.mxu0 %v623
  %1860 = vmatpush1.msra.mxu0 %v622
  %1861 = vmatprep.subr.mxu0 %v627
  %1862 = vmatpush1.msra.mxu0 %v626
  %1863 = vmatprep.subr.mxu0 %v631
  %1864 = vmatpush1.msra.mxu0 %v630
  %1865 = vmatprep.subr.mxu0 %v635
  %1866 = vmatpush1.msra.mxu0 %v634
  %1867 = vmatprep.subr.mxu0 %v639
  %1868 = vmatpush1.msra.mxu0 %v638
  %1869 = vmatprep.subr.mxu0 %v643
  %1870 = vmatpush1.msra.mxu0 %v642
  %1871 = vmatprep.subr.mxu0 %v647
  %1872 = vmatpush1.msra.mxu0 %v646
  %1873 = vmatprep.subr.mxu0 %v651
  %1874 = vmatpush1.msra.mxu0 %v650
  %1875 = vmatprep.subr.mxu0 %v655
  %1876 = vmatpush1.msra.mxu0 %v654
  %1877 = vmatprep.subr.mxu0 %v659
  %1878 = vmatpush1.msra.mxu0 %v658
  %1879 = vmatprep.subr.mxu0 %v663
  %1880 = vmatpush1.msra.mxu0 %v662
  %1881 = vmatprep.subr.mxu0 %v667
  %1882 = vmatpush1.msra.mxu0 %v666
  %1883 = vmatprep.subr.mxu0 %v671
  %1884 = vmatpush1.msra.mxu0 %v670
  %1885 = vmatprep.subr.mxu0 %v675
  %1886 = vmatpush1.msra.mxu0 %v674
  %1887 = vmatprep.subr.mxu0 %v679
  %1888 = vmatpush1.msra.mxu0 %v678
  %1889 = vmatprep.subr.mxu0 %v683
  %1890 = vmatpush1.msra.mxu0 %v682
  %1891 = vmatprep.subr.mxu0 %v687
  %1892 = vmatpush1.msra.mxu0 %v686
  %1893 = vmatprep.subr.mxu0 %v691
  %1894 = vmatpush1.msra.mxu0 %v690
  %1895 = vmatprep.subr.mxu0 %v695
  %1896 = vmatpush1.msra.mxu0 %v694
  %1897 = vmatprep.subr.mxu0 %v699
  %1898 = vmatpush1.msra.mxu0 %v698
  %1899 = vmatprep.subr.mxu0 %v703
  %1900 = vmatpush1.msra.mxu0 %v702
  %1901 = vmatprep.subr.mxu0 %v707
  %1902 = vmatpush1.msra.mxu0 %v706
  %1903 = vmatprep.subr.mxu0 %v711
  %1904 = vmatpush1.msra.mxu0 %v710
  %1905 = vmatprep.subr.mxu0 %v715
  %1906 = vmatpush1.msra.mxu0 %v714
  %1907 = vmatprep.subr.mxu0 %v719
  %1908 = vmatpush1.msra.mxu0 %v718
  %1909 = vmatprep.subr.mxu0 %v723
  %1910 = vmatpush1.msra.mxu0 %v722
  %1911 = vmatprep.subr.mxu0 %v727
  %1912 = vmatpush1.msra.mxu0 %v726
  %1913 = vmatprep.mubr.f32.mxu0 %v1600
  %1914 = vmatmul.mubr.f32.gmra.mrb[0].mxu0 %v1777
  %v1915 = vpop.f32.mrb[0].mxu0
  %v1916 = vadd.f32 %v740, %v1915
  %v1917 = vpop.f32.mrb[0].mxu0
  %v1918 = vadd.f32 %v744, %v1917
  %1919 = vdwg.mxu0
  %v1920 = vxor.u32 %v1845, 2147483648
  %v1921 = vmul.f32 %v1920, 1.442695
  %v1922 = vpow.pop %v1921
  %v1923 = vadd.f32 %v1922, 1.0
  %v1924 = vrcp.pop %v1923
  %v1925 = vmul.f32 1.0, %v1924
  %v1926 = vxor.u32 %v1847, 2147483648
  %v1927 = vmul.f32 %v1926, 1.442695
  %v1928 = vpow.pop %v1927
  %v1929 = vadd.f32 %v1928, 1.0
  %v1930 = vrcp.pop %v1929
  %v1931 = vmul.f32 1.0, %v1930
  %v1932 = vtanh.pop %v1916
  %v1933 = vxor.u32 %v1918, 2147483648
  %v1934 = vmul.f32 %v1933, 1.442695
  %v1935 = vpow.pop %v1934
  %v1936 = vadd.f32 %v1935, 1.0
  %v1937 = vrcp.pop %v1936
  %v1938 = vmul.f32 1.0, %v1937
  %v1939 = vmul.f32 %v1931, %v1598
  %v1940 = vmul.f32 %v1925, %v1932
  %v1941 = vadd.f32 %v1939, %v1940
  %v1942 = vtanh.pop %v1941
  %v1943 = vmul.f32 %v1938, %v1942
  %s1944 = smul.u32 4, 4
  %s1945 = smul.addr %s1944, 8
  %s1946 = scalar_lea.vmem [#allocation2], %s1945
  %v1947 = vld [vmem:[%s1946] sm:$0xff]
  %v1948 = vld [vmem:[%s1946 + $0x8] sm:$0xff]
  %v1949 = vld [vmem:[%s1946 + $0x10] sm:$0xff]
  %v1950 = vld [vmem:[%s1946 + $0x18] sm:$0xff]
  %1951 = vmatprep.subr.mxu0 %v367
  %1952 = vmatpush1.msra.mxu0 %v366
  %1953 = vmatprep.subr.mxu0 %v371
  %1954 = vmatpush1.msra.mxu0 %v370
  %1955 = vmatprep.subr.mxu0 %v375
  %1956 = vmatpush1.msra.mxu0 %v374
  %1957 = vmatprep.subr.mxu0 %v379
  %1958 = vmatpush1.msra.mxu0 %v378
  %1959 = vmatprep.subr.mxu0 %v383
  %1960 = vmatpush1.msra.mxu0 %v382
  %1961 = vmatprep.subr.mxu0 %v387
  %1962 = vmatpush1.msra.mxu0 %v386
  %1963 = vmatprep.subr.mxu0 %v391
  %1964 = vmatpush1.msra.mxu0 %v390
  %1965 = vmatprep.subr.mxu0 %v395
  %1966 = vmatpush1.msra.mxu0 %v394
  %1967 = vmatprep.subr.mxu0 %v399
  %1968 = vmatpush1.msra.mxu0 %v398
  %1969 = vmatprep.subr.mxu0 %v403
  %1970 = vmatpush1.msra.mxu0 %v402
  %1971 = vmatprep.subr.mxu0 %v407
  %1972 = vmatpush1.msra.mxu0 %v406
  %1973 = vmatprep.subr.mxu0 %v411
  %1974 = vmatpush1.msra.mxu0 %v410
  %1975 = vmatprep.subr.mxu0 %v415
  %1976 = vmatpush1.msra.mxu0 %v414
  %1977 = vmatprep.subr.mxu0 %v419
  %1978 = vmatpush1.msra.mxu0 %v418
  %1979 = vmatprep.subr.mxu0 %v423
  %1980 = vmatpush1.msra.mxu0 %v422
  %1981 = vmatprep.subr.mxu0 %v427
  %1982 = vmatpush1.msra.mxu0 %v426
  %1983 = vmatprep.subr.mxu0 0.0
  %1984 = vmatpush1.msra.mxu0 0.0
  %1985 = vmatprep.subr.mxu0 0.0
  %1986 = vmatpush1.msra.mxu0 0.0
  %1987 = vmatprep.subr.mxu0 0.0
  %1988 = vmatpush1.msra.mxu0 0.0
  %1989 = vmatprep.subr.mxu0 0.0
  %1990 = vmatpush1.msra.mxu0 0.0
  %1991 = vmatprep.subr.mxu0 0.0
  %1992 = vmatpush1.msra.mxu0 0.0
  %1993 = vmatprep.subr.mxu0 0.0
  %1994 = vmatpush1.msra.mxu0 0.0
  %1995 = vmatprep.subr.mxu0 0.0
  %1996 = vmatpush1.msra.mxu0 0.0
  %1997 = vmatprep.subr.mxu0 0.0
  %1998 = vmatpush1.msra.mxu0 0.0
  %1999 = vmatprep.subr.mxu0 0.0
  %2000 = vmatpush1.msra.mxu0 0.0
  %2001 = vmatprep.subr.mxu0 0.0
  %2002 = vmatpush1.msra.mxu0 0.0
  %2003 = vmatprep.subr.mxu0 0.0
  %2004 = vmatpush1.msra.mxu0 0.0
  %2005 = vmatprep.subr.mxu0 0.0
  %2006 = vmatpush1.msra.mxu0 0.0
  %2007 = vmatprep.subr.mxu0 0.0
  %2008 = vmatpush1.msra.mxu0 0.0
  %2009 = vmatprep.subr.mxu0 0.0
  %2010 = vmatpush1.msra.mxu0 0.0
  %2011 = vmatprep.subr.mxu0 0.0
  %2012 = vmatpush1.msra.mxu0 0.0
  %2013 = vmatprep.subr.mxu0 0.0
  %2014 = vmatpush1.msra.mxu0 0.0
  %2015 = vmatprep.mubr.f32.mxu0 0.0
  %2016 = vmatmul.mubr.f32.gmra.mrb[0].mxu0 %v1777
  %v2017 = vpop.f32.mrb[0].mxu0
  %v2018 = vadd.f32 0.0, %v2017
  %v2019 = vpop.f32.mrb[0].mxu0
  %v2020 = vadd.f32 0.0, %v2019
  %2021 = vdwg.mxu0
  %2022 = vmatprep.subr.mxu0 %v369
  %2023 = vmatpush1.msra.mxu0 %v368
  %2024 = vmatprep.subr.mxu0 %v373
  %2025 = vmatpush1.msra.mxu0 %v372
  %2026 = vmatprep.subr.mxu0 %v377
  %2027 = vmatpush1.msra.mxu0 %v376
  %2028 = vmatprep.subr.mxu0 %v381
  %2029 = vmatpush1.msra.mxu0 %v380
  %2030 = vmatprep.subr.mxu0 %v385
  %2031 = vmatpush1.msra.mxu0 %v384
  %2032 = vmatprep.subr.mxu0 %v389
  %2033 = vmatpush1.msra.mxu0 %v388
  %2034 = vmatprep.subr.mxu0 %v393
  %2035 = vmatpush1.msra.mxu0 %v392
  %2036 = vmatprep.subr.mxu0 %v397
  %2037 = vmatpush1.msra.mxu0 %v396
  %2038 = vmatprep.subr.mxu0 %v401
  %2039 = vmatpush1.msra.mxu0 %v400
  %2040 = vmatprep.subr.mxu0 %v405
  %2041 = vmatpush1.msra.mxu0 %v404
  %2042 = vmatprep.subr.mxu0 %v409
  %2043 = vmatpush1.msra.mxu0 %v408
  %2044 = vmatprep.subr.mxu0 %v413
  %2045 = vmatpush1.msra.mxu0 %v412
  %2046 = vmatprep.subr.mxu0 %v417
  %2047 = vmatpush1.msra.mxu0 %v416
  %2048 = vmatprep.subr.mxu0 %v421
  %2049 = vmatpush1.msra.mxu0 %v420
  %2050 = vmatprep.subr.mxu0 %v425
  %2051 = vmatpush1.msra.mxu0 %v424
  %2052 = vmatprep.subr.mxu0 %v429
  %2053 = vmatpush1.msra.mxu0 %v428
  %2054 = vmatprep.subr.mxu0 0.0
  %2055 = vmatpush1.msra.mxu0 0.0
  %2056 = vmatprep.subr.mxu0 0.0
  %2057 = vmatpush1.msra.mxu0 0.0
  %2058 = vmatprep.subr.mxu0 0.0
  %2059 = vmatpush1.msra.mxu0 0.0
  %2060 = vmatprep.subr.mxu0 0.0
  %2061 = vmatpush1.msra.mxu0 0.0
  %2062 = vmatprep.subr.mxu0 0.0
  %2063 = vmatpush1.msra.mxu0 0.0
  %2064 = vmatprep.subr.mxu0 0.0
  %2065 = vmatpush1.msra.mxu0 0.0
  %2066 = vmatprep.subr.mxu0 0.0
  %2067 = vmatpush1.msra.mxu0 0.0
  %2068 = vmatprep.subr.mxu0 0.0
  %2069 = vmatpush1.msra.mxu0 0.0
  %2070 = vmatprep.subr.mxu0 0.0
  %2071 = vmatpush1.msra.mxu0 0.0
  %2072 = vmatprep.subr.mxu0 0.0
  %2073 = vmatpush1.msra.mxu0 0.0
  %2074 = vmatprep.subr.mxu0 0.0
  %2075 = vmatpush1.msra.mxu0 0.0
  %2076 = vmatprep.subr.mxu0 0.0
  %2077 = vmatpush1.msra.mxu0 0.0
  %2078 = vmatprep.subr.mxu0 0.0
  %2079 = vmatpush1.msra.mxu0 0.0
  %2080 = vmatprep.subr.mxu0 0.0
  %2081 = vmatpush1.msra.mxu0 0.0
  %2082 = vmatprep.subr.mxu0 0.0
  %2083 = vmatpush1.msra.mxu0 0.0
  %2084 = vmatprep.subr.mxu0 0.0
  %2085 = vmatpush1.msra.mxu0 0.0
  %2086 = vmatprep.mubr.f32.mxu0 0.0
  %2087 = vmatmul.mubr.f32.gmra.mrb[0].mxu0 %v1777
  %v2088 = vpop.f32.mrb[0].mxu0
  %v2089 = vadd.f32 0.0, %v2088
  %v2090 = vpop.f32.mrb[0].mxu0
  %v2091 = vadd.f32 0.0, %v2090
  %2092 = vdwg.mxu0
  %v2093 = vadd.f32 %v1947, %v2018
  %v2094 = vadd.f32 %v1948, %v2020
  %v2095 = vadd.f32 %v1949, %v2089
  %v2096 = vadd.f32 %v1950, %v2091
  %v2097 = vxor.u32 %v2093, 2147483648
  %v2098 = vmul.f32 %v2097, 1.442695
  %v2099 = vpow.pop %v2098
  %v2100 = vadd.f32 %v2099, 1.0
  %v2101 = vrcp.pop %v2100
  %v2102 = vmul.f32 1.0, %v2101
  %v2103 = vxor.u32 %v2094, 2147483648
  %v2104 = vmul.f32 %v2103, 1.442695
  %v2105 = vpow.pop %v2104
  %v2106 = vadd.f32 %v2105, 1.0
  %v2107 = vrcp.pop %v2106
  %v2108 = vmul.f32 1.0, %v2107
  %v2109 = vtanh.pop %v2095
  %v2110 = vxor.u32 %v2096, 2147483648
  %v2111 = vmul.f32 %v2110, 1.442695
  %v2112 = vpow.pop %v2111
  %v2113 = vadd.f32 %v2112, 1.0
  %v2114 = vrcp.pop %v2113
  %v2115 = vmul.f32 1.0, %v2114
  %v2116 = vmul.f32 %v2108, %v1775
  %v2117 = vmul.f32 %v2102, %v2109
  %v2118 = vadd.f32 %v2116, %v2117
  %v2119 = vtanh.pop %v2118
  %v2120 = vmul.f32 %v2115, %v2119
  %2121 = vmatprep.subr.mxu0 %v601
  %2122 = vmatpush1.msra.mxu0 %v600
  %2123 = vmatprep.subr.mxu0 %v605
  %2124 = vmatpush1.msra.mxu0 %v604
  %2125 = vmatprep.subr.mxu0 %v609
  %2126 = vmatpush1.msra.mxu0 %v608
  %2127 = vmatprep.subr.mxu0 %v613
  %2128 = vmatpush1.msra.mxu0 %v612
  %2129 = vmatprep.subr.mxu0 %v617
  %2130 = vmatpush1.msra.mxu0 %v616
  %2131 = vmatprep.subr.mxu0 %v621
  %2132 = vmatpush1.msra.mxu0 %v620
  %2133 = vmatprep.subr.mxu0 %v625
  %2134 = vmatpush1.msra.mxu0 %v624
  %2135 = vmatprep.subr.mxu0 %v629
  %2136 = vmatpush1.msra.mxu0 %v628
  %2137 = vmatprep.subr.mxu0 %v633
  %2138 = vmatpush1.msra.mxu0 %v632
  %2139 = vmatprep.subr.mxu0 %v637
  %2140 = vmatpush1.msra.mxu0 %v636
  %2141 = vmatprep.subr.mxu0 %v641
  %2142 = vmatpush1.msra.mxu0 %v640
  %2143 = vmatprep.subr.mxu0 %v645
  %2144 = vmatpush1.msra.mxu0 %v644
  %2145 = vmatprep.subr.mxu0 %v649
  %2146 = vmatpush1.msra.mxu0 %v648
  %2147 = vmatprep.subr.mxu0 %v653
  %2148 = vmatpush1.msra.mxu0 %v652
  %2149 = vmatprep.subr.mxu0 %v657
  %2150 = vmatpush1.msra.mxu0 %v656
  %2151 = vmatprep.subr.mxu0 %v661
  %2152 = vmatpush1.msra.mxu0 %v660
  %2153 = vmatprep.subr.mxu0 %v665
  %2154 = vmatpush1.msra.mxu0 %v664
  %2155 = vmatprep.subr.mxu0 %v669
  %2156 = vmatpush1.msra.mxu0 %v668
  %2157 = vmatprep.subr.mxu0 %v673
  %2158 = vmatpush1.msra.mxu0 %v672
  %2159 = vmatprep.subr.mxu0 %v677
  %2160 = vmatpush1.msra.mxu0 %v676
  %2161 = vmatprep.subr.mxu0 %v681
  %2162 = vmatpush1.msra.mxu0 %v680
  %2163 = vmatprep.subr.mxu0 %v685
  %2164 = vmatpush1.msra.mxu0 %v684
  %2165 = vmatprep.subr.mxu0 %v689
  %2166 = vmatpush1.msra.mxu0 %v688
  %2167 = vmatprep.subr.mxu0 %v693
  %2168 = vmatpush1.msra.mxu0 %v692
  %2169 = vmatprep.subr.mxu0 %v697
  %2170 = vmatpush1.msra.mxu0 %v696
  %2171 = vmatprep.subr.mxu0 %v701
  %2172 = vmatpush1.msra.mxu0 %v700
  %2173 = vmatprep.subr.mxu0 %v705
  %2174 = vmatpush1.msra.mxu0 %v704
  %2175 = vmatprep.subr.mxu0 %v709
  %2176 = vmatpush1.msra.mxu0 %v708
  %2177 = vmatprep.subr.mxu0 %v713
  %2178 = vmatpush1.msra.mxu0 %v712
  %2179 = vmatprep.subr.mxu0 %v717
  %2180 = vmatpush1.msra.mxu0 %v716
  %2181 = vmatprep.subr.mxu0 %v721
  %2182 = vmatpush1.msra.mxu0 %v720
  %2183 = vmatprep.subr.mxu0 %v725
  %2184 = vmatpush1.msra.mxu0 %v724
  %2185 = vmatprep.mubr.f32.mxu0 %v1943
  %2186 = vmatmul.mubr.f32.gmra.mrb[0].mxu0 %v2120
  %v2187 = vpop.f32.mrb[0].mxu0
  %v2188 = vadd.f32 %v732, %v2187
  %v2189 = vpop.f32.mrb[0].mxu0
  %v2190 = vadd.f32 %v736, %v2189
  %2191 = vdwg.mxu0
  %2192 = vmatprep.subr.mxu0 %v603
  %2193 = vmatpush1.msra.mxu0 %v602
  %2194 = vmatprep.subr.mxu0 %v607
  %2195 = vmatpush1.msra.mxu0 %v606
  %2196 = vmatprep.subr.mxu0 %v611
  %2197 = vmatpush1.msra.mxu0 %v610
  %2198 = vmatprep.subr.mxu0 %v615
  %2199 = vmatpush1.msra.mxu0 %v614
  %2200 = vmatprep.subr.mxu0 %v619
  %2201 = vmatpush1.msra.mxu0 %v618
  %2202 = vmatprep.subr.mxu0 %v623
  %2203 = vmatpush1.msra.mxu0 %v622
  %2204 = vmatprep.subr.mxu0 %v627
  %2205 = vmatpush1.msra.mxu0 %v626
  %2206 = vmatprep.subr.mxu0 %v631
  %2207 = vmatpush1.msra.mxu0 %v630
  %2208 = vmatprep.subr.mxu0 %v635
  %2209 = vmatpush1.msra.mxu0 %v634
  %2210 = vmatprep.subr.mxu0 %v639
  %2211 = vmatpush1.msra.mxu0 %v638
  %2212 = vmatprep.subr.mxu0 %v643
  %2213 = vmatpush1.msra.mxu0 %v642
  %2214 = vmatprep.subr.mxu0 %v647
  %2215 = vmatpush1.msra.mxu0 %v646
  %2216 = vmatprep.subr.mxu0 %v651
  %2217 = vmatpush1.msra.mxu0 %v650
  %2218 = vmatprep.subr.mxu0 %v655
  %2219 = vmatpush1.msra.mxu0 %v654
  %2220 = vmatprep.subr.mxu0 %v659
  %2221 = vmatpush1.msra.mxu0 %v658
  %2222 = vmatprep.subr.mxu0 %v663
  %2223 = vmatpush1.msra.mxu0 %v662
  %2224 = vmatprep.subr.mxu0 %v667
  %2225 = vmatpush1.msra.mxu0 %v666
  %2226 = vmatprep.subr.mxu0 %v671
  %2227 = vmatpush1.msra.mxu0 %v670
  %2228 = vmatprep.subr.mxu0 %v675
  %2229 = vmatpush1.msra.mxu0 %v674
  %2230 = vmatprep.subr.mxu0 %v679
  %2231 = vmatpush1.msra.mxu0 %v678
  %2232 = vmatprep.subr.mxu0 %v683
  %2233 = vmatpush1.msra.mxu0 %v682
  %2234 = vmatprep.subr.mxu0 %v687
  %2235 = vmatpush1.msra.mxu0 %v686
  %2236 = vmatprep.subr.mxu0 %v691
  %2237 = vmatpush1.msra.mxu0 %v690
  %2238 = vmatprep.subr.mxu0 %v695
  %2239 = vmatpush1.msra.mxu0 %v694
  %2240 = vmatprep.subr.mxu0 %v699
  %2241 = vmatpush1.msra.mxu0 %v698
  %2242 = vmatprep.subr.mxu0 %v703
  %2243 = vmatpush1.msra.mxu0 %v702
  %2244 = vmatprep.subr.mxu0 %v707
  %2245 = vmatpush1.msra.mxu0 %v706
  %2246 = vmatprep.subr.mxu0 %v711
  %2247 = vmatpush1.msra.mxu0 %v710
  %2248 = vmatprep.subr.mxu0 %v715
  %2249 = vmatpush1.msra.mxu0 %v714
  %2250 = vmatprep.subr.mxu0 %v719
  %2251 = vmatpush1.msra.mxu0 %v718
  %2252 = vmatprep.subr.mxu0 %v723
  %2253 = vmatpush1.msra.mxu0 %v722
  %2254 = vmatprep.subr.mxu0 %v727
  %2255 = vmatpush1.msra.mxu0 %v726
  %2256 = vmatprep.mubr.f32.mxu0 %v1943
  %2257 = vmatmul.mubr.f32.gmra.mrb[0].mxu0 %v2120
  %v2258 = vpop.f32.mrb[0].mxu0
  %v2259 = vadd.f32 %v740, %v2258
  %v2260 = vpop.f32.mrb[0].mxu0
  %v2261 = vadd.f32 %v744, %v2260
  %2262 = vdwg.mxu0
  %v2263 = vxor.u32 %v2188, 2147483648
  %v2264 = vmul.f32 %v2263, 1.442695
  %v2265 = vpow.pop %v2264
  %v2266 = vadd.f32 %v2265, 1.0
  %v2267 = vrcp.pop %v2266
  %v2268 = vmul.f32 1.0, %v2267
  %v2269 = vxor.u32 %v2190, 2147483648
  %v2270 = vmul.f32 %v2269, 1.442695
  %v2271 = vpow.pop %v2270
  %v2272 = vadd.f32 %v2271, 1.0
  %v2273 = vrcp.pop %v2272
  %v2274 = vmul.f32 1.0, %v2273
  %v2275 = vtanh.pop %v2259
  %v2276 = vxor.u32 %v2261, 2147483648
  %v2277 = vmul.f32 %v2276, 1.442695
  %v2278 = vpow.pop %v2277
  %v2279 = vadd.f32 %v2278, 1.0
  %v2280 = vrcp.pop %v2279
  %v2281 = vmul.f32 1.0, %v2280
  %v2282 = vmul.f32 %v2274, %v1941
  %v2283 = vmul.f32 %v2268, %v2275
  %v2284 = vadd.f32 %v2282, %v2283
  %v2285 = vtanh.pop %v2284
  %v2286 = vmul.f32 %v2281, %v2285
  %s2287 = smul.u32 5, 4
  %s2288 = smul.addr %s2287, 8
  %s2289 = scalar_lea.vmem [#allocation2], %s2288
  %v2290 = vld [vmem:[%s2289] sm:$0xff]
  %v2291 = vld [vmem:[%s2289 + $0x8] sm:$0xff]
  %v2292 = vld [vmem:[%s2289 + $0x10] sm:$0xff]
  %v2293 = vld [vmem:[%s2289 + $0x18] sm:$0xff]
  %2294 = vmatprep.subr.mxu0 %v367
  %2295 = vmatpush1.msra.mxu0 %v366
  %2296 = vmatprep.subr.mxu0 %v371
  %2297 = vmatpush1.msra.mxu0 %v370
  %2298 = vmatprep.subr.mxu0 %v375
  %2299 = vmatpush1.msra.mxu0 %v374
  %2300 = vmatprep.subr.mxu0 %v379
  %2301 = vmatpush1.msra.mxu0 %v378
  %2302 = vmatprep.subr.mxu0 %v383
  %2303 = vmatpush1.msra.mxu0 %v382
  %2304 = vmatprep.subr.mxu0 %v387
  %2305 = vmatpush1.msra.mxu0 %v386
  %2306 = vmatprep.subr.mxu0 %v391
  %2307 = vmatpush1.msra.mxu0 %v390
  %2308 = vmatprep.subr.mxu0 %v395
  %2309 = vmatpush1.msra.mxu0 %v394
  %2310 = vmatprep.subr.mxu0 %v399
  %2311 = vmatpush1.msra.mxu0 %v398
  %2312 = vmatprep.subr.mxu0 %v403
  %2313 = vmatpush1.msra.mxu0 %v402
  %2314 = vmatprep.subr.mxu0 %v407
  %2315 = vmatpush1.msra.mxu0 %v406
  %2316 = vmatprep.subr.mxu0 %v411
  %2317 = vmatpush1.msra.mxu0 %v410
  %2318 = vmatprep.subr.mxu0 %v415
  %2319 = vmatpush1.msra.mxu0 %v414
  %2320 = vmatprep.subr.mxu0 %v419
  %2321 = vmatpush1.msra.mxu0 %v418
  %2322 = vmatprep.subr.mxu0 %v423
  %2323 = vmatpush1.msra.mxu0 %v422
  %2324 = vmatprep.subr.mxu0 %v427
  %2325 = vmatpush1.msra.mxu0 %v426
  %2326 = vmatprep.subr.mxu0 0.0
  %2327 = vmatpush1.msra.mxu0 0.0
  %2328 = vmatprep.subr.mxu0 0.0
  %2329 = vmatpush1.msra.mxu0 0.0
  %2330 = vmatprep.subr.mxu0 0.0
  %2331 = vmatpush1.msra.mxu0 0.0
  %2332 = vmatprep.subr.mxu0 0.0
  %2333 = vmatpush1.msra.mxu0 0.0
  %2334 = vmatprep.subr.mxu0 0.0
  %2335 = vmatpush1.msra.mxu0 0.0
  %2336 = vmatprep.subr.mxu0 0.0
  %2337 = vmatpush1.msra.mxu0 0.0
  %2338 = vmatprep.subr.mxu0 0.0
  %2339 = vmatpush1.msra.mxu0 0.0
  %2340 = vmatprep.subr.mxu0 0.0
  %2341 = vmatpush1.msra.mxu0 0.0
  %2342 = vmatprep.subr.mxu0 0.0
  %2343 = vmatpush1.msra.mxu0 0.0
  %2344 = vmatprep.subr.mxu0 0.0
  %2345 = vmatpush1.msra.mxu0 0.0
  %2346 = vmatprep.subr.mxu0 0.0
  %2347 = vmatpush1.msra.mxu0 0.0
  %2348 = vmatprep.subr.mxu0 0.0
  %2349 = vmatpush1.msra.mxu0 0.0
  %2350 = vmatprep.subr.mxu0 0.0
  %2351 = vmatpush1.msra.mxu0 0.0
  %2352 = vmatprep.subr.mxu0 0.0
  %2353 = vmatpush1.msra.mxu0 0.0
  %2354 = vmatprep.subr.mxu0 0.0
  %2355 = vmatpush1.msra.mxu0 0.0
  %2356 = vmatprep.subr.mxu0 0.0
  %2357 = vmatpush1.msra.mxu0 0.0
  %2358 = vmatprep.mubr.f32.mxu0 0.0
  %2359 = vmatmul.mubr.f32.gmra.mrb[0].mxu0 %v2120
  %v2360 = vpop.f32.mrb[0].mxu0
  %v2361 = vadd.f32 0.0, %v2360
  %v2362 = vpop.f32.mrb[0].mxu0
  %v2363 = vadd.f32 0.0, %v2362
  %2364 = vdwg.mxu0
  %2365 = vmatprep.subr.mxu0 %v369
  %2366 = vmatpush1.msra.mxu0 %v368
  %2367 = vmatprep.subr.mxu0 %v373
  %2368 = vmatpush1.msra.mxu0 %v372
  %2369 = vmatprep.subr.mxu0 %v377
  %2370 = vmatpush1.msra.mxu0 %v376
  %2371 = vmatprep.subr.mxu0 %v381
  %2372 = vmatpush1.msra.mxu0 %v380
  %2373 = vmatprep.subr.mxu0 %v385
  %2374 = vmatpush1.msra.mxu0 %v384
  %2375 = vmatprep.subr.mxu0 %v389
  %2376 = vmatpush1.msra.mxu0 %v388
  %2377 = vmatprep.subr.mxu0 %v393
  %2378 = vmatpush1.msra.mxu0 %v392
  %2379 = vmatprep.subr.mxu0 %v397
  %2380 = vmatpush1.msra.mxu0 %v396
  %2381 = vmatprep.subr.mxu0 %v401
  %2382 = vmatpush1.msra.mxu0 %v400
  %2383 = vmatprep.subr.mxu0 %v405
  %2384 = vmatpush1.msra.mxu0 %v404
  %2385 = vmatprep.subr.mxu0 %v409
  %2386 = vmatpush1.msra.mxu0 %v408
  %2387 = vmatprep.subr.mxu0 %v413
  %2388 = vmatpush1.msra.mxu0 %v412
  %2389 = vmatprep.subr.mxu0 %v417
  %2390 = vmatpush1.msra.mxu0 %v416
  %2391 = vmatprep.subr.mxu0 %v421
  %2392 = vmatpush1.msra.mxu0 %v420
  %2393 = vmatprep.subr.mxu0 %v425
  %2394 = vmatpush1.msra.mxu0 %v424
  %2395 = vmatprep.subr.mxu0 %v429
  %2396 = vmatpush1.msra.mxu0 %v428
  %2397 = vmatprep.subr.mxu0 0.0
  %2398 = vmatpush1.msra.mxu0 0.0
  %2399 = vmatprep.subr.mxu0 0.0
  %2400 = vmatpush1.msra.mxu0 0.0
  %2401 = vmatprep.subr.mxu0 0.0
  %2402 = vmatpush1.msra.mxu0 0.0
  %2403 = vmatprep.subr.mxu0 0.0
  %2404 = vmatpush1.msra.mxu0 0.0
  %2405 = vmatprep.subr.mxu0 0.0
  %2406 = vmatpush1.msra.mxu0 0.0
  %2407 = vmatprep.subr.mxu0 0.0
  %2408 = vmatpush1.msra.mxu0 0.0
  %2409 = vmatprep.subr.mxu0 0.0
  %2410 = vmatpush1.msra.mxu0 0.0
  %2411 = vmatprep.subr.mxu0 0.0
  %2412 = vmatpush1.msra.mxu0 0.0
  %2413 = vmatprep.subr.mxu0 0.0
  %2414 = vmatpush1.msra.mxu0 0.0
  %2415 = vmatprep.subr.mxu0 0.0
  %2416 = vmatpush1.msra.mxu0 0.0
  %2417 = vmatprep.subr.mxu0 0.0
  %2418 = vmatpush1.msra.mxu0 0.0
  %2419 = vmatprep.subr.mxu0 0.0
  %2420 = vmatpush1.msra.mxu0 0.0
  %2421 = vmatprep.subr.mxu0 0.0
  %2422 = vmatpush1.msra.mxu0 0.0
  %2423 = vmatprep.subr.mxu0 0.0
  %2424 = vmatpush1.msra.mxu0 0.0
  %2425 = vmatprep.subr.mxu0 0.0
  %2426 = vmatpush1.msra.mxu0 0.0
  %2427 = vmatprep.subr.mxu0 0.0
  %2428 = vmatpush1.msra.mxu0 0.0
  %2429 = vmatprep.mubr.f32.mxu0 0.0
  %2430 = vmatmul.mubr.f32.gmra.mrb[0].mxu0 %v2120
  %v2431 = vpop.f32.mrb[0].mxu0
  %v2432 = vadd.f32 0.0, %v2431
  %v2433 = vpop.f32.mrb[0].mxu0
  %v2434 = vadd.f32 0.0, %v2433
  %2435 = vdwg.mxu0
  %v2436 = vadd.f32 %v2290, %v2361
  %v2437 = vadd.f32 %v2291, %v2363
  %v2438 = vadd.f32 %v2292, %v2432
  %v2439 = vadd.f32 %v2293, %v2434
  %v2440 = vxor.u32 %v2436, 2147483648
  %v2441 = vmul.f32 %v2440, 1.442695
  %v2442 = vpow.pop %v2441
  %v2443 = vadd.f32 %v2442, 1.0
  %v2444 = vrcp.pop %v2443
  %v2445 = vmul.f32 1.0, %v2444
  %v2446 = vxor.u32 %v2437, 2147483648
  %v2447 = vmul.f32 %v2446, 1.442695
  %v2448 = vpow.pop %v2447
  %v2449 = vadd.f32 %v2448, 1.0
  %v2450 = vrcp.pop %v2449
  %v2451 = vmul.f32 1.0, %v2450
  %v2452 = vtanh.pop %v2438
  %v2453 = vxor.u32 %v2439, 2147483648
  %v2454 = vmul.f32 %v2453, 1.442695
  %v2455 = vpow.pop %v2454
  %v2456 = vadd.f32 %v2455, 1.0
  %v2457 = vrcp.pop %v2456
  %v2458 = vmul.f32 1.0, %v2457
  %v2459 = vmul.f32 %v2451, %v2118
  %v2460 = vmul.f32 %v2445, %v2452
  %v2461 = vadd.f32 %v2459, %v2460
  %v2462 = vtanh.pop %v2461
  %v2463 = vmul.f32 %v2458, %v2462
  %2464 = vmatprep.subr.mxu0 %v601
  %2465 = vmatpush1.msra.mxu0 %v600
  %2466 = vmatprep.subr.mxu0 %v605
  %2467 = vmatpush1.msra.mxu0 %v604
  %2468 = vmatprep.subr.mxu0 %v609
  %2469 = vmatpush1.msra.mxu0 %v608
  %2470 = vmatprep.subr.mxu0 %v613
  %2471 = vmatpush1.msra.mxu0 %v612
  %2472 = vmatprep.subr.mxu0 %v617
  %2473 = vmatpush1.msra.mxu0 %v616
  %2474 = vmatprep.subr.mxu0 %v621
  %2475 = vmatpush1.msra.mxu0 %v620
  %2476 = vmatprep.subr.mxu0 %v625
  %2477 = vmatpush1.msra.mxu0 %v624
  %2478 = vmatprep.subr.mxu0 %v629
  %2479 = vmatpush1.msra.mxu0 %v628
  %2480 = vmatprep.subr.mxu0 %v633
  %2481 = vmatpush1.msra.mxu0 %v632
  %2482 = vmatprep.subr.mxu0 %v637
  %2483 = vmatpush1.msra.mxu0 %v636
  %2484 = vmatprep.subr.mxu0 %v641
  %2485 = vmatpush1.msra.mxu0 %v640
  %2486 = vmatprep.subr.mxu0 %v645
  %2487 = vmatpush1.msra.mxu0 %v644
  %2488 = vmatprep.subr.mxu0 %v649
  %2489 = vmatpush1.msra.mxu0 %v648
  %2490 = vmatprep.subr.mxu0 %v653
  %2491 = vmatpush1.msra.mxu0 %v652
  %2492 = vmatprep.subr.mxu0 %v657
  %2493 = vmatpush1.msra.mxu0 %v656
  %2494 = vmatprep.subr.mxu0 %v661
  %2495 = vmatpush1.msra.mxu0 %v660
  %2496 = vmatprep.subr.mxu0 %v665
  %2497 = vmatpush1.msra.mxu0 %v664
  %2498 = vmatprep.subr.mxu0 %v669
  %2499 = vmatpush1.msra.mxu0 %v668
  %2500 = vmatprep.subr.mxu0 %v673
  %2501 = vmatpush1.msra.mxu0 %v672
  %2502 = vmatprep.subr.mxu0 %v677
  %2503 = vmatpush1.msra.mxu0 %v676
  %2504 = vmatprep.subr.mxu0 %v681
  %2505 = vmatpush1.msra.mxu0 %v680
  %2506 = vmatprep.subr.mxu0 %v685
  %2507 = vmatpush1.msra.mxu0 %v684
  %2508 = vmatprep.subr.mxu0 %v689
  %2509 = vmatpush1.msra.mxu0 %v688
  %2510 = vmatprep.subr.mxu0 %v693
  %2511 = vmatpush1.msra.mxu0 %v692
  %2512 = vmatprep.subr.mxu0 %v697
  %2513 = vmatpush1.msra.mxu0 %v696
  %2514 = vmatprep.subr.mxu0 %v701
  %2515 = vmatpush1.msra.mxu0 %v700
  %2516 = vmatprep.subr.mxu0 %v705
  %2517 = vmatpush1.msra.mxu0 %v704
  %2518 = vmatprep.subr.mxu0 %v709
  %2519 = vmatpush1.msra.mxu0 %v708
  %2520 = vmatprep.subr.mxu0 %v713
  %2521 = vmatpush1.msra.mxu0 %v712
  %2522 = vmatprep.subr.mxu0 %v717
  %2523 = vmatpush1.msra.mxu0 %v716
  %2524 = vmatprep.subr.mxu0 %v721
  %2525 = vmatpush1.msra.mxu0 %v720
  %2526 = vmatprep.subr.mxu0 %v725
  %2527 = vmatpush1.msra.mxu0 %v724
  %2528 = vmatprep.mubr.f32.mxu0 %v2286
  %2529 = vmatmul.mubr.f32.gmra.mrb[0].mxu0 %v2463
  %v2530 = vpop.f32.mrb[0].mxu0
  %v2531 = vadd.f32 %v732, %v2530
  %v2532 = vpop.f32.mrb[0].mxu0
  %v2533 = vadd.f32 %v736, %v2532
  %2534 = vdwg.mxu0
  %2535 = vmatprep.subr.mxu0 %v603
  %2536 = vmatpush1.msra.mxu0 %v602
  %2537 = vmatprep.subr.mxu0 %v607
  %2538 = vmatpush1.msra.mxu0 %v606
  %2539 = vmatprep.subr.mxu0 %v611
  %2540 = vmatpush1.msra.mxu0 %v610
  %2541 = vmatprep.subr.mxu0 %v615
  %2542 = vmatpush1.msra.mxu0 %v614
  %2543 = vmatprep.subr.mxu0 %v619
  %2544 = vmatpush1.msra.mxu0 %v618
  %2545 = vmatprep.subr.mxu0 %v623
  %2546 = vmatpush1.msra.mxu0 %v622
  %2547 = vmatprep.subr.mxu0 %v627
  %2548 = vmatpush1.msra.mxu0 %v626
  %2549 = vmatprep.subr.mxu0 %v631
  %2550 = vmatpush1.msra.mxu0 %v630
  %2551 = vmatprep.subr.mxu0 %v635
  %2552 = vmatpush1.msra.mxu0 %v634
  %2553 = vmatprep.subr.mxu0 %v639
  %2554 = vmatpush1.msra.mxu0 %v638
  %2555 = vmatprep.subr.mxu0 %v643
  %2556 = vmatpush1.msra.mxu0 %v642
  %2557 = vmatprep.subr.mxu0 %v647
  %2558 = vmatpush1.msra.mxu0 %v646
  %2559 = vmatprep.subr.mxu0 %v651
  %2560 = vmatpush1.msra.mxu0 %v650
  %2561 = vmatprep.subr.mxu0 %v655
  %2562 = vmatpush1.msra.mxu0 %v654
  %2563 = vmatprep.subr.mxu0 %v659
  %2564 = vmatpush1.msra.mxu0 %v658
  %2565 = vmatprep.subr.mxu0 %v663
  %2566 = vmatpush1.msra.mxu0 %v662
  %2567 = vmatprep.subr.mxu0 %v667
  %2568 = vmatpush1.msra.mxu0 %v666
  %2569 = vmatprep.subr.mxu0 %v671
  %2570 = vmatpush1.msra.mxu0 %v670
  %2571 = vmatprep.subr.mxu0 %v675
  %2572 = vmatpush1.msra.mxu0 %v674
  %2573 = vmatprep.subr.mxu0 %v679
  %2574 = vmatpush1.msra.mxu0 %v678
  %2575 = vmatprep.subr.mxu0 %v683
  %2576 = vmatpush1.msra.mxu0 %v682
  %2577 = vmatprep.subr.mxu0 %v687
  %2578 = vmatpush1.msra.mxu0 %v686
  %2579 = vmatprep.subr.mxu0 %v691
  %2580 = vmatpush1.msra.mxu0 %v690
  %2581 = vmatprep.subr.mxu0 %v695
  %2582 = vmatpush1.msra.mxu0 %v694
  %2583 = vmatprep.subr.mxu0 %v699
  %2584 = vmatpush1.msra.mxu0 %v698
  %2585 = vmatprep.subr.mxu0 %v703
  %2586 = vmatpush1.msra.mxu0 %v702
  %2587 = vmatprep.subr.mxu0 %v707
  %2588 = vmatpush1.msra.mxu0 %v706
  %2589 = vmatprep.subr.mxu0 %v711
  %2590 = vmatpush1.msra.mxu0 %v710
  %2591 = vmatprep.subr.mxu0 %v715
  %2592 = vmatpush1.msra.mxu0 %v714
  %2593 = vmatprep.subr.mxu0 %v719
  %2594 = vmatpush1.msra.mxu0 %v718
  %2595 = vmatprep.subr.mxu0 %v723
  %2596 = vmatpush1.msra.mxu0 %v722
  %2597 = vmatprep.subr.mxu0 %v727
  %2598 = vmatpush1.msra.mxu0 %v726
  %2599 = vmatprep.mubr.f32.mxu0 %v2286
  %2600 = vmatmul.mubr.f32.gmra.mrb[0].mxu0 %v2463
  %v2601 = vpop.f32.mrb[0].mxu0
  %v2602 = vadd.f32 %v740, %v2601
  %v2603 = vpop.f32.mrb[0].mxu0
  %v2604 = vadd.f32 %v744, %v2603
  %2605 = vdwg.mxu0
  %v2606 = vxor.u32 %v2531, 2147483648
  %v2607 = vmul.f32 %v2606, 1.442695
  %v2608 = vpow.pop %v2607
  %v2609 = vadd.f32 %v2608, 1.0
  %v2610 = vrcp.pop %v2609
  %v2611 = vmul.f32 1.0, %v2610
  %v2612 = vxor.u32 %v2533, 2147483648
  %v2613 = vmul.f32 %v2612, 1.442695
  %v2614 = vpow.pop %v2613
  %v2615 = vadd.f32 %v2614, 1.0
  %v2616 = vrcp.pop %v2615
  %v2617 = vmul.f32 1.0, %v2616
  %v2618 = vtanh.pop %v2602
  %v2619 = vxor.u32 %v2604, 2147483648
  %v2620 = vmul.f32 %v2619, 1.442695
  %v2621 = vpow.pop %v2620
  %v2622 = vadd.f32 %v2621, 1.0
  %v2623 = vrcp.pop %v2622
  %v2624 = vmul.f32 1.0, %v2623
  %v2625 = vmul.f32 %v2617, %v2284
  %v2626 = vmul.f32 %v2611, %v2618
  %v2627 = vadd.f32 %v2625, %v2626
  %v2628 = vtanh.pop %v2627
  %v2629 = vmul.f32 %v2624, %v2628
  %s2630 = smul.u32 6, 4
  %s2631 = smul.addr %s2630, 8
  %s2632 = scalar_lea.vmem [#allocation2], %s2631
  %v2633 = vld [vmem:[%s2632] sm:$0xff]
  %v2634 = vld [vmem:[%s2632 + $0x8] sm:$0xff]
  %v2635 = vld [vmem:[%s2632 + $0x10] sm:$0xff]
  %v2636 = vld [vmem:[%s2632 + $0x18] sm:$0xff]
  %2637 = vmatprep.subr.mxu0 %v367
  %2638 = vmatpush1.msra.mxu0 %v366
  %2639 = vmatprep.subr.mxu0 %v371
  %2640 = vmatpush1.msra.mxu0 %v370
  %2641 = vmatprep.subr.mxu0 %v375
  %2642 = vmatpush1.msra.mxu0 %v374
  %2643 = vmatprep.subr.mxu0 %v379
  %2644 = vmatpush1.msra.mxu0 %v378
  %2645 = vmatprep.subr.mxu0 %v383
  %2646 = vmatpush1.msra.mxu0 %v382
  %2647 = vmatprep.subr.mxu0 %v387
  %2648 = vmatpush1.msra.mxu0 %v386
  %2649 = vmatprep.subr.mxu0 %v391
  %2650 = vmatpush1.msra.mxu0 %v390
  %2651 = vmatprep.subr.mxu0 %v395
  %2652 = vmatpush1.msra.mxu0 %v394
  %2653 = vmatprep.subr.mxu0 %v399
  %2654 = vmatpush1.msra.mxu0 %v398
  %2655 = vmatprep.subr.mxu0 %v403
  %2656 = vmatpush1.msra.mxu0 %v402
  %2657 = vmatprep.subr.mxu0 %v407
  %2658 = vmatpush1.msra.mxu0 %v406
  %2659 = vmatprep.subr.mxu0 %v411
  %2660 = vmatpush1.msra.mxu0 %v410
  %2661 = vmatprep.subr.mxu0 %v415
  %2662 = vmatpush1.msra.mxu0 %v414
  %2663 = vmatprep.subr.mxu0 %v419
  %2664 = vmatpush1.msra.mxu0 %v418
  %2665 = vmatprep.subr.mxu0 %v423
  %2666 = vmatpush1.msra.mxu0 %v422
  %2667 = vmatprep.subr.mxu0 %v427
  %2668 = vmatpush1.msra.mxu0 %v426
  %2669 = vmatprep.subr.mxu0 0.0
  %2670 = vmatpush1.msra.mxu0 0.0
  %2671 = vmatprep.subr.mxu0 0.0
  %2672 = vmatpush1.msra.mxu0 0.0
  %2673 = vmatprep.subr.mxu0 0.0
  %2674 = vmatpush1.msra.mxu0 0.0
  %2675 = vmatprep.subr.mxu0 0.0
  %2676 = vmatpush1.msra.mxu0 0.0
  %2677 = vmatprep.subr.mxu0 0.0
  %2678 = vmatpush1.msra.mxu0 0.0
  %2679 = vmatprep.subr.mxu0 0.0
  %2680 = vmatpush1.msra.mxu0 0.0
  %2681 = vmatprep.subr.mxu0 0.0
  %2682 = vmatpush1.msra.mxu0 0.0
  %2683 = vmatprep.subr.mxu0 0.0
  %2684 = vmatpush1.msra.mxu0 0.0
  %2685 = vmatprep.subr.mxu0 0.0
  %2686 = vmatpush1.msra.mxu0 0.0
  %2687 = vmatprep.subr.mxu0 0.0
  %2688 = vmatpush1.msra.mxu0 0.0
  %2689 = vmatprep.subr.mxu0 0.0
  %2690 = vmatpush1.msra.mxu0 0.0
  %2691 = vmatprep.subr.mxu0 0.0
  %2692 = vmatpush1.msra.mxu0 0.0
  %2693 = vmatprep.subr.mxu0 0.0
  %2694 = vmatpush1.msra.mxu0 0.0
  %2695 = vmatprep.subr.mxu0 0.0
  %2696 = vmatpush1.msra.mxu0 0.0
  %2697 = vmatprep.subr.mxu0 0.0
  %2698 = vmatpush1.msra.mxu0 0.0
  %2699 = vmatprep.subr.mxu0 0.0
  %2700 = vmatpush1.msra.mxu0 0.0
  %2701 = vmatprep.mubr.f32.mxu0 0.0
  %2702 = vmatmul.mubr.f32.gmra.mrb[0].mxu0 %v2463
  %v2703 = vpop.f32.mrb[0].mxu0
  %v2704 = vadd.f32 0.0, %v2703
  %v2705 = vpop.f32.mrb[0].mxu0
  %v2706 = vadd.f32 0.0, %v2705
  %2707 = vdwg.mxu0
  %2708 = vmatprep.subr.mxu0 %v369
  %2709 = vmatpush1.msra.mxu0 %v368
  %2710 = vmatprep.subr.mxu0 %v373
  %2711 = vmatpush1.msra.mxu0 %v372
  %2712 = vmatprep.subr.mxu0 %v377
  %2713 = vmatpush1.msra.mxu0 %v376
  %2714 = vmatprep.subr.mxu0 %v381
  %2715 = vmatpush1.msra.mxu0 %v380
  %2716 = vmatprep.subr.mxu0 %v385
  %2717 = vmatpush1.msra.mxu0 %v384
  %2718 = vmatprep.subr.mxu0 %v389
  %2719 = vmatpush1.msra.mxu0 %v388
  %2720 = vmatprep.subr.mxu0 %v393
  %2721 = vmatpush1.msra.mxu0 %v392
  %2722 = vmatprep.subr.mxu0 %v397
  %2723 = vmatpush1.msra.mxu0 %v396
  %2724 = vmatprep.subr.mxu0 %v401
  %2725 = vmatpush1.msra.mxu0 %v400
  %2726 = vmatprep.subr.mxu0 %v405
  %2727 = vmatpush1.msra.mxu0 %v404
  %2728 = vmatprep.subr.mxu0 %v409
  %2729 = vmatpush1.msra.mxu0 %v408
  %2730 = vmatprep.subr.mxu0 %v413
  %2731 = vmatpush1.msra.mxu0 %v412
  %2732 = vmatprep.subr.mxu0 %v417
  %2733 = vmatpush1.msra.mxu0 %v416
  %2734 = vmatprep.subr.mxu0 %v421
  %2735 = vmatpush1.msra.mxu0 %v420
  %2736 = vmatprep.subr.mxu0 %v425
  %2737 = vmatpush1.msra.mxu0 %v424
  %2738 = vmatprep.subr.mxu0 %v429
  %2739 = vmatpush1.msra.mxu0 %v428
  %2740 = vmatprep.subr.mxu0 0.0
  %2741 = vmatpush1.msra.mxu0 0.0
  %2742 = vmatprep.subr.mxu0 0.0
  %2743 = vmatpush1.msra.mxu0 0.0
  %2744 = vmatprep.subr.mxu0 0.0
  %2745 = vmatpush1.msra.mxu0 0.0
  %2746 = vmatprep.subr.mxu0 0.0
  %2747 = vmatpush1.msra.mxu0 0.0
  %2748 = vmatprep.subr.mxu0 0.0
  %2749 = vmatpush1.msra.mxu0 0.0
  %2750 = vmatprep.subr.mxu0 0.0
  %2751 = vmatpush1.msra.mxu0 0.0
  %2752 = vmatprep.subr.mxu0 0.0
  %2753 = vmatpush1.msra.mxu0 0.0
  %2754 = vmatprep.subr.mxu0 0.0
  %2755 = vmatpush1.msra.mxu0 0.0
  %2756 = vmatprep.subr.mxu0 0.0
  %2757 = vmatpush1.msra.mxu0 0.0
  %2758 = vmatprep.subr.mxu0 0.0
  %2759 = vmatpush1.msra.mxu0 0.0
  %2760 = vmatprep.subr.mxu0 0.0
  %2761 = vmatpush1.msra.mxu0 0.0
  %2762 = vmatprep.subr.mxu0 0.0
  %2763 = vmatpush1.msra.mxu0 0.0
  %2764 = vmatprep.subr.mxu0 0.0
  %2765 = vmatpush1.msra.mxu0 0.0
  %2766 = vmatprep.subr.mxu0 0.0
  %2767 = vmatpush1.msra.mxu0 0.0
  %2768 = vmatprep.subr.mxu0 0.0
  %2769 = vmatpush1.msra.mxu0 0.0
  %2770 = vmatprep.subr.mxu0 0.0
  %2771 = vmatpush1.msra.mxu0 0.0
  %2772 = vmatprep.mubr.f32.mxu0 0.0
  %2773 = vmatmul.mubr.f32.gmra.mrb[0].mxu0 %v2463
  %v2774 = vpop.f32.mrb[0].mxu0
  %v2775 = vadd.f32 0.0, %v2774
  %v2776 = vpop.f32.mrb[0].mxu0
  %v2777 = vadd.f32 0.0, %v2776
  %2778 = vdwg.mxu0
  %v2779 = vadd.f32 %v2633, %v2704
  %v2780 = vadd.f32 %v2634, %v2706
  %v2781 = vadd.f32 %v2635, %v2775
  %v2782 = vadd.f32 %v2636, %v2777
  %v2783 = vxor.u32 %v2779, 2147483648
  %v2784 = vmul.f32 %v2783, 1.442695
  %v2785 = vpow.pop %v2784
  %v2786 = vadd.f32 %v2785, 1.0
  %v2787 = vrcp.pop %v2786
  %v2788 = vmul.f32 1.0, %v2787
  %v2789 = vxor.u32 %v2780, 2147483648
  %v2790 = vmul.f32 %v2789, 1.442695
  %v2791 = vpow.pop %v2790
  %v2792 = vadd.f32 %v2791, 1.0
  %v2793 = vrcp.pop %v2792
  %v2794 = vmul.f32 1.0, %v2793
  %v2795 = vtanh.pop %v2781
  %v2796 = vxor.u32 %v2782, 2147483648
  %v2797 = vmul.f32 %v2796, 1.442695
  %v2798 = vpow.pop %v2797
  %v2799 = vadd.f32 %v2798, 1.0
  %v2800 = vrcp.pop %v2799
  %v2801 = vmul.f32 1.0, %v2800
  %v2802 = vmul.f32 %v2794, %v2461
  %v2803 = vmul.f32 %v2788, %v2795
  %v2804 = vadd.f32 %v2802, %v2803
  %v2805 = vtanh.pop %v2804
  %v2806 = vmul.f32 %v2801, %v2805
  %2807 = vmatprep.subr.mxu0 %v601
  %2808 = vmatpush1.msra.mxu0 %v600
  %2809 = vmatprep.subr.mxu0 %v605
  %2810 = vmatpush1.msra.mxu0 %v604
  %2811 = vmatprep.subr.mxu0 %v609
  %2812 = vmatpush1.msra.mxu0 %v608
  %2813 = vmatprep.subr.mxu0 %v613
  %2814 = vmatpush1.msra.mxu0 %v612
  %2815 = vmatprep.subr.mxu0 %v617
  %2816 = vmatpush1.msra.mxu0 %v616
  %2817 = vmatprep.subr.mxu0 %v621
  %2818 = vmatpush1.msra.mxu0 %v620
  %2819 = vmatprep.subr.mxu0 %v625
  %2820 = vmatpush1.msra.mxu0 %v624
  %2821 = vmatprep.subr.mxu0 %v629
  %2822 = vmatpush1.msra.mxu0 %v628
  %2823 = vmatprep.subr.mxu0 %v633
  %2824 = vmatpush1.msra.mxu0 %v632
  %2825 = vmatprep.subr.mxu0 %v637
  %2826 = vmatpush1.msra.mxu0 %v636
  %2827 = vmatprep.subr.mxu0 %v641
  %2828 = vmatpush1.msra.mxu0 %v640
  %2829 = vmatprep.subr.mxu0 %v645
  %2830 = vmatpush1.msra.mxu0 %v644
  %2831 = vmatprep.subr.mxu0 %v649
  %2832 = vmatpush1.msra.mxu0 %v648
  %2833 = vmatprep.subr.mxu0 %v653
  %2834 = vmatpush1.msra.mxu0 %v652
  %2835 = vmatprep.subr.mxu0 %v657
  %2836 = vmatpush1.msra.mxu0 %v656
  %2837 = vmatprep.subr.mxu0 %v661
  %2838 = vmatpush1.msra.mxu0 %v660
  %2839 = vmatprep.subr.mxu0 %v665
  %2840 = vmatpush1.msra.mxu0 %v664
  %2841 = vmatprep.subr.mxu0 %v669
  %2842 = vmatpush1.msra.mxu0 %v668
  %2843 = vmatprep.subr.mxu0 %v673
  %2844 = vmatpush1.msra.mxu0 %v672
  %2845 = vmatprep.subr.mxu0 %v677
  %2846 = vmatpush1.msra.mxu0 %v676
  %2847 = vmatprep.subr.mxu0 %v681
  %2848 = vmatpush1.msra.mxu0 %v680
  %2849 = vmatprep.subr.mxu0 %v685
  %2850 = vmatpush1.msra.mxu0 %v684
  %2851 = vmatprep.subr.mxu0 %v689
  %2852 = vmatpush1.msra.mxu0 %v688
  %2853 = vmatprep.subr.mxu0 %v693
  %2854 = vmatpush1.msra.mxu0 %v692
  %2855 = vmatprep.subr.mxu0 %v697
  %2856 = vmatpush1.msra.mxu0 %v696
  %2857 = vmatprep.subr.mxu0 %v701
  %2858 = vmatpush1.msra.mxu0 %v700
  %2859 = vmatprep.subr.mxu0 %v705
  %2860 = vmatpush1.msra.mxu0 %v704
  %2861 = vmatprep.subr.mxu0 %v709
  %2862 = vmatpush1.msra.mxu0 %v708
  %2863 = vmatprep.subr.mxu0 %v713
  %2864 = vmatpush1.msra.mxu0 %v712
  %2865 = vmatprep.subr.mxu0 %v717
  %2866 = vmatpush1.msra.mxu0 %v716
  %2867 = vmatprep.subr.mxu0 %v721
  %2868 = vmatpush1.msra.mxu0 %v720
  %2869 = vmatprep.subr.mxu0 %v725
  %2870 = vmatpush1.msra.mxu0 %v724
  %2871 = vmatprep.mubr.f32.mxu0 %v2629
  %2872 = vmatmul.mubr.f32.gmra.mrb[0].mxu0 %v2806
  %v2873 = vpop.f32.mrb[0].mxu0
  %v2874 = vadd.f32 %v732, %v2873
  %v2875 = vpop.f32.mrb[0].mxu0
  %v2876 = vadd.f32 %v736, %v2875
  %2877 = vdwg.mxu0
  %2878 = vmatprep.subr.mxu0 %v603
  %2879 = vmatpush1.msra.mxu0 %v602
  %2880 = vmatprep.subr.mxu0 %v607
  %2881 = vmatpush1.msra.mxu0 %v606
  %2882 = vmatprep.subr.mxu0 %v611
  %2883 = vmatpush1.msra.mxu0 %v610
  %2884 = vmatprep.subr.mxu0 %v615
  %2885 = vmatpush1.msra.mxu0 %v614
  %2886 = vmatprep.subr.mxu0 %v619
  %2887 = vmatpush1.msra.mxu0 %v618
  %2888 = vmatprep.subr.mxu0 %v623
  %2889 = vmatpush1.msra.mxu0 %v622
  %2890 = vmatprep.subr.mxu0 %v627
  %2891 = vmatpush1.msra.mxu0 %v626
  %2892 = vmatprep.subr.mxu0 %v631
  %2893 = vmatpush1.msra.mxu0 %v630
  %2894 = vmatprep.subr.mxu0 %v635
  %2895 = vmatpush1.msra.mxu0 %v634
  %2896 = vmatprep.subr.mxu0 %v639
  %2897 = vmatpush1.msra.mxu0 %v638
  %2898 = vmatprep.subr.mxu0 %v643
  %2899 = vmatpush1.msra.mxu0 %v642
  %2900 = vmatprep.subr.mxu0 %v647
  %2901 = vmatpush1.msra.mxu0 %v646
  %2902 = vmatprep.subr.mxu0 %v651
  %2903 = vmatpush1.msra.mxu0 %v650
  %2904 = vmatprep.subr.mxu0 %v655
  %2905 = vmatpush1.msra.mxu0 %v654
  %2906 = vmatprep.subr.mxu0 %v659
  %2907 = vmatpush1.msra.mxu0 %v658
  %2908 = vmatprep.subr.mxu0 %v663
  %2909 = vmatpush1.msra.mxu0 %v662
  %2910 = vmatprep.subr.mxu0 %v667
  %2911 = vmatpush1.msra.mxu0 %v666
  %2912 = vmatprep.subr.mxu0 %v671
  %2913 = vmatpush1.msra.mxu0 %v670
  %2914 = vmatprep.subr.mxu0 %v675
  %2915 = vmatpush1.msra.mxu0 %v674
  %2916 = vmatprep.subr.mxu0 %v679
  %2917 = vmatpush1.msra.mxu0 %v678
  %2918 = vmatprep.subr.mxu0 %v683
  %2919 = vmatpush1.msra.mxu0 %v682
  %2920 = vmatprep.subr.mxu0 %v687
  %2921 = vmatpush1.msra.mxu0 %v686
  %2922 = vmatprep.subr.mxu0 %v691
  %2923 = vmatpush1.msra.mxu0 %v690
  %2924 = vmatprep.subr.mxu0 %v695
  %2925 = vmatpush1.msra.mxu0 %v694
  %2926 = vmatprep.subr.mxu0 %v699
  %2927 = vmatpush1.msra.mxu0 %v698
  %2928 = vmatprep.subr.mxu0 %v703
  %2929 = vmatpush1.msra.mxu0 %v702
  %2930 = vmatprep.subr.mxu0 %v707
  %2931 = vmatpush1.msra.mxu0 %v706
  %2932 = vmatprep.subr.mxu0 %v711
  %2933 = vmatpush1.msra.mxu0 %v710
  %2934 = vmatprep.subr.mxu0 %v715
  %2935 = vmatpush1.msra.mxu0 %v714
  %2936 = vmatprep.subr.mxu0 %v719
  %2937 = vmatpush1.msra.mxu0 %v718
  %2938 = vmatprep.subr.mxu0 %v723
  %2939 = vmatpush1.msra.mxu0 %v722
  %2940 = vmatprep.subr.mxu0 %v727
  %2941 = vmatpush1.msra.mxu0 %v726
  %2942 = vmatprep.mubr.f32.mxu0 %v2629
  %2943 = vmatmul.mubr.f32.gmra.mrb[0].mxu0 %v2806
  %v2944 = vpop.f32.mrb[0].mxu0
  %v2945 = vadd.f32 %v740, %v2944
  %v2946 = vpop.f32.mrb[0].mxu0
  %v2947 = vadd.f32 %v744, %v2946
  %2948 = vdwg.mxu0
  %v2949 = vxor.u32 %v2874, 2147483648
  %v2950 = vmul.f32 %v2949, 1.442695
  %v2951 = vpow.pop %v2950
  %v2952 = vadd.f32 %v2951, 1.0
  %v2953 = vrcp.pop %v2952
  %v2954 = vmul.f32 1.0, %v2953
  %v2955 = vxor.u32 %v2876, 2147483648
  %v2956 = vmul.f32 %v2955, 1.442695
  %v2957 = vpow.pop %v2956
  %v2958 = vadd.f32 %v2957, 1.0
  %v2959 = vrcp.pop %v2958
  %v2960 = vmul.f32 1.0, %v2959
  %v2961 = vtanh.pop %v2945
  %v2962 = vxor.u32 %v2947, 2147483648
  %v2963 = vmul.f32 %v2962, 1.442695
  %v2964 = vpow.pop %v2963
  %v2965 = vadd.f32 %v2964, 1.0
  %v2966 = vrcp.pop %v2965
  %v2967 = vmul.f32 1.0, %v2966
  %v2968 = vmul.f32 %v2960, %v2627
  %v2969 = vmul.f32 %v2954, %v2961
  %v2970 = vadd.f32 %v2968, %v2969
  %v2971 = vtanh.pop %v2970
  %v2972 = vmul.f32 %v2967, %v2971
  %s2973 = smul.u32 7, 4
  %s2974 = smul.addr %s2973, 8
  %s2975 = scalar_lea.vmem [#allocation2], %s2974
  %v2976 = vld [vmem:[%s2975] sm:$0xff]
  %v2977 = vld [vmem:[%s2975 + $0x8] sm:$0xff]
  %v2978 = vld [vmem:[%s2975 + $0x10] sm:$0xff]
  %v2979 = vld [vmem:[%s2975 + $0x18] sm:$0xff]
  %2980 = vmatprep.subr.mxu0 %v367
  %2981 = vmatpush1.msra.mxu0 %v366
  %2982 = vmatprep.subr.mxu0 %v371
  %2983 = vmatpush1.msra.mxu0 %v370
  %2984 = vmatprep.subr.mxu0 %v375
  %2985 = vmatpush1.msra.mxu0 %v374
  %2986 = vmatprep.subr.mxu0 %v379
  %2987 = vmatpush1.msra.mxu0 %v378
  %2988 = vmatprep.subr.mxu0 %v383
  %2989 = vmatpush1.msra.mxu0 %v382
  %2990 = vmatprep.subr.mxu0 %v387
  %2991 = vmatpush1.msra.mxu0 %v386
  %2992 = vmatprep.subr.mxu0 %v391
  %2993 = vmatpush1.msra.mxu0 %v390
  %2994 = vmatprep.subr.mxu0 %v395
  %2995 = vmatpush1.msra.mxu0 %v394
  %2996 = vmatprep.subr.mxu0 %v399
  %2997 = vmatpush1.msra.mxu0 %v398
  %2998 = vmatprep.subr.mxu0 %v403
  %2999 = vmatpush1.msra.mxu0 %v402
  %3000 = vmatprep.subr.mxu0 %v407
  %3001 = vmatpush1.msra.mxu0 %v406
  %3002 = vmatprep.subr.mxu0 %v411
  %3003 = vmatpush1.msra.mxu0 %v410
  %3004 = vmatprep.subr.mxu0 %v415
  %3005 = vmatpush1.msra.mxu0 %v414
  %3006 = vmatprep.subr.mxu0 %v419
  %3007 = vmatpush1.msra.mxu0 %v418
  %3008 = vmatprep.subr.mxu0 %v423
  %3009 = vmatpush1.msra.mxu0 %v422
  %3010 = vmatprep.subr.mxu0 %v427
  %3011 = vmatpush1.msra.mxu0 %v426
  %3012 = vmatprep.subr.mxu0 0.0
  %3013 = vmatpush1.msra.mxu0 0.0
  %3014 = vmatprep.subr.mxu0 0.0
  %3015 = vmatpush1.msra.mxu0 0.0
  %3016 = vmatprep.subr.mxu0 0.0
  %3017 = vmatpush1.msra.mxu0 0.0
  %3018 = vmatprep.subr.mxu0 0.0
  %3019 = vmatpush1.msra.mxu0 0.0
  %3020 = vmatprep.subr.mxu0 0.0
  %3021 = vmatpush1.msra.mxu0 0.0
  %3022 = vmatprep.subr.mxu0 0.0
  %3023 = vmatpush1.msra.mxu0 0.0
  %3024 = vmatprep.subr.mxu0 0.0
  %3025 = vmatpush1.msra.mxu0 0.0
  %3026 = vmatprep.subr.mxu0 0.0
  %3027 = vmatpush1.msra.mxu0 0.0
  %3028 = vmatprep.subr.mxu0 0.0
  %3029 = vmatpush1.msra.mxu0 0.0
  %3030 = vmatprep.subr.mxu0 0.0
  %3031 = vmatpush1.msra.mxu0 0.0
  %3032 = vmatprep.subr.mxu0 0.0
  %3033 = vmatpush1.msra.mxu0 0.0
  %3034 = vmatprep.subr.mxu0 0.0
  %3035 = vmatpush1.msra.mxu0 0.0
  %3036 = vmatprep.subr.mxu0 0.0
  %3037 = vmatpush1.msra.mxu0 0.0
  %3038 = vmatprep.subr.mxu0 0.0
  %3039 = vmatpush1.msra.mxu0 0.0
  %3040 = vmatprep.subr.mxu0 0.0
  %3041 = vmatpush1.msra.mxu0 0.0
  %3042 = vmatprep.subr.mxu0 0.0
  %3043 = vmatpush1.msra.mxu0 0.0
  %3044 = vmatprep.mubr.f32.mxu0 0.0
  %3045 = vmatmul.mubr.f32.gmra.mrb[0].mxu0 %v2806
  %v3046 = vpop.f32.mrb[0].mxu0
  %v3047 = vadd.f32 0.0, %v3046
  %v3048 = vpop.f32.mrb[0].mxu0
  %v3049 = vadd.f32 0.0, %v3048
  %3050 = vdwg.mxu0
  %3051 = vmatprep.subr.mxu0 %v369
  %3052 = vmatpush1.msra.mxu0 %v368
  %3053 = vmatprep.subr.mxu0 %v373
  %3054 = vmatpush1.msra.mxu0 %v372
  %3055 = vmatprep.subr.mxu0 %v377
  %3056 = vmatpush1.msra.mxu0 %v376
  %3057 = vmatprep.subr.mxu0 %v381
  %3058 = vmatpush1.msra.mxu0 %v380
  %3059 = vmatprep.subr.mxu0 %v385
  %3060 = vmatpush1.msra.mxu0 %v384
  %3061 = vmatprep.subr.mxu0 %v389
  %3062 = vmatpush1.msra.mxu0 %v388
  %3063 = vmatprep.subr.mxu0 %v393
  %3064 = vmatpush1.msra.mxu0 %v392
  %3065 = vmatprep.subr.mxu0 %v397
  %3066 = vmatpush1.msra.mxu0 %v396
  %3067 = vmatprep.subr.mxu0 %v401
  %3068 = vmatpush1.msra.mxu0 %v400
  %3069 = vmatprep.subr.mxu0 %v405
  %3070 = vmatpush1.msra.mxu0 %v404
  %3071 = vmatprep.subr.mxu0 %v409
  %3072 = vmatpush1.msra.mxu0 %v408
  %3073 = vmatprep.subr.mxu0 %v413
  %3074 = vmatpush1.msra.mxu0 %v412
  %3075 = vmatprep.subr.mxu0 %v417
  %3076 = vmatpush1.msra.mxu0 %v416
  %3077 = vmatprep.subr.mxu0 %v421
  %3078 = vmatpush1.msra.mxu0 %v420
  %3079 = vmatprep.subr.mxu0 %v425
  %3080 = vmatpush1.msra.mxu0 %v424
  %3081 = vmatprep.subr.mxu0 %v429
  %3082 = vmatpush1.msra.mxu0 %v428
  %3083 = vmatprep.subr.mxu0 0.0
  %3084 = vmatpush1.msra.mxu0 0.0
  %3085 = vmatprep.subr.mxu0 0.0
  %3086 = vmatpush1.msra.mxu0 0.0
  %3087 = vmatprep.subr.mxu0 0.0
  %3088 = vmatpush1.msra.mxu0 0.0
  %3089 = vmatprep.subr.mxu0 0.0
  %3090 = vmatpush1.msra.mxu0 0.0
  %3091 = vmatprep.subr.mxu0 0.0
  %3092 = vmatpush1.msra.mxu0 0.0
  %3093 = vmatprep.subr.mxu0 0.0
  %3094 = vmatpush1.msra.mxu0 0.0
  %3095 = vmatprep.subr.mxu0 0.0
  %3096 = vmatpush1.msra.mxu0 0.0
  %3097 = vmatprep.subr.mxu0 0.0
  %3098 = vmatpush1.msra.mxu0 0.0
  %3099 = vmatprep.subr.mxu0 0.0
  %3100 = vmatpush1.msra.mxu0 0.0
  %3101 = vmatprep.subr.mxu0 0.0
  %3102 = vmatpush1.msra.mxu0 0.0
  %3103 = vmatprep.subr.mxu0 0.0
  %3104 = vmatpush1.msra.mxu0 0.0
  %3105 = vmatprep.subr.mxu0 0.0
  %3106 = vmatpush1.msra.mxu0 0.0
  %3107 = vmatprep.subr.mxu0 0.0
  %3108 = vmatpush1.msra.mxu0 0.0
  %3109 = vmatprep.subr.mxu0 0.0
  %3110 = vmatpush1.msra.mxu0 0.0
  %3111 = vmatprep.subr.mxu0 0.0
  %3112 = vmatpush1.msra.mxu0 0.0
  %3113 = vmatprep.subr.mxu0 0.0
  %3114 = vmatpush1.msra.mxu0 0.0
  %3115 = vmatprep.mubr.f32.mxu0 0.0
  %3116 = vmatmul.mubr.f32.gmra.mrb[0].mxu0 %v2806
  %v3117 = vpop.f32.mrb[0].mxu0
  %v3118 = vadd.f32 0.0, %v3117
  %v3119 = vpop.f32.mrb[0].mxu0
  %v3120 = vadd.f32 0.0, %v3119
  %3121 = vdwg.mxu0
  %v3122 = vadd.f32 %v2976, %v3047
  %v3123 = vadd.f32 %v2977, %v3049
  %v3124 = vadd.f32 %v2978, %v3118
  %v3125 = vadd.f32 %v2979, %v3120
  %v3126 = vxor.u32 %v3122, 2147483648
  %v3127 = vmul.f32 %v3126, 1.442695
  %v3128 = vpow.pop %v3127
  %v3129 = vadd.f32 %v3128, 1.0
  %v3130 = vrcp.pop %v3129
  %v3131 = vmul.f32 1.0, %v3130
  %v3132 = vxor.u32 %v3123, 2147483648
  %v3133 = vmul.f32 %v3132, 1.442695
  %v3134 = vpow.pop %v3133
  %v3135 = vadd.f32 %v3134, 1.0
  %v3136 = vrcp.pop %v3135
  %v3137 = vmul.f32 1.0, %v3136
  %v3138 = vtanh.pop %v3124
  %v3139 = vxor.u32 %v3125, 2147483648
  %v3140 = vmul.f32 %v3139, 1.442695
  %v3141 = vpow.pop %v3140
  %v3142 = vadd.f32 %v3141, 1.0
  %v3143 = vrcp.pop %v3142
  %v3144 = vmul.f32 1.0, %v3143
  %v3145 = vmul.f32 %v3137, %v2804
  %v3146 = vmul.f32 %v3131, %v3138
  %v3147 = vadd.f32 %v3145, %v3146
  %v3148 = vtanh.pop %v3147
  %v3149 = vmul.f32 %v3144, %v3148
  %3150 = vmatprep.subr.mxu0 %v601
  %3151 = vmatpush1.msra.mxu0 %v600
  %3152 = vmatprep.subr.mxu0 %v605
  %3153 = vmatpush1.msra.mxu0 %v604
  %3154 = vmatprep.subr.mxu0 %v609
  %3155 = vmatpush1.msra.mxu0 %v608
  %3156 = vmatprep.subr.mxu0 %v613
  %3157 = vmatpush1.msra.mxu0 %v612
  %3158 = vmatprep.subr.mxu0 %v617
  %3159 = vmatpush1.msra.mxu0 %v616
  %3160 = vmatprep.subr.mxu0 %v621
  %3161 = vmatpush1.msra.mxu0 %v620
  %3162 = vmatprep.subr.mxu0 %v625
  %3163 = vmatpush1.msra.mxu0 %v624
  %3164 = vmatprep.subr.mxu0 %v629
  %3165 = vmatpush1.msra.mxu0 %v628
  %3166 = vmatprep.subr.mxu0 %v633
  %3167 = vmatpush1.msra.mxu0 %v632
  %3168 = vmatprep.subr.mxu0 %v637
  %3169 = vmatpush1.msra.mxu0 %v636
  %3170 = vmatprep.subr.mxu0 %v641
  %3171 = vmatpush1.msra.mxu0 %v640
  %3172 = vmatprep.subr.mxu0 %v645
  %3173 = vmatpush1.msra.mxu0 %v644
  %3174 = vmatprep.subr.mxu0 %v649
  %3175 = vmatpush1.msra.mxu0 %v648
  %3176 = vmatprep.subr.mxu0 %v653
  %3177 = vmatpush1.msra.mxu0 %v652
  %3178 = vmatprep.subr.mxu0 %v657
  %3179 = vmatpush1.msra.mxu0 %v656
  %3180 = vmatprep.subr.mxu0 %v661
  %3181 = vmatpush1.msra.mxu0 %v660
  %3182 = vmatprep.subr.mxu0 %v665
  %3183 = vmatpush1.msra.mxu0 %v664
  %3184 = vmatprep.subr.mxu0 %v669
  %3185 = vmatpush1.msra.mxu0 %v668
  %3186 = vmatprep.subr.mxu0 %v673
  %3187 = vmatpush1.msra.mxu0 %v672
  %3188 = vmatprep.subr.mxu0 %v677
  %3189 = vmatpush1.msra.mxu0 %v676
  %3190 = vmatprep.subr.mxu0 %v681
  %3191 = vmatpush1.msra.mxu0 %v680
  %3192 = vmatprep.subr.mxu0 %v685
  %3193 = vmatpush1.msra.mxu0 %v684
  %3194 = vmatprep.subr.mxu0 %v689
  %3195 = vmatpush1.msra.mxu0 %v688
  %3196 = vmatprep.subr.mxu0 %v693
  %3197 = vmatpush1.msra.mxu0 %v692
  %3198 = vmatprep.subr.mxu0 %v697
  %3199 = vmatpush1.msra.mxu0 %v696
  %3200 = vmatprep.subr.mxu0 %v701
  %3201 = vmatpush1.msra.mxu0 %v700
  %3202 = vmatprep.subr.mxu0 %v705
  %3203 = vmatpush1.msra.mxu0 %v704
  %3204 = vmatprep.subr.mxu0 %v709
  %3205 = vmatpush1.msra.mxu0 %v708
  %3206 = vmatprep.subr.mxu0 %v713
  %3207 = vmatpush1.msra.mxu0 %v712
  %3208 = vmatprep.subr.mxu0 %v717
  %3209 = vmatpush1.msra.mxu0 %v716
  %3210 = vmatprep.subr.mxu0 %v721
  %3211 = vmatpush1.msra.mxu0 %v720
  %3212 = vmatprep.subr.mxu0 %v725
  %3213 = vmatpush1.msra.mxu0 %v724
  %3214 = vmatprep.mubr.f32.mxu0 %v2972
  %3215 = vmatmul.mubr.f32.gmra.mrb[0].mxu0 %v3149
  %v3216 = vpop.f32.mrb[0].mxu0
  %v3217 = vadd.f32 %v732, %v3216
  %v3218 = vpop.f32.mrb[0].mxu0
  %v3219 = vadd.f32 %v736, %v3218
  %3220 = vdwg.mxu0
  %3221 = vmatprep.subr.mxu0 %v603
  %3222 = vmatpush1.msra.mxu0 %v602
  %3223 = vmatprep.subr.mxu0 %v607
  %3224 = vmatpush1.msra.mxu0 %v606
  %3225 = vmatprep.subr.mxu0 %v611
  %3226 = vmatpush1.msra.mxu0 %v610
  %3227 = vmatprep.subr.mxu0 %v615
  %3228 = vmatpush1.msra.mxu0 %v614
  %3229 = vmatprep.subr.mxu0 %v619
  %3230 = vmatpush1.msra.mxu0 %v618
  %3231 = vmatprep.subr.mxu0 %v623
  %3232 = vmatpush1.msra.mxu0 %v622
  %3233 = vmatprep.subr.mxu0 %v627
  %3234 = vmatpush1.msra.mxu0 %v626
  %3235 = vmatprep.subr.mxu0 %v631
  %3236 = vmatpush1.msra.mxu0 %v630
  %3237 = vmatprep.subr.mxu0 %v635
  %3238 = vmatpush1.msra.mxu0 %v634
  %3239 = vmatprep.subr.mxu0 %v639
  %3240 = vmatpush1.msra.mxu0 %v638
  %3241 = vmatprep.subr.mxu0 %v643
  %3242 = vmatpush1.msra.mxu0 %v642
  %3243 = vmatprep.subr.mxu0 %v647
  %3244 = vmatpush1.msra.mxu0 %v646
  %3245 = vmatprep.subr.mxu0 %v651
  %3246 = vmatpush1.msra.mxu0 %v650
  %3247 = vmatprep.subr.mxu0 %v655
  %3248 = vmatpush1.msra.mxu0 %v654
  %3249 = vmatprep.subr.mxu0 %v659
  %3250 = vmatpush1.msra.mxu0 %v658
  %3251 = vmatprep.subr.mxu0 %v663
  %3252 = vmatpush1.msra.mxu0 %v662
  %3253 = vmatprep.subr.mxu0 %v667
  %3254 = vmatpush1.msra.mxu0 %v666
  %3255 = vmatprep.subr.mxu0 %v671
  %3256 = vmatpush1.msra.mxu0 %v670
  %3257 = vmatprep.subr.mxu0 %v675
  %3258 = vmatpush1.msra.mxu0 %v674
  %3259 = vmatprep.subr.mxu0 %v679
  %3260 = vmatpush1.msra.mxu0 %v678
  %3261 = vmatprep.subr.mxu0 %v683
  %3262 = vmatpush1.msra.mxu0 %v682
  %3263 = vmatprep.subr.mxu0 %v687
  %3264 = vmatpush1.msra.mxu0 %v686
  %3265 = vmatprep.subr.mxu0 %v691
  %3266 = vmatpush1.msra.mxu0 %v690
  %3267 = vmatprep.subr.mxu0 %v695
  %3268 = vmatpush1.msra.mxu0 %v694
  %3269 = vmatprep.subr.mxu0 %v699
  %3270 = vmatpush1.msra.mxu0 %v698
  %3271 = vmatprep.subr.mxu0 %v703
  %3272 = vmatpush1.msra.mxu0 %v702
  %3273 = vmatprep.subr.mxu0 %v707
  %3274 = vmatpush1.msra.mxu0 %v706
  %3275 = vmatprep.subr.mxu0 %v711
  %3276 = vmatpush1.msra.mxu0 %v710
  %3277 = vmatprep.subr.mxu0 %v715
  %3278 = vmatpush1.msra.mxu0 %v714
  %3279 = vmatprep.subr.mxu0 %v719
  %3280 = vmatpush1.msra.mxu0 %v718
  %3281 = vmatprep.subr.mxu0 %v723
  %3282 = vmatpush1.msra.mxu0 %v722
  %3283 = vmatprep.subr.mxu0 %v727
  %3284 = vmatpush1.msra.mxu0 %v726
  %3285 = vmatprep.mubr.f32.mxu0 %v2972
  %3286 = vmatmul.mubr.f32.gmra.mrb[0].mxu0 %v3149
  %v3287 = vpop.f32.mrb[0].mxu0
  %v3288 = vadd.f32 %v740, %v3287
  %v3289 = vpop.f32.mrb[0].mxu0
  %v3290 = vadd.f32 %v744, %v3289
  %3291 = vdwg.mxu0
  %v3292 = vxor.u32 %v3217, 2147483648
  %v3293 = vmul.f32 %v3292, 1.442695
  %v3294 = vpow.pop %v3293
  %v3295 = vadd.f32 %v3294, 1.0
  %v3296 = vrcp.pop %v3295
  %v3297 = vmul.f32 1.0, %v3296
  %v3298 = vxor.u32 %v3219, 2147483648
  %v3299 = vmul.f32 %v3298, 1.442695
  %v3300 = vpow.pop %v3299
  %v3301 = vadd.f32 %v3300, 1.0
  %v3302 = vrcp.pop %v3301
  %v3303 = vmul.f32 1.0, %v3302
  %v3304 = vtanh.pop %v3288
  %v3305 = vxor.u32 %v3290, 2147483648
  %v3306 = vmul.f32 %v3305, 1.442695
  %v3307 = vpow.pop %v3306
  %v3308 = vadd.f32 %v3307, 1.0
  %v3309 = vrcp.pop %v3308
  %v3310 = vmul.f32 1.0, %v3309
  %v3311 = vmul.f32 %v3303, %v2970
  %v3312 = vmul.f32 %v3297, %v3304
  %v3313 = vadd.f32 %v3311, %v3312
  %v3314 = vtanh.pop %v3313
  %v3315 = vmul.f32 %v3310, %v3314
  %v3316 = vld [vmem:[%s6] sm:$0xff]
  %v3317 = vld [vmem:[%s6 + $0x8] sm:$0xff]
  %v3318 = vld [vmem:[%s6 + $0x10] sm:$0xff]
  %v3319 = vld [vmem:[%s6 + $0x18] sm:$0xff]
  %v3320 = vld [vmem:[%s6 + $0x20] sm:$0xff]
  %v3321 = vld [vmem:[%s6 + $0x28] sm:$0xff]
  %v3322 = vld [vmem:[%s6 + $0x30] sm:$0xff]
  %v3323 = vld [vmem:[%s6 + $0x38] sm:$0xff]
  %v3324 = vld [vmem:[%s6 + $0x40] sm:$0xff]
  %v3325 = vld [vmem:[%s6 + $0x48] sm:$0xff]
  %v3326 = vld [vmem:[%s6 + $0x50] sm:$0xff]
  %v3327 = vld [vmem:[%s6 + $0x58] sm:$0xff]
  %v3328 = vld [vmem:[%s6 + $0x60] sm:$0xff]
  %v3329 = vld [vmem:[%s6 + $0x68] sm:$0xff]
  %v3330 = vld [vmem:[%s6 + $0x70] sm:$0xff]
  %v3331 = vld [vmem:[%s6 + $0x78] sm:$0xff]
  %v3332 = vld [vmem:[%s7] sm:$0x1]
  %v3334 = vlaneseq
  %v3335 = vshrl.u32 %v3334, 7
  %v3336 = vsub.s32 0, %v3335
  %v3337 = vrot.slane %v3332, %v3336
  %3339 = vmatprep.subr.mxu0 0.0
  %3340 = vmatpush1.msra.mxu0 %v3316
  %3341 = vmatprep.subr.mxu0 0.0
  %3342 = vmatpush1.msra.mxu0 %v3317
  %3343 = vmatprep.subr.mxu0 0.0
  %3344 = vmatpush1.msra.mxu0 %v3318
  %3345 = vmatprep.subr.mxu0 0.0
  %3346 = vmatpush1.msra.mxu0 %v3319
  %3347 = vmatprep.subr.mxu0 0.0
  %3348 = vmatpush1.msra.mxu0 %v3320
  %3349 = vmatprep.subr.mxu0 0.0
  %3350 = vmatpush1.msra.mxu0 %v3321
  %3351 = vmatprep.subr.mxu0 0.0
  %3352 = vmatpush1.msra.mxu0 %v3322
  %3353 = vmatprep.subr.mxu0 0.0
  %3354 = vmatpush1.msra.mxu0 %v3323
  %3355 = vmatprep.subr.mxu0 0.0
  %3356 = vmatpush1.msra.mxu0 %v3324
  %3357 = vmatprep.subr.mxu0 0.0
  %3358 = vmatpush1.msra.mxu0 %v3325
  %3359 = vmatprep.subr.mxu0 0.0
  %3360 = vmatpush1.msra.mxu0 %v3326
  %3361 = vmatprep.subr.mxu0 0.0
  %3362 = vmatpush1.msra.mxu0 %v3327
  %3363 = vmatprep.subr.mxu0 0.0
  %3364 = vmatpush1.msra.mxu0 %v3328
  %3365 = vmatprep.subr.mxu0 0.0
  %3366 = vmatpush1.msra.mxu0 %v3329
  %3367 = vmatprep.subr.mxu0 0.0
  %3368 = vmatpush1.msra.mxu0 %v3330
  %3369 = vmatprep.subr.mxu0 0.0
  %3370 = vmatpush1.msra.mxu0 %v3331
  %3371 = vmatprep.subr.mxu0 0.0
  %3372 = vmatpush1.msra.mxu0 0.0
  %3373 = vmatprep.subr.mxu0 0.0
  %3374 = vmatpush1.msra.mxu0 0.0
  %3375 = vmatprep.subr.mxu0 0.0
  %3376 = vmatpush1.msra.mxu0 0.0
  %3377 = vmatprep.subr.mxu0 0.0
  %3378 = vmatpush1.msra.mxu0 0.0
  %3379 = vmatprep.subr.mxu0 0.0
  %3380 = vmatpush1.msra.mxu0 0.0
  %3381 = vmatprep.subr.mxu0 0.0
  %3382 = vmatpush1.msra.mxu0 0.0
  %3383 = vmatprep.subr.mxu0 0.0
  %3384 = vmatpush1.msra.mxu0 0.0
  %3385 = vmatprep.subr.mxu0 0.0
  %3386 = vmatpush1.msra.mxu0 0.0
  %3387 = vmatprep.subr.mxu0 0.0
  %3388 = vmatpush1.msra.mxu0 0.0
  %3389 = vmatprep.subr.mxu0 0.0
  %3390 = vmatpush1.msra.mxu0 0.0
  %3391 = vmatprep.subr.mxu0 0.0
  %3392 = vmatpush1.msra.mxu0 0.0
  %3393 = vmatprep.subr.mxu0 0.0
  %3394 = vmatpush1.msra.mxu0 0.0
  %3395 = vmatprep.subr.mxu0 0.0
  %3396 = vmatpush1.msra.mxu0 0.0
  %3397 = vmatprep.subr.mxu0 0.0
  %3398 = vmatpush1.msra.mxu0 0.0
  %3399 = vmatprep.subr.mxu0 0.0
  %3400 = vmatpush1.msra.mxu0 0.0
  %3401 = vmatprep.subr.mxu0 0.0
  %3402 = vmatpush1.msra.mxu0 0.0
  %3403 = vmatprep.mubr.f32.mxu0 0.0
  %3404 = vmatmul.mubr.f32.gmra.mrb[0].mxu0 %v3315
  %v3405 = vpop.f32.mrb[0].mxu0
  %v3406 = vadd.f32 %v3337, %v3405
  %v3407 = vpop.f32.mrb[0].mxu0
  %3408 = vdwg.mxu0
  %3409 = vst [vmem:[%s8] sm:$0xff] %v3406
  // Predicated region
  $region34: #{rnn_forward.1} parent=0 // pred_check
    _
  $region35: #{rnn_forward.1} parent=0 // pred_check_branch
    %3411 = sbr.rel (0) target = $region37
  $region36: #{rnn_forward.1} parent=0 // pred_region
    _
  $region37: #{rnn_forward.1} parent=0 // pred_fallthru
    _
  // Predicated region
  $region38: #{rnn_forward.1} parent=0 // pred_check
    _
  $region39: #{rnn_forward.1} parent=0 // pred_check_branch
    %3413 = sbr.rel (0) target = $region41
  $region40: #{rnn_forward.1} parent=0 // pred_region
    _
  $region41: #{rnn_forward.1} parent=0 // pred_fallthru
    _

</llo_original>
